<compile_context>
chip_gen: v6e
topology: v6e:2x2x1
jax: 0.10.0
libtpu: 0.0.40
codegen_flags: <defaults>
</compile_context>

<pallas_src>
import functools
import math

import jax
import jax.numpy as jnp
from jax.experimental import pallas as pl
from jax.experimental.pallas import tpu as pltpu


# ----------------------------------------------------------------------------
# Fused Pallas kernel: whole ResGCN forward, state resident in VMEM,
# feature-major layout (features on sublanes, B*n on lanes).
# ----------------------------------------------------------------------------

def _resgcn_fused_kernel(x_ref, scl_ref, aat_ref,
                         wi1_ref, bi1_ref, wi2_ref, bi2_ref, wi3_ref, bi3_ref,
                         wcat_ref, bres_ref, lng_ref, lnb_ref,
                         wf1_ref, bf1_ref, wf2_ref, bf2_ref, wf3_ref, bf3_ref,
                         o_ref, buf_ref, *, num_layers, n_nodes):
    f32 = jnp.float32
    bf16 = jnp.bfloat16
    N = x_ref.shape[1]                 # B * n  (lane axis)
    E = bres_ref.shape[1]              # embed dim (sublane axis)
    nb = N // n_nodes                  # batch size (static)

    # ---- initial MLP: 1 -> H -> H -> E (ReLU after every layer) ------------
    # in_dim == 1: the first Linear is an outer-product broadcast (f32, exact).
    x = x_ref[...]                                                  # (1, N)
    h = jnp.maximum(wi1_ref[...] * x + bi1_ref[...], 0.0)          # (H, N)
    h = jnp.maximum(jnp.dot(wi2_ref[...], h.astype(bf16),
                            preferred_element_type=f32) + bi2_ref[...], 0.0)
    R = jnp.maximum(jnp.dot(wi3_ref[...], h.astype(bf16),
                            preferred_element_type=f32) + bi3_ref[...], 0.0)

    # buf rows [0, E) stage the aggregated features G; rows [E, 2E) hold R.
    buf_ref[E:, :] = R
    aat = aat_ref[...]                                              # (n, n) bf16

    # ---- residual GCN blocks (statically unrolled, L is small) -------------
    for i in range(num_layers):
        # Graph aggregation, per batch lane-block: (E, n) @ AA^T -> (E, n).
        # AA is shared across the batch, so no (B*n, B*n) block-diagonal operand.
        for b in range(nb):
            c0, c1 = b * n_nodes, (b + 1) * n_nodes
            buf_ref[:E, c0:c1] = jnp.dot(
                buf_ref[E:, c0:c1].astype(bf16), aat,
                preferred_element_type=f32)
        R = buf_ref[E:, :]                                          # (E, N) f32
        # Fused GCN fc + skip: [Wg^T | Ws^T] @ [G; R]  (one MXU issue, K = 2E).
        # TODO(synk): on v6e/v7x, K could be zero-padded further toward 128.
        S = jnp.dot(wcat_ref[i], buf_ref[...].astype(bf16),
                    preferred_element_type=f32) + bres_ref[i]       # (E, N)
        if i > 0 and i % 2 == 1:                                    # residual add
            S = S + R
        # LayerNorm over the embed (sublane) axis: biased var, eps = 1e-5.
        mean = jnp.mean(S, axis=0, keepdims=True)
        var = jnp.mean(jnp.square(S - mean), axis=0, keepdims=True)
        S = (S - mean) * jax.lax.rsqrt(var + 1e-5)
        S = S * lng_ref[i] + lnb_ref[i]
        buf_ref[E:, :] = jnp.maximum(S, 0.0)                        # dropout = id

    R = buf_ref[E:, :]
    # ---- final MLP: E -> H -> H -> 1 (no ReLU on the output layer) ---------
    h = jnp.maximum(jnp.dot(wf1_ref[...], R.astype(bf16),
                            preferred_element_type=f32) + bf1_ref[...], 0.0)
    h = jnp.maximum(jnp.dot(wf2_ref[...], h.astype(bf16),
                            preferred_element_type=f32) + bf2_ref[...], 0.0)
    y = jnp.dot(wf3_ref[...], h.astype(bf16),
                preferred_element_type=f32) + bf3_ref[...]          # (1, N)
    o_ref[...] = (y * scl_ref[...]).astype(o_ref.dtype)             # undo scaling


# ----------------------------------------------------------------------------
# One-time parameter packing (hoisted out of the per-call jitted wrapper):
# transposes to feature-major weights, fc+skip stacking, bf16 casts, AA^T.
# ----------------------------------------------------------------------------

def pack_params(params):
    bf = lambda a: jnp.asarray(a, jnp.bfloat16)
    f32 = lambda a: jnp.asarray(a, jnp.float32)
    col = lambda b: f32(b).reshape(-1, 1)            # (1, out) bias -> (out, 1)

    (wi1, bi1), (wi2, bi2), (wi3, bi3) = params["mlp_initial"]
    (wf1, bf1), (wf2, bf2), (wf3, bf3) = params["mlp_final"]

    wcat = jnp.stack([jnp.concatenate([wg.T, ws.T], axis=1)
                      for wg, ws in zip(params["gcn_w"], params["skip_w"])])
    bres = jnp.stack([(bg + bs).reshape(-1, 1)
                      for bg, bs in zip(params["gcn_b"], params["skip_b"])])
    lng = jnp.stack([g.reshape(-1, 1) for g in params["ln_g"]])
    lnb = jnp.stack([b.reshape(-1, 1) for b in params["ln_b"]])

    return {
        "aat": bf(params["AA"].T),                                   # (n, n)
        "wi1": f32(wi1.T), "bi1": col(bi1),
        "wi2": bf(wi2.T),  "bi2": col(bi2),
        "wi3": bf(wi3.T),  "bi3": col(bi3),
        "wcat": bf(wcat),                                            # (L, E, 2E)
        "bres": f32(bres), "lng": f32(lng), "lnb": f32(lnb),         # (L, E, 1)
        "wf1": bf(wf1.T),  "bf1": col(bf1),
        "wf2": bf(wf2.T),  "bf2": col(bf2),
        "wf3": bf(wf3.T),  "bf3": col(bf3),
    }


# ----------------------------------------------------------------------------
# Per-call wrapper: only r-dependent prep + the single fused pallas_call.
# ----------------------------------------------------------------------------

@jax.jit
def resgcn_forward_pallas(r, packed):
    n, bt = r.shape
    num_layers = packed["wcat"].shape[0]
    embed = packed["wcat"].shape[1]
    N = bt * n

    # input scaling (per batch column), batch-major flatten to the lane axis
    rt = jnp.transpose(r)                                                 # (B, n)
    scaling = jnp.maximum(
        jnp.sqrt(jnp.sum(rt * rt, axis=1, keepdims=True)) / math.sqrt(n),
        1e-12)                                                            # (B, 1)
    x = (rt / scaling).reshape(1, N)                                      # (1, B*n)
    scl = jnp.broadcast_to(scaling, (bt, n)).reshape(1, N)                # (1, B*n)

    vmem = pl.BlockSpec(memory_space=pltpu.MemorySpace.VMEM)
    y = pl.pallas_call(
        functools.partial(_resgcn_fused_kernel,
                          num_layers=num_layers, n_nodes=n),
        out_shape=jax.ShapeDtypeStruct((1, N), jnp.float32),
        in_specs=[vmem] * 19,
        out_specs=vmem,
        scratch_shapes=[pltpu.VMEM((2 * embed, N), jnp.float32)],
        compiler_params=pltpu.CompilerParams(
            vmem_limit_bytes=32 * 1024 * 1024),
    )(x, scl, packed["aat"],
      packed["wi1"], packed["bi1"], packed["wi2"], packed["bi2"],
      packed["wi3"], packed["bi3"],
      packed["wcat"], packed["bres"], packed["lng"], packed["lnb"],
      packed["wf1"], packed["bf1"], packed["wf2"], packed["bf2"],
      packed["wf3"], packed["bf3"])

    return jnp.transpose(y.reshape(bt, n))                                # (n, B)


# ----------------------------------------------------------------------------
# Pure-JAX reference (mirrors PyTorch semantics in (n, B, E) layout).
# Matmul operands cast to bf16 / f32-accumulate to mirror the kernel's MXU use.
# ----------------------------------------------------------------------------

def _mm(a, b):
    return jnp.matmul(a.astype(jnp.bfloat16), b.astype(jnp.bfloat16),
                      preferred_element_type=jnp.float32)


def resgcn_forward_ref(r, params):
    n, bt = r.shape
    num_layers = len(params["gcn_w"])
    embed = params["gcn_w"][0].shape[0]

    scaling = jnp.maximum(
        jnp.sqrt(jnp.sum(r * r, axis=0, keepdims=True)) / math.sqrt(n), 1e-12)
    r = r / scaling
    x = r.reshape(n, bt, 1)

    (w1, b1), (w2, b2), (w3, b3) = params["mlp_initial"]
    h = jax.nn.relu(x * w1 + b1)                 # in_dim == 1 Linear == broadcast
    h = jax.nn.relu(_mm(h, w2) + b2)
    R = jax.nn.relu(_mm(h, w3) + b3)             # (n, bt, E)

    for i in range(num_layers):
        R_in = R
        G = _mm(params["AA"], R.reshape(n, bt * embed)).reshape(n, bt, embed)
        R_gcn = _mm(G, params["gcn_w"][i]) + params["gcn_b"][i]
        R_skip = _mm(R, params["skip_w"][i]) + params["skip_b"][i]
        R = R_gcn + R_skip
        if i > 0 and i % 2 == 1:
            R = R + R_in
        mean = jnp.mean(R, axis=-1, keepdims=True)
        var = jnp.mean(jnp.square(R - mean), axis=-1, keepdims=True)
        R = (R - mean) * jax.lax.rsqrt(var + 1e-5)
        R = R * params["ln_g"][i] + params["ln_b"][i]
        R = jax.nn.relu(R)

    (w1, b1), (w2, b2), (w3, b3) = params["mlp_final"]
    h = jax.nn.relu(_mm(R, w1) + b1)
    h = jax.nn.relu(_mm(h, w2) + b2)
    z = (_mm(h, w3) + b3).reshape(n, bt)
    return z * scaling


# ----------------------------------------------------------------------------
# Deterministic parameter construction (matches ResGCN._initialize_weights)
# ----------------------------------------------------------------------------

def _xavier(key, fan_in, fan_out, gain=0.1):
    limit = gain * math.sqrt(6.0 / (fan_in + fan_out))
    return jax.random.uniform(key, (fan_in, fan_out), jnp.float32, -limit, limit)


def make_params(key, *, n, embed, hidden, num_layers):
    ks = iter(jax.random.split(key, 64))

    def linear(in_d, out_d):
        w = _xavier(next(ks), in_d, out_d)        # stored as (in, out)
        b = jnp.zeros((1, out_d), jnp.float32)    # zero bias (per init)
        return w, b

    # scale_A_by_spectral_radius: A / rho(A) via power iteration (glue)
    A = jax.random.normal(next(ks), (n, n), jnp.float32)
    A = 0.5 * (A + A.T)
    v = jnp.ones((n,), jnp.float32)
    for _ in range(50):
        v = A @ v
        v = v / jnp.linalg.norm(v)
    rho = jnp.abs(v @ (A @ v))
    AA = A / rho

    params = {
        "AA": AA,
        "mlp_initial": [linear(1, hidden), linear(hidden, hidden),
                        linear(hidden, embed)],
        "mlp_final": [linear(embed, hidden), linear(hidden, hidden),
                      linear(hidden, 1)],
        "gcn_w": [], "gcn_b": [], "skip_w": [], "skip_b": [],
        "ln_g": [], "ln_b": [],
    }
    for _ in range(num_layers):
        wg, bg = linear(embed, embed)
        ws, bs = linear(embed, embed)
        params["gcn_w"].append(wg); params["gcn_b"].append(bg)
        params["skip_w"].append(ws); params["skip_b"].append(bs)
        params["ln_g"].append(jnp.ones((1, embed), jnp.float32))
        params["ln_b"].append(jnp.zeros((1, embed), jnp.float32))
    return params


# ----------------------------------------------------------------------------

if __name__ == "__main__":
    n, batch, embed, hidden, num_layers = 16, 8, 32, 32, 3

    key = jax.random.PRNGKey(0)
    k_params, k_r = jax.random.split(key)
    params = make_params(k_params, n=n, embed=embed, hidden=hidden,
                         num_layers=num_layers)
    packed = pack_params(params)                     # one-time constant prep
    r = jax.random.normal(k_r, (n, batch), jnp.float32)   # (n, batch) like PyTorch

    z = resgcn_forward_pallas(r, packed)
    z = jax.block_until_ready(z)
    assert z.shape == (n, batch)
    assert bool(jnp.all(jnp.isfinite(z)))

    z_ref = resgcn_forward_ref(r, params)
    max_err = float(jnp.max(jnp.abs(z - z_ref)))
    ref_scale = float(jnp.max(jnp.abs(z_ref)))
    if not (max_err <= 1e-2 * ref_scale + 1e-6):
        raise AssertionError(
            f"Pallas/reference mismatch: max_err={max_err}, ref_scale={ref_scale}")

    print("KERNEL_OK")
</pallas_src>

<mosaic_0001>
module attributes {stable_mosaic.version = 11 : i64} {
  func.func @_resgcn_fused_kernel(%arg0: memref<1x128xf32, #tpu.memory_space<vmem>>, %arg1: memref<1x128xf32, #tpu.memory_space<vmem>>, %arg2: memref<16x16xbf16, #tpu.memory_space<vmem>>, %arg3: memref<32x1xf32, #tpu.memory_space<vmem>>, %arg4: memref<32x1xf32, #tpu.memory_space<vmem>>, %arg5: memref<32x32xbf16, #tpu.memory_space<vmem>>, %arg6: memref<32x1xf32, #tpu.memory_space<vmem>>, %arg7: memref<32x32xbf16, #tpu.memory_space<vmem>>, %arg8: memref<32x1xf32, #tpu.memory_space<vmem>>, %arg9: memref<3x32x64xbf16, #tpu.memory_space<vmem>>, %arg10: memref<3x32x1xf32, #tpu.memory_space<vmem>>, %arg11: memref<3x32x1xf32, #tpu.memory_space<vmem>>, %arg12: memref<3x32x1xf32, #tpu.memory_space<vmem>>, %arg13: memref<32x32xbf16, #tpu.memory_space<vmem>>, %arg14: memref<32x1xf32, #tpu.memory_space<vmem>>, %arg15: memref<32x32xbf16, #tpu.memory_space<vmem>>, %arg16: memref<32x1xf32, #tpu.memory_space<vmem>>, %arg17: memref<1x32xbf16, #tpu.memory_space<vmem>>, %arg18: memref<1x1xf32, #tpu.memory_space<vmem>>, %arg19: memref<1x128xf32, #tpu.memory_space<vmem>>, %arg20: memref<64x128xf32, #tpu.memory_space<vmem>>) attributes {dimension_semantics = [], scalar_prefetch = 0 : i64, scratch_operands = 1 : i64, tpu.core_type = #tpu.core_type<tc>} {
    %c0 = arith.constant 0 : index
    %c0_0 = arith.constant 0 : index
    %0 = vector.load %arg0[%c0, %c0_0] : memref<1x128xf32, #tpu.memory_space<vmem>>, vector<1x128xf32>
    %c0_1 = arith.constant 0 : index
    %c0_2 = arith.constant 0 : index
    %1 = vector.load %arg3[%c0_1, %c0_2] : memref<32x1xf32, #tpu.memory_space<vmem>>, vector<32x1xf32>
    %2 = vector.broadcast %1 : vector<32x1xf32> to vector<32x128xf32>
    %3 = vector.broadcast %0 : vector<1x128xf32> to vector<32x128xf32>
    %4 = arith.mulf %2, %3 : vector<32x128xf32>
    %c0_3 = arith.constant 0 : index
    %c0_4 = arith.constant 0 : index
    %5 = vector.load %arg4[%c0_3, %c0_4] : memref<32x1xf32, #tpu.memory_space<vmem>>, vector<32x1xf32>
    %6 = vector.broadcast %5 : vector<32x1xf32> to vector<32x128xf32>
    %7 = arith.addf %4, %6 : vector<32x128xf32>
    %cst = arith.constant 0.000000e+00 : f32
    %8 = vector.broadcast %cst : f32 to vector<32x128xf32>
    %9 = arith.maximumf %7, %8 : vector<32x128xf32>
    %c0_5 = arith.constant 0 : index
    %c0_6 = arith.constant 0 : index
    %10 = vector.load %arg5[%c0_5, %c0_6] : memref<32x32xbf16, #tpu.memory_space<vmem>>, vector<32x32xbf16>
    %11 = arith.truncf %9 : vector<32x128xf32> to vector<32x128xbf16>
    %cst_7 = arith.constant dense<0.000000e+00> : vector<32x128xf32>
    %12 = tpu.matmul %10, %11, %cst_7 {dimension_numbers = #tpu.dot_dimension_numbers<[1], [0], [0], [1], [0, 0, 1, 1], [], []>} : vector<32x32xbf16>, vector<32x128xbf16>, vector<32x128xf32> -> vector<32x128xf32>
    %c0_8 = arith.constant 0 : index
    %c0_9 = arith.constant 0 : index
    %13 = vector.load %arg6[%c0_8, %c0_9] : memref<32x1xf32, #tpu.memory_space<vmem>>, vector<32x1xf32>
    %14 = vector.broadcast %13 : vector<32x1xf32> to vector<32x128xf32>
    %15 = arith.addf %12, %14 : vector<32x128xf32>
    %cst_10 = arith.constant 0.000000e+00 : f32
    %16 = vector.broadcast %cst_10 : f32 to vector<32x128xf32>
    %17 = arith.maximumf %15, %16 : vector<32x128xf32>
    %c0_11 = arith.constant 0 : index
    %c0_12 = arith.constant 0 : index
    %18 = vector.load %arg7[%c0_11, %c0_12] : memref<32x32xbf16, #tpu.memory_space<vmem>>, vector<32x32xbf16>
    %19 = arith.truncf %17 : vector<32x128xf32> to vector<32x128xbf16>
    %cst_13 = arith.constant dense<0.000000e+00> : vector<32x128xf32>
    %20 = tpu.matmul %18, %19, %cst_13 {dimension_numbers = #tpu.dot_dimension_numbers<[1], [0], [0], [1], [0, 0, 1, 1], [], []>} : vector<32x32xbf16>, vector<32x128xbf16>, vector<32x128xf32> -> vector<32x128xf32>
    %c0_14 = arith.constant 0 : index
    %c0_15 = arith.constant 0 : index
    %21 = vector.load %arg8[%c0_14, %c0_15] : memref<32x1xf32, #tpu.memory_space<vmem>>, vector<32x1xf32>
    %22 = vector.broadcast %21 : vector<32x1xf32> to vector<32x128xf32>
    %23 = arith.addf %20, %22 : vector<32x128xf32>
    %cst_16 = arith.constant 0.000000e+00 : f32
    %24 = vector.broadcast %cst_16 : f32 to vector<32x128xf32>
    %25 = arith.maximumf %23, %24 : vector<32x128xf32>
    %c32 = arith.constant 32 : index
    %c0_17 = arith.constant 0 : index
    %26 = vector.load %arg20[%c32, %c0_17] : memref<64x128xf32, #tpu.memory_space<vmem>>, vector<32x128xf32>
    tpu.vector_store %arg20[%c32, %c0_17], %25 {strides = array<i32>} : memref<64x128xf32, #tpu.memory_space<vmem>>, vector<32x128xf32>,
    %c0_18 = arith.constant 0 : index
    %c0_19 = arith.constant 0 : index
    %27 = vector.load %arg2[%c0_18, %c0_19] : memref<16x16xbf16, #tpu.memory_space<vmem>>, vector<16x16xbf16>
    %c32_20 = arith.constant 32 : index
    %c0_21 = arith.constant 0 : index
    %28 = vector.load %arg20[%c32_20, %c0_21] : memref<64x128xf32, #tpu.memory_space<vmem>>, vector<32x16xf32>
    %29 = arith.truncf %28 : vector<32x16xf32> to vector<32x16xbf16>
    %cst_22 = arith.constant dense<0.000000e+00> : vector<32x16xf32>
    %30 = tpu.matmul %29, %27, %cst_22 {dimension_numbers = #tpu.dot_dimension_numbers<[1], [0], [0], [1], [0, 0, 1, 1], [], []>} : vector<32x16xbf16>, vector<16x16xbf16>, vector<32x16xf32> -> vector<32x16xf32>
    %c0_23 = arith.constant 0 : index
    %c0_24 = arith.constant 0 : index
    %31 = vector.load %arg20[%c0_23, %c0_24] : memref<64x128xf32, #tpu.memory_space<vmem>>, vector<32x16xf32>
    tpu.vector_store %arg20[%c0_23, %c0_24], %30 {strides = array<i32>} : memref<64x128xf32, #tpu.memory_space<vmem>>, vector<32x16xf32>,
    %c32_25 = arith.constant 32 : index
    %c16 = arith.constant 16 : index
    %32 = vector.load %arg20[%c32_25, %c16] : memref<64x128xf32, #tpu.memory_space<vmem>>, vector<32x16xf32>
    %33 = arith.truncf %32 : vector<32x16xf32> to vector<32x16xbf16>
    %cst_26 = arith.constant dense<0.000000e+00> : vector<32x16xf32>
    %34 = tpu.matmul %33, %27, %cst_26 {dimension_numbers = #tpu.dot_dimension_numbers<[1], [0], [0], [1], [0, 0, 1, 1], [], []>} : vector<32x16xbf16>, vector<16x16xbf16>, vector<32x16xf32> -> vector<32x16xf32>
    %c0_27 = arith.constant 0 : index
    %c16_28 = arith.constant 16 : index
    %35 = vector.load %arg20[%c0_27, %c16_28] : memref<64x128xf32, #tpu.memory_space<vmem>>, vector<32x16xf32>
    tpu.vector_store %arg20[%c0_27, %c16_28], %34 {strides = array<i32>} : memref<64x128xf32, #tpu.memory_space<vmem>>, vector<32x16xf32>,
    %c32_29 = arith.constant 32 : index
    %c32_30 = arith.constant 32 : index
    %36 = vector.load %arg20[%c32_29, %c32_30] : memref<64x128xf32, #tpu.memory_space<vmem>>, vector<32x16xf32>
    %37 = arith.truncf %36 : vector<32x16xf32> to vector<32x16xbf16>
    %cst_31 = arith.constant dense<0.000000e+00> : vector<32x16xf32>
    %38 = tpu.matmul %37, %27, %cst_31 {dimension_numbers = #tpu.dot_dimension_numbers<[1], [0], [0], [1], [0, 0, 1, 1], [], []>} : vector<32x16xbf16>, vector<16x16xbf16>, vector<32x16xf32> -> vector<32x16xf32>
    %c0_32 = arith.constant 0 : index
    %c32_33 = arith.constant 32 : index
    %39 = vector.load %arg20[%c0_32, %c32_33] : memref<64x128xf32, #tpu.memory_space<vmem>>, vector<32x16xf32>
    tpu.vector_store %arg20[%c0_32, %c32_33], %38 {strides = array<i32>} : memref<64x128xf32, #tpu.memory_space<vmem>>, vector<32x16xf32>,
    %c32_34 = arith.constant 32 : index
    %c48 = arith.constant 48 : index
    %40 = vector.load %arg20[%c32_34, %c48] : memref<64x128xf32, #tpu.memory_space<vmem>>, vector<32x16xf32>
    %41 = arith.truncf %40 : vector<32x16xf32> to vector<32x16xbf16>
    %cst_35 = arith.constant dense<0.000000e+00> : vector<32x16xf32>
    %42 = tpu.matmul %41, %27, %cst_35 {dimension_numbers = #tpu.dot_dimension_numbers<[1], [0], [0], [1], [0, 0, 1, 1], [], []>} : vector<32x16xbf16>, vector<16x16xbf16>, vector<32x16xf32> -> vector<32x16xf32>
    %c0_36 = arith.constant 0 : index
    %c48_37 = arith.constant 48 : index
    %43 = vector.load %arg20[%c0_36, %c48_37] : memref<64x128xf32, #tpu.memory_space<vmem>>, vector<32x16xf32>
    tpu.vector_store %arg20[%c0_36, %c48_37], %42 {strides = array<i32>} : memref<64x128xf32, #tpu.memory_space<vmem>>, vector<32x16xf32>,
    %c32_38 = arith.constant 32 : index
    %c64 = arith.constant 64 : index
    %44 = vector.load %arg20[%c32_38, %c64] : memref<64x128xf32, #tpu.memory_space<vmem>>, vector<32x16xf32>
    %45 = arith.truncf %44 : vector<32x16xf32> to vector<32x16xbf16>
    %cst_39 = arith.constant dense<0.000000e+00> : vector<32x16xf32>
    %46 = tpu.matmul %45, %27, %cst_39 {dimension_numbers = #tpu.dot_dimension_numbers<[1], [0], [0], [1], [0, 0, 1, 1], [], []>} : vector<32x16xbf16>, vector<16x16xbf16>, vector<32x16xf32> -> vector<32x16xf32>
    %c0_40 = arith.constant 0 : index
    %c64_41 = arith.constant 64 : index
    %47 = vector.load %arg20[%c0_40, %c64_41] : memref<64x128xf32, #tpu.memory_space<vmem>>, vector<32x16xf32>
    tpu.vector_store %arg20[%c0_40, %c64_41], %46 {strides = array<i32>} : memref<64x128xf32, #tpu.memory_space<vmem>>, vector<32x16xf32>,
    %c32_42 = arith.constant 32 : index
    %c80 = arith.constant 80 : index
    %48 = vector.load %arg20[%c32_42, %c80] : memref<64x128xf32, #tpu.memory_space<vmem>>, vector<32x16xf32>
    %49 = arith.truncf %48 : vector<32x16xf32> to vector<32x16xbf16>
    %cst_43 = arith.constant dense<0.000000e+00> : vector<32x16xf32>
    %50 = tpu.matmul %49, %27, %cst_43 {dimension_numbers = #tpu.dot_dimension_numbers<[1], [0], [0], [1], [0, 0, 1, 1], [], []>} : vector<32x16xbf16>, vector<16x16xbf16>, vector<32x16xf32> -> vector<32x16xf32>
    %c0_44 = arith.constant 0 : index
    %c80_45 = arith.constant 80 : index
    %51 = vector.load %arg20[%c0_44, %c80_45] : memref<64x128xf32, #tpu.memory_space<vmem>>, vector<32x16xf32>
    tpu.vector_store %arg20[%c0_44, %c80_45], %50 {strides = array<i32>} : memref<64x128xf32, #tpu.memory_space<vmem>>, vector<32x16xf32>,
    %c32_46 = arith.constant 32 : index
    %c96 = arith.constant 96 : index
    %52 = vector.load %arg20[%c32_46, %c96] : memref<64x128xf32, #tpu.memory_space<vmem>>, vector<32x16xf32>
    %53 = arith.truncf %52 : vector<32x16xf32> to vector<32x16xbf16>
    %cst_47 = arith.constant dense<0.000000e+00> : vector<32x16xf32>
    %54 = tpu.matmul %53, %27, %cst_47 {dimension_numbers = #tpu.dot_dimension_numbers<[1], [0], [0], [1], [0, 0, 1, 1], [], []>} : vector<32x16xbf16>, vector<16x16xbf16>, vector<32x16xf32> -> vector<32x16xf32>
    %c0_48 = arith.constant 0 : index
    %c96_49 = arith.constant 96 : index
    %55 = vector.load %arg20[%c0_48, %c96_49] : memref<64x128xf32, #tpu.memory_space<vmem>>, vector<32x16xf32>
    tpu.vector_store %arg20[%c0_48, %c96_49], %54 {strides = array<i32>} : memref<64x128xf32, #tpu.memory_space<vmem>>, vector<32x16xf32>,
    %c32_50 = arith.constant 32 : index
    %c112 = arith.constant 112 : index
    %56 = vector.load %arg20[%c32_50, %c112] : memref<64x128xf32, #tpu.memory_space<vmem>>, vector<32x16xf32>
    %57 = arith.truncf %56 : vector<32x16xf32> to vector<32x16xbf16>
    %cst_51 = arith.constant dense<0.000000e+00> : vector<32x16xf32>
    %58 = tpu.matmul %57, %27, %cst_51 {dimension_numbers = #tpu.dot_dimension_numbers<[1], [0], [0], [1], [0, 0, 1, 1], [], []>} : vector<32x16xbf16>, vector<16x16xbf16>, vector<32x16xf32> -> vector<32x16xf32>
    %c0_52 = arith.constant 0 : index
    %c112_53 = arith.constant 112 : index
    %59 = vector.load %arg20[%c0_52, %c112_53] : memref<64x128xf32, #tpu.memory_space<vmem>>, vector<32x16xf32>
    tpu.vector_store %arg20[%c0_52, %c112_53], %58 {strides = array<i32>} : memref<64x128xf32, #tpu.memory_space<vmem>>, vector<32x16xf32>,
    %c0_54 = arith.constant 0 : index
    %c0_55 = arith.constant 0 : index
    %c0_56 = arith.constant 0 : index
    %60 = vector.load %arg9[%c0_54, %c0_55, %c0_56] : memref<3x32x64xbf16, #tpu.memory_space<vmem>>, vector<1x32x64xbf16>
    %61 = vector.shape_cast %60 : vector<1x32x64xbf16> to vector<32x64xbf16>
    %c0_57 = arith.constant 0 : index
    %c0_58 = arith.constant 0 : index
    %62 = vector.load %arg20[%c0_57, %c0_58] : memref<64x128xf32, #tpu.memory_space<vmem>>, vector<64x128xf32>
    %63 = arith.truncf %62 : vector<64x128xf32> to vector<64x128xbf16>
    %cst_59 = arith.constant dense<0.000000e+00> : vector<32x128xf32>
    %64 = tpu.matmul %61, %63, %cst_59 {dimension_numbers = #tpu.dot_dimension_numbers<[1], [0], [0], [1], [0, 0, 1, 1], [], []>} : vector<32x64xbf16>, vector<64x128xbf16>, vector<32x128xf32> -> vector<32x128xf32>
    %c0_60 = arith.constant 0 : index
    %c0_61 = arith.constant 0 : index
    %c0_62 = arith.constant 0 : index
    %65 = vector.load %arg10[%c0_60, %c0_61, %c0_62] : memref<3x32x1xf32, #tpu.memory_space<vmem>>, vector<1x32x1xf32>
    %66 = vector.shape_cast %65 : vector<1x32x1xf32> to vector<32x1xf32>
    %67 = vector.broadcast %66 : vector<32x1xf32> to vector<32x128xf32>
    %68 = arith.addf %64, %67 : vector<32x128xf32>
    %cst_63 = arith.constant dense<0.000000e+00> : vector<128xf32>
    %69 = vector.multi_reduction <add>, %68, %cst_63 [0] : vector<32x128xf32> to vector<128xf32>
    %70 = vector.shape_cast %69 : vector<128xf32> to vector<1x128xf32>
    %cst_64 = arith.constant 3.200000e+01 : f32
    %71 = vector.broadcast %cst_64 : f32 to vector<1x128xf32>
    %72 = arith.divf %70, %71 : vector<1x128xf32>
    %73 = vector.broadcast %72 : vector<1x128xf32> to vector<32x128xf32>
    %74 = arith.subf %68, %73 : vector<32x128xf32>
    %75 = arith.mulf %74, %74 : vector<32x128xf32>
    %cst_65 = arith.constant dense<0.000000e+00> : vector<128xf32>
    %76 = vector.multi_reduction <add>, %75, %cst_65 [0] : vector<32x128xf32> to vector<128xf32>
    %77 = vector.shape_cast %76 : vector<128xf32> to vector<1x128xf32>
    %cst_66 = arith.constant 3.200000e+01 : f32
    %78 = vector.broadcast %cst_66 : f32 to vector<1x128xf32>
    %79 = arith.divf %77, %78 : vector<1x128xf32>
    %80 = vector.broadcast %72 : vector<1x128xf32> to vector<32x128xf32>
    %81 = arith.subf %68, %80 : vector<32x128xf32>
    %cst_67 = arith.constant 9.99999974E-6 : f32
    %82 = vector.broadcast %cst_67 : f32 to vector<1x128xf32>
    %83 = arith.addf %79, %82 : vector<1x128xf32>
    %84 = math.rsqrt %83 : vector<1x128xf32>
    %85 = vector.broadcast %84 : vector<1x128xf32> to vector<32x128xf32>
    %86 = arith.mulf %81, %85 : vector<32x128xf32>
    %c0_68 = arith.constant 0 : index
    %c0_69 = arith.constant 0 : index
    %c0_70 = arith.constant 0 : index
    %87 = vector.load %arg11[%c0_68, %c0_69, %c0_70] : memref<3x32x1xf32, #tpu.memory_space<vmem>>, vector<1x32x1xf32>
    %88 = vector.shape_cast %87 : vector<1x32x1xf32> to vector<32x1xf32>
    %89 = vector.broadcast %88 : vector<32x1xf32> to vector<32x128xf32>
    %90 = arith.mulf %86, %89 : vector<32x128xf32>
    %c0_71 = arith.constant 0 : index
    %c0_72 = arith.constant 0 : index
    %c0_73 = arith.constant 0 : index
    %91 = vector.load %arg12[%c0_71, %c0_72, %c0_73] : memref<3x32x1xf32, #tpu.memory_space<vmem>>, vector<1x32x1xf32>
    %92 = vector.shape_cast %91 : vector<1x32x1xf32> to vector<32x1xf32>
    %93 = vector.broadcast %92 : vector<32x1xf32> to vector<32x128xf32>
    %94 = arith.addf %90, %93 : vector<32x128xf32>
    %cst_74 = arith.constant 0.000000e+00 : f32
    %95 = vector.broadcast %cst_74 : f32 to vector<32x128xf32>
    %96 = arith.maximumf %94, %95 : vector<32x128xf32>
    %c32_75 = arith.constant 32 : index
    %c0_76 = arith.constant 0 : index
    %97 = vector.load %arg20[%c32_75, %c0_76] : memref<64x128xf32, #tpu.memory_space<vmem>>, vector<32x128xf32>
    tpu.vector_store %arg20[%c32_75, %c0_76], %96 {strides = array<i32>} : memref<64x128xf32, #tpu.memory_space<vmem>>, vector<32x128xf32>,
    %c32_77 = arith.constant 32 : index
    %c0_78 = arith.constant 0 : index
    %98 = vector.load %arg20[%c32_77, %c0_78] : memref<64x128xf32, #tpu.memory_space<vmem>>, vector<32x16xf32>
    %99 = arith.truncf %98 : vector<32x16xf32> to vector<32x16xbf16>
    %cst_79 = arith.constant dense<0.000000e+00> : vector<32x16xf32>
    %100 = tpu.matmul %99, %27, %cst_79 {dimension_numbers = #tpu.dot_dimension_numbers<[1], [0], [0], [1], [0, 0, 1, 1], [], []>} : vector<32x16xbf16>, vector<16x16xbf16>, vector<32x16xf32> -> vector<32x16xf32>
    %c0_80 = arith.constant 0 : index
    %c0_81 = arith.constant 0 : index
    %101 = vector.load %arg20[%c0_80, %c0_81] : memref<64x128xf32, #tpu.memory_space<vmem>>, vector<32x16xf32>
    tpu.vector_store %arg20[%c0_80, %c0_81], %100 {strides = array<i32>} : memref<64x128xf32, #tpu.memory_space<vmem>>, vector<32x16xf32>,
    %c32_82 = arith.constant 32 : index
    %c16_83 = arith.constant 16 : index
    %102 = vector.load %arg20[%c32_82, %c16_83] : memref<64x128xf32, #tpu.memory_space<vmem>>, vector<32x16xf32>
    %103 = arith.truncf %102 : vector<32x16xf32> to vector<32x16xbf16>
    %cst_84 = arith.constant dense<0.000000e+00> : vector<32x16xf32>
    %104 = tpu.matmul %103, %27, %cst_84 {dimension_numbers = #tpu.dot_dimension_numbers<[1], [0], [0], [1], [0, 0, 1, 1], [], []>} : vector<32x16xbf16>, vector<16x16xbf16>, vector<32x16xf32> -> vector<32x16xf32>
    %c0_85 = arith.constant 0 : index
    %c16_86 = arith.constant 16 : index
    %105 = vector.load %arg20[%c0_85, %c16_86] : memref<64x128xf32, #tpu.memory_space<vmem>>, vector<32x16xf32>
    tpu.vector_store %arg20[%c0_85, %c16_86], %104 {strides = array<i32>} : memref<64x128xf32, #tpu.memory_space<vmem>>, vector<32x16xf32>,
    %c32_87 = arith.constant 32 : index
    %c32_88 = arith.constant 32 : index
    %106 = vector.load %arg20[%c32_87, %c32_88] : memref<64x128xf32, #tpu.memory_space<vmem>>, vector<32x16xf32>
    %107 = arith.truncf %106 : vector<32x16xf32> to vector<32x16xbf16>
    %cst_89 = arith.constant dense<0.000000e+00> : vector<32x16xf32>
    %108 = tpu.matmul %107, %27, %cst_89 {dimension_numbers = #tpu.dot_dimension_numbers<[1], [0], [0], [1], [0, 0, 1, 1], [], []>} : vector<32x16xbf16>, vector<16x16xbf16>, vector<32x16xf32> -> vector<32x16xf32>
    %c0_90 = arith.constant 0 : index
    %c32_91 = arith.constant 32 : index
    %109 = vector.load %arg20[%c0_90, %c32_91] : memref<64x128xf32, #tpu.memory_space<vmem>>, vector<32x16xf32>
    tpu.vector_store %arg20[%c0_90, %c32_91], %108 {strides = array<i32>} : memref<64x128xf32, #tpu.memory_space<vmem>>, vector<32x16xf32>,
    %c32_92 = arith.constant 32 : index
    %c48_93 = arith.constant 48 : index
    %110 = vector.load %arg20[%c32_92, %c48_93] : memref<64x128xf32, #tpu.memory_space<vmem>>, vector<32x16xf32>
    %111 = arith.truncf %110 : vector<32x16xf32> to vector<32x16xbf16>
    %cst_94 = arith.constant dense<0.000000e+00> : vector<32x16xf32>
    %112 = tpu.matmul %111, %27, %cst_94 {dimension_numbers = #tpu.dot_dimension_numbers<[1], [0], [0], [1], [0, 0, 1, 1], [], []>} : vector<32x16xbf16>, vector<16x16xbf16>, vector<32x16xf32> -> vector<32x16xf32>
    %c0_95 = arith.constant 0 : index
    %c48_96 = arith.constant 48 : index
    %113 = vector.load %arg20[%c0_95, %c48_96] : memref<64x128xf32, #tpu.memory_space<vmem>>, vector<32x16xf32>
    tpu.vector_store %arg20[%c0_95, %c48_96], %112 {strides = array<i32>} : memref<64x128xf32, #tpu.memory_space<vmem>>, vector<32x16xf32>,
    %c32_97 = arith.constant 32 : index
    %c64_98 = arith.constant 64 : index
    %114 = vector.load %arg20[%c32_97, %c64_98] : memref<64x128xf32, #tpu.memory_space<vmem>>, vector<32x16xf32>
    %115 = arith.truncf %114 : vector<32x16xf32> to vector<32x16xbf16>
    %cst_99 = arith.constant dense<0.000000e+00> : vector<32x16xf32>
    %116 = tpu.matmul %115, %27, %cst_99 {dimension_numbers = #tpu.dot_dimension_numbers<[1], [0], [0], [1], [0, 0, 1, 1], [], []>} : vector<32x16xbf16>, vector<16x16xbf16>, vector<32x16xf32> -> vector<32x16xf32>
    %c0_100 = arith.constant 0 : index
    %c64_101 = arith.constant 64 : index
    %117 = vector.load %arg20[%c0_100, %c64_101] : memref<64x128xf32, #tpu.memory_space<vmem>>, vector<32x16xf32>
    tpu.vector_store %arg20[%c0_100, %c64_101], %116 {strides = array<i32>} : memref<64x128xf32, #tpu.memory_space<vmem>>, vector<32x16xf32>,
    %c32_102 = arith.constant 32 : index
    %c80_103 = arith.constant 80 : index
    %118 = vector.load %arg20[%c32_102, %c80_103] : memref<64x128xf32, #tpu.memory_space<vmem>>, vector<32x16xf32>
    %119 = arith.truncf %118 : vector<32x16xf32> to vector<32x16xbf16>
    %cst_104 = arith.constant dense<0.000000e+00> : vector<32x16xf32>
    %120 = tpu.matmul %119, %27, %cst_104 {dimension_numbers = #tpu.dot_dimension_numbers<[1], [0], [0], [1], [0, 0, 1, 1], [], []>} : vector<32x16xbf16>, vector<16x16xbf16>, vector<32x16xf32> -> vector<32x16xf32>
    %c0_105 = arith.constant 0 : index
    %c80_106 = arith.constant 80 : index
    %121 = vector.load %arg20[%c0_105, %c80_106] : memref<64x128xf32, #tpu.memory_space<vmem>>, vector<32x16xf32>
    tpu.vector_store %arg20[%c0_105, %c80_106], %120 {strides = array<i32>} : memref<64x128xf32, #tpu.memory_space<vmem>>, vector<32x16xf32>,
    %c32_107 = arith.constant 32 : index
    %c96_108 = arith.constant 96 : index
    %122 = vector.load %arg20[%c32_107, %c96_108] : memref<64x128xf32, #tpu.memory_space<vmem>>, vector<32x16xf32>
    %123 = arith.truncf %122 : vector<32x16xf32> to vector<32x16xbf16>
    %cst_109 = arith.constant dense<0.000000e+00> : vector<32x16xf32>
    %124 = tpu.matmul %123, %27, %cst_109 {dimension_numbers = #tpu.dot_dimension_numbers<[1], [0], [0], [1], [0, 0, 1, 1], [], []>} : vector<32x16xbf16>, vector<16x16xbf16>, vector<32x16xf32> -> vector<32x16xf32>
    %c0_110 = arith.constant 0 : index
    %c96_111 = arith.constant 96 : index
    %125 = vector.load %arg20[%c0_110, %c96_111] : memref<64x128xf32, #tpu.memory_space<vmem>>, vector<32x16xf32>
    tpu.vector_store %arg20[%c0_110, %c96_111], %124 {strides = array<i32>} : memref<64x128xf32, #tpu.memory_space<vmem>>, vector<32x16xf32>,
    %c32_112 = arith.constant 32 : index
    %c112_113 = arith.constant 112 : index
    %126 = vector.load %arg20[%c32_112, %c112_113] : memref<64x128xf32, #tpu.memory_space<vmem>>, vector<32x16xf32>
    %127 = arith.truncf %126 : vector<32x16xf32> to vector<32x16xbf16>
    %cst_114 = arith.constant dense<0.000000e+00> : vector<32x16xf32>
    %128 = tpu.matmul %127, %27, %cst_114 {dimension_numbers = #tpu.dot_dimension_numbers<[1], [0], [0], [1], [0, 0, 1, 1], [], []>} : vector<32x16xbf16>, vector<16x16xbf16>, vector<32x16xf32> -> vector<32x16xf32>
    %c0_115 = arith.constant 0 : index
    %c112_116 = arith.constant 112 : index
    %129 = vector.load %arg20[%c0_115, %c112_116] : memref<64x128xf32, #tpu.memory_space<vmem>>, vector<32x16xf32>
    tpu.vector_store %arg20[%c0_115, %c112_116], %128 {strides = array<i32>} : memref<64x128xf32, #tpu.memory_space<vmem>>, vector<32x16xf32>,
    %c32_117 = arith.constant 32 : index
    %c0_118 = arith.constant 0 : index
    %130 = vector.load %arg20[%c32_117, %c0_118] : memref<64x128xf32, #tpu.memory_space<vmem>>, vector<32x128xf32>
    %c1 = arith.constant 1 : index
    %c0_119 = arith.constant 0 : index
    %c0_120 = arith.constant 0 : index
    %131 = vector.load %arg9[%c1, %c0_119, %c0_120] : memref<3x32x64xbf16, #tpu.memory_space<vmem>>, vector<1x32x64xbf16>
    %132 = vector.shape_cast %131 : vector<1x32x64xbf16> to vector<32x64xbf16>
    %c0_121 = arith.constant 0 : index
    %c0_122 = arith.constant 0 : index
    %133 = vector.load %arg20[%c0_121, %c0_122] : memref<64x128xf32, #tpu.memory_space<vmem>>, vector<64x128xf32>
    %134 = arith.truncf %133 : vector<64x128xf32> to vector<64x128xbf16>
    %cst_123 = arith.constant dense<0.000000e+00> : vector<32x128xf32>
    %135 = tpu.matmul %132, %134, %cst_123 {dimension_numbers = #tpu.dot_dimension_numbers<[1], [0], [0], [1], [0, 0, 1, 1], [], []>} : vector<32x64xbf16>, vector<64x128xbf16>, vector<32x128xf32> -> vector<32x128xf32>
    %c1_124 = arith.constant 1 : index
    %c0_125 = arith.constant 0 : index
    %c0_126 = arith.constant 0 : index
    %136 = vector.load %arg10[%c1_124, %c0_125, %c0_126] : memref<3x32x1xf32, #tpu.memory_space<vmem>>, vector<1x32x1xf32>
    %137 = vector.shape_cast %136 : vector<1x32x1xf32> to vector<32x1xf32>
    %138 = vector.broadcast %137 : vector<32x1xf32> to vector<32x128xf32>
    %139 = arith.addf %135, %138 : vector<32x128xf32>
    %140 = arith.addf %139, %130 : vector<32x128xf32>
    %cst_127 = arith.constant dense<0.000000e+00> : vector<128xf32>
    %141 = vector.multi_reduction <add>, %140, %cst_127 [0] : vector<32x128xf32> to vector<128xf32>
    %142 = vector.shape_cast %141 : vector<128xf32> to vector<1x128xf32>
    %cst_128 = arith.constant 3.200000e+01 : f32
    %143 = vector.broadcast %cst_128 : f32 to vector<1x128xf32>
    %144 = arith.divf %142, %143 : vector<1x128xf32>
    %145 = vector.broadcast %144 : vector<1x128xf32> to vector<32x128xf32>
    %146 = arith.subf %140, %145 : vector<32x128xf32>
    %147 = arith.mulf %146, %146 : vector<32x128xf32>
    %cst_129 = arith.constant dense<0.000000e+00> : vector<128xf32>
    %148 = vector.multi_reduction <add>, %147, %cst_129 [0] : vector<32x128xf32> to vector<128xf32>
    %149 = vector.shape_cast %148 : vector<128xf32> to vector<1x128xf32>
    %cst_130 = arith.constant 3.200000e+01 : f32
    %150 = vector.broadcast %cst_130 : f32 to vector<1x128xf32>
    %151 = arith.divf %149, %150 : vector<1x128xf32>
    %152 = vector.broadcast %144 : vector<1x128xf32> to vector<32x128xf32>
    %153 = arith.subf %140, %152 : vector<32x128xf32>
    %cst_131 = arith.constant 9.99999974E-6 : f32
    %154 = vector.broadcast %cst_131 : f32 to vector<1x128xf32>
    %155 = arith.addf %151, %154 : vector<1x128xf32>
    %156 = math.rsqrt %155 : vector<1x128xf32>
    %157 = vector.broadcast %156 : vector<1x128xf32> to vector<32x128xf32>
    %158 = arith.mulf %153, %157 : vector<32x128xf32>
    %c1_132 = arith.constant 1 : index
    %c0_133 = arith.constant 0 : index
    %c0_134 = arith.constant 0 : index
    %159 = vector.load %arg11[%c1_132, %c0_133, %c0_134] : memref<3x32x1xf32, #tpu.memory_space<vmem>>, vector<1x32x1xf32>
    %160 = vector.shape_cast %159 : vector<1x32x1xf32> to vector<32x1xf32>
    %161 = vector.broadcast %160 : vector<32x1xf32> to vector<32x128xf32>
    %162 = arith.mulf %158, %161 : vector<32x128xf32>
    %c1_135 = arith.constant 1 : index
    %c0_136 = arith.constant 0 : index
    %c0_137 = arith.constant 0 : index
    %163 = vector.load %arg12[%c1_135, %c0_136, %c0_137] : memref<3x32x1xf32, #tpu.memory_space<vmem>>, vector<1x32x1xf32>
    %164 = vector.shape_cast %163 : vector<1x32x1xf32> to vector<32x1xf32>
    %165 = vector.broadcast %164 : vector<32x1xf32> to vector<32x128xf32>
    %166 = arith.addf %162, %165 : vector<32x128xf32>
    %cst_138 = arith.constant 0.000000e+00 : f32
    %167 = vector.broadcast %cst_138 : f32 to vector<32x128xf32>
    %168 = arith.maximumf %166, %167 : vector<32x128xf32>
    %c32_139 = arith.constant 32 : index
    %c0_140 = arith.constant 0 : index
    %169 = vector.load %arg20[%c32_139, %c0_140] : memref<64x128xf32, #tpu.memory_space<vmem>>, vector<32x128xf32>
    tpu.vector_store %arg20[%c32_139, %c0_140], %168 {strides = array<i32>} : memref<64x128xf32, #tpu.memory_space<vmem>>, vector<32x128xf32>,
    %c32_141 = arith.constant 32 : index
    %c0_142 = arith.constant 0 : index
    %170 = vector.load %arg20[%c32_141, %c0_142] : memref<64x128xf32, #tpu.memory_space<vmem>>, vector<32x16xf32>
    %171 = arith.truncf %170 : vector<32x16xf32> to vector<32x16xbf16>
    %cst_143 = arith.constant dense<0.000000e+00> : vector<32x16xf32>
    %172 = tpu.matmul %171, %27, %cst_143 {dimension_numbers = #tpu.dot_dimension_numbers<[1], [0], [0], [1], [0, 0, 1, 1], [], []>} : vector<32x16xbf16>, vector<16x16xbf16>, vector<32x16xf32> -> vector<32x16xf32>
    %c0_144 = arith.constant 0 : index
    %c0_145 = arith.constant 0 : index
    %173 = vector.load %arg20[%c0_144, %c0_145] : memref<64x128xf32, #tpu.memory_space<vmem>>, vector<32x16xf32>
    tpu.vector_store %arg20[%c0_144, %c0_145], %172 {strides = array<i32>} : memref<64x128xf32, #tpu.memory_space<vmem>>, vector<32x16xf32>,
    %c32_146 = arith.constant 32 : index
    %c16_147 = arith.constant 16 : index
    %174 = vector.load %arg20[%c32_146, %c16_147] : memref<64x128xf32, #tpu.memory_space<vmem>>, vector<32x16xf32>
    %175 = arith.truncf %174 : vector<32x16xf32> to vector<32x16xbf16>
    %cst_148 = arith.constant dense<0.000000e+00> : vector<32x16xf32>
    %176 = tpu.matmul %175, %27, %cst_148 {dimension_numbers = #tpu.dot_dimension_numbers<[1], [0], [0], [1], [0, 0, 1, 1], [], []>} : vector<32x16xbf16>, vector<16x16xbf16>, vector<32x16xf32> -> vector<32x16xf32>
    %c0_149 = arith.constant 0 : index
    %c16_150 = arith.constant 16 : index
    %177 = vector.load %arg20[%c0_149, %c16_150] : memref<64x128xf32, #tpu.memory_space<vmem>>, vector<32x16xf32>
    tpu.vector_store %arg20[%c0_149, %c16_150], %176 {strides = array<i32>} : memref<64x128xf32, #tpu.memory_space<vmem>>, vector<32x16xf32>,
    %c32_151 = arith.constant 32 : index
    %c32_152 = arith.constant 32 : index
    %178 = vector.load %arg20[%c32_151, %c32_152] : memref<64x128xf32, #tpu.memory_space<vmem>>, vector<32x16xf32>
    %179 = arith.truncf %178 : vector<32x16xf32> to vector<32x16xbf16>
    %cst_153 = arith.constant dense<0.000000e+00> : vector<32x16xf32>
    %180 = tpu.matmul %179, %27, %cst_153 {dimension_numbers = #tpu.dot_dimension_numbers<[1], [0], [0], [1], [0, 0, 1, 1], [], []>} : vector<32x16xbf16>, vector<16x16xbf16>, vector<32x16xf32> -> vector<32x16xf32>
    %c0_154 = arith.constant 0 : index
    %c32_155 = arith.constant 32 : index
    %181 = vector.load %arg20[%c0_154, %c32_155] : memref<64x128xf32, #tpu.memory_space<vmem>>, vector<32x16xf32>
    tpu.vector_store %arg20[%c0_154, %c32_155], %180 {strides = array<i32>} : memref<64x128xf32, #tpu.memory_space<vmem>>, vector<32x16xf32>,
    %c32_156 = arith.constant 32 : index
    %c48_157 = arith.constant 48 : index
    %182 = vector.load %arg20[%c32_156, %c48_157] : memref<64x128xf32, #tpu.memory_space<vmem>>, vector<32x16xf32>
    %183 = arith.truncf %182 : vector<32x16xf32> to vector<32x16xbf16>
    %cst_158 = arith.constant dense<0.000000e+00> : vector<32x16xf32>
    %184 = tpu.matmul %183, %27, %cst_158 {dimension_numbers = #tpu.dot_dimension_numbers<[1], [0], [0], [1], [0, 0, 1, 1], [], []>} : vector<32x16xbf16>, vector<16x16xbf16>, vector<32x16xf32> -> vector<32x16xf32>
    %c0_159 = arith.constant 0 : index
    %c48_160 = arith.constant 48 : index
    %185 = vector.load %arg20[%c0_159, %c48_160] : memref<64x128xf32, #tpu.memory_space<vmem>>, vector<32x16xf32>
    tpu.vector_store %arg20[%c0_159, %c48_160], %184 {strides = array<i32>} : memref<64x128xf32, #tpu.memory_space<vmem>>, vector<32x16xf32>,
    %c32_161 = arith.constant 32 : index
    %c64_162 = arith.constant 64 : index
    %186 = vector.load %arg20[%c32_161, %c64_162] : memref<64x128xf32, #tpu.memory_space<vmem>>, vector<32x16xf32>
    %187 = arith.truncf %186 : vector<32x16xf32> to vector<32x16xbf16>
    %cst_163 = arith.constant dense<0.000000e+00> : vector<32x16xf32>
    %188 = tpu.matmul %187, %27, %cst_163 {dimension_numbers = #tpu.dot_dimension_numbers<[1], [0], [0], [1], [0, 0, 1, 1], [], []>} : vector<32x16xbf16>, vector<16x16xbf16>, vector<32x16xf32> -> vector<32x16xf32>
    %c0_164 = arith.constant 0 : index
    %c64_165 = arith.constant 64 : index
    %189 = vector.load %arg20[%c0_164, %c64_165] : memref<64x128xf32, #tpu.memory_space<vmem>>, vector<32x16xf32>
    tpu.vector_store %arg20[%c0_164, %c64_165], %188 {strides = array<i32>} : memref<64x128xf32, #tpu.memory_space<vmem>>, vector<32x16xf32>,
    %c32_166 = arith.constant 32 : index
    %c80_167 = arith.constant 80 : index
    %190 = vector.load %arg20[%c32_166, %c80_167] : memref<64x128xf32, #tpu.memory_space<vmem>>, vector<32x16xf32>
    %191 = arith.truncf %190 : vector<32x16xf32> to vector<32x16xbf16>
    %cst_168 = arith.constant dense<0.000000e+00> : vector<32x16xf32>
    %192 = tpu.matmul %191, %27, %cst_168 {dimension_numbers = #tpu.dot_dimension_numbers<[1], [0], [0], [1], [0, 0, 1, 1], [], []>} : vector<32x16xbf16>, vector<16x16xbf16>, vector<32x16xf32> -> vector<32x16xf32>
    %c0_169 = arith.constant 0 : index
    %c80_170 = arith.constant 80 : index
    %193 = vector.load %arg20[%c0_169, %c80_170] : memref<64x128xf32, #tpu.memory_space<vmem>>, vector<32x16xf32>
    tpu.vector_store %arg20[%c0_169, %c80_170], %192 {strides = array<i32>} : memref<64x128xf32, #tpu.memory_space<vmem>>, vector<32x16xf32>,
    %c32_171 = arith.constant 32 : index
    %c96_172 = arith.constant 96 : index
    %194 = vector.load %arg20[%c32_171, %c96_172] : memref<64x128xf32, #tpu.memory_space<vmem>>, vector<32x16xf32>
    %195 = arith.truncf %194 : vector<32x16xf32> to vector<32x16xbf16>
    %cst_173 = arith.constant dense<0.000000e+00> : vector<32x16xf32>
    %196 = tpu.matmul %195, %27, %cst_173 {dimension_numbers = #tpu.dot_dimension_numbers<[1], [0], [0], [1], [0, 0, 1, 1], [], []>} : vector<32x16xbf16>, vector<16x16xbf16>, vector<32x16xf32> -> vector<32x16xf32>
    %c0_174 = arith.constant 0 : index
    %c96_175 = arith.constant 96 : index
    %197 = vector.load %arg20[%c0_174, %c96_175] : memref<64x128xf32, #tpu.memory_space<vmem>>, vector<32x16xf32>
    tpu.vector_store %arg20[%c0_174, %c96_175], %196 {strides = array<i32>} : memref<64x128xf32, #tpu.memory_space<vmem>>, vector<32x16xf32>,
    %c32_176 = arith.constant 32 : index
    %c112_177 = arith.constant 112 : index
    %198 = vector.load %arg20[%c32_176, %c112_177] : memref<64x128xf32, #tpu.memory_space<vmem>>, vector<32x16xf32>
    %199 = arith.truncf %198 : vector<32x16xf32> to vector<32x16xbf16>
    %cst_178 = arith.constant dense<0.000000e+00> : vector<32x16xf32>
    %200 = tpu.matmul %199, %27, %cst_178 {dimension_numbers = #tpu.dot_dimension_numbers<[1], [0], [0], [1], [0, 0, 1, 1], [], []>} : vector<32x16xbf16>, vector<16x16xbf16>, vector<32x16xf32> -> vector<32x16xf32>
    %c0_179 = arith.constant 0 : index
    %c112_180 = arith.constant 112 : index
    %201 = vector.load %arg20[%c0_179, %c112_180] : memref<64x128xf32, #tpu.memory_space<vmem>>, vector<32x16xf32>
    tpu.vector_store %arg20[%c0_179, %c112_180], %200 {strides = array<i32>} : memref<64x128xf32, #tpu.memory_space<vmem>>, vector<32x16xf32>,
    %c2 = arith.constant 2 : index
    %c0_181 = arith.constant 0 : index
    %c0_182 = arith.constant 0 : index
    %202 = vector.load %arg9[%c2, %c0_181, %c0_182] : memref<3x32x64xbf16, #tpu.memory_space<vmem>>, vector<1x32x64xbf16>
    %203 = vector.shape_cast %202 : vector<1x32x64xbf16> to vector<32x64xbf16>
    %c0_183 = arith.constant 0 : index
    %c0_184 = arith.constant 0 : index
    %204 = vector.load %arg20[%c0_183, %c0_184] : memref<64x128xf32, #tpu.memory_space<vmem>>, vector<64x128xf32>
    %205 = arith.truncf %204 : vector<64x128xf32> to vector<64x128xbf16>
    %cst_185 = arith.constant dense<0.000000e+00> : vector<32x128xf32>
    %206 = tpu.matmul %203, %205, %cst_185 {dimension_numbers = #tpu.dot_dimension_numbers<[1], [0], [0], [1], [0, 0, 1, 1], [], []>} : vector<32x64xbf16>, vector<64x128xbf16>, vector<32x128xf32> -> vector<32x128xf32>
    %c2_186 = arith.constant 2 : index
    %c0_187 = arith.constant 0 : index
    %c0_188 = arith.constant 0 : index
    %207 = vector.load %arg10[%c2_186, %c0_187, %c0_188] : memref<3x32x1xf32, #tpu.memory_space<vmem>>, vector<1x32x1xf32>
    %208 = vector.shape_cast %207 : vector<1x32x1xf32> to vector<32x1xf32>
    %209 = vector.broadcast %208 : vector<32x1xf32> to vector<32x128xf32>
    %210 = arith.addf %206, %209 : vector<32x128xf32>
    %cst_189 = arith.constant dense<0.000000e+00> : vector<128xf32>
    %211 = vector.multi_reduction <add>, %210, %cst_189 [0] : vector<32x128xf32> to vector<128xf32>
    %212 = vector.shape_cast %211 : vector<128xf32> to vector<1x128xf32>
    %cst_190 = arith.constant 3.200000e+01 : f32
    %213 = vector.broadcast %cst_190 : f32 to vector<1x128xf32>
    %214 = arith.divf %212, %213 : vector<1x128xf32>
    %215 = vector.broadcast %214 : vector<1x128xf32> to vector<32x128xf32>
    %216 = arith.subf %210, %215 : vector<32x128xf32>
    %217 = arith.mulf %216, %216 : vector<32x128xf32>
    %cst_191 = arith.constant dense<0.000000e+00> : vector<128xf32>
    %218 = vector.multi_reduction <add>, %217, %cst_191 [0] : vector<32x128xf32> to vector<128xf32>
    %219 = vector.shape_cast %218 : vector<128xf32> to vector<1x128xf32>
    %cst_192 = arith.constant 3.200000e+01 : f32
    %220 = vector.broadcast %cst_192 : f32 to vector<1x128xf32>
    %221 = arith.divf %219, %220 : vector<1x128xf32>
    %222 = vector.broadcast %214 : vector<1x128xf32> to vector<32x128xf32>
    %223 = arith.subf %210, %222 : vector<32x128xf32>
    %cst_193 = arith.constant 9.99999974E-6 : f32
    %224 = vector.broadcast %cst_193 : f32 to vector<1x128xf32>
    %225 = arith.addf %221, %224 : vector<1x128xf32>
    %226 = math.rsqrt %225 : vector<1x128xf32>
    %227 = vector.broadcast %226 : vector<1x128xf32> to vector<32x128xf32>
    %228 = arith.mulf %223, %227 : vector<32x128xf32>
    %c2_194 = arith.constant 2 : index
    %c0_195 = arith.constant 0 : index
    %c0_196 = arith.constant 0 : index
    %229 = vector.load %arg11[%c2_194, %c0_195, %c0_196] : memref<3x32x1xf32, #tpu.memory_space<vmem>>, vector<1x32x1xf32>
    %230 = vector.shape_cast %229 : vector<1x32x1xf32> to vector<32x1xf32>
    %231 = vector.broadcast %230 : vector<32x1xf32> to vector<32x128xf32>
    %232 = arith.mulf %228, %231 : vector<32x128xf32>
    %c2_197 = arith.constant 2 : index
    %c0_198 = arith.constant 0 : index
    %c0_199 = arith.constant 0 : index
    %233 = vector.load %arg12[%c2_197, %c0_198, %c0_199] : memref<3x32x1xf32, #tpu.memory_space<vmem>>, vector<1x32x1xf32>
    %234 = vector.shape_cast %233 : vector<1x32x1xf32> to vector<32x1xf32>
    %235 = vector.broadcast %234 : vector<32x1xf32> to vector<32x128xf32>
    %236 = arith.addf %232, %235 : vector<32x128xf32>
    %cst_200 = arith.constant 0.000000e+00 : f32
    %237 = vector.broadcast %cst_200 : f32 to vector<32x128xf32>
    %238 = arith.maximumf %236, %237 : vector<32x128xf32>
    %c32_201 = arith.constant 32 : index
    %c0_202 = arith.constant 0 : index
    %239 = vector.load %arg20[%c32_201, %c0_202] : memref<64x128xf32, #tpu.memory_space<vmem>>, vector<32x128xf32>
    tpu.vector_store %arg20[%c32_201, %c0_202], %238 {strides = array<i32>} : memref<64x128xf32, #tpu.memory_space<vmem>>, vector<32x128xf32>,
    %c32_203 = arith.constant 32 : index
    %c0_204 = arith.constant 0 : index
    %240 = vector.load %arg20[%c32_203, %c0_204] : memref<64x128xf32, #tpu.memory_space<vmem>>, vector<32x128xf32>
    %c0_205 = arith.constant 0 : index
    %c0_206 = arith.constant 0 : index
    %241 = vector.load %arg13[%c0_205, %c0_206] : memref<32x32xbf16, #tpu.memory_space<vmem>>, vector<32x32xbf16>
    %242 = arith.truncf %240 : vector<32x128xf32> to vector<32x128xbf16>
    %cst_207 = arith.constant dense<0.000000e+00> : vector<32x128xf32>
    %243 = tpu.matmul %241, %242, %cst_207 {dimension_numbers = #tpu.dot_dimension_numbers<[1], [0], [0], [1], [0, 0, 1, 1], [], []>} : vector<32x32xbf16>, vector<32x128xbf16>, vector<32x128xf32> -> vector<32x128xf32>
    %c0_208 = arith.constant 0 : index
    %c0_209 = arith.constant 0 : index
    %244 = vector.load %arg14[%c0_208, %c0_209] : memref<32x1xf32, #tpu.memory_space<vmem>>, vector<32x1xf32>
    %245 = vector.broadcast %244 : vector<32x1xf32> to vector<32x128xf32>
    %246 = arith.addf %243, %245 : vector<32x128xf32>
    %cst_210 = arith.constant 0.000000e+00 : f32
    %247 = vector.broadcast %cst_210 : f32 to vector<32x128xf32>
    %248 = arith.maximumf %246, %247 : vector<32x128xf32>
    %c0_211 = arith.constant 0 : index
    %c0_212 = arith.constant 0 : index
    %249 = vector.load %arg15[%c0_211, %c0_212] : memref<32x32xbf16, #tpu.memory_space<vmem>>, vector<32x32xbf16>
    %250 = arith.truncf %248 : vector<32x128xf32> to vector<32x128xbf16>
    %cst_213 = arith.constant dense<0.000000e+00> : vector<32x128xf32>
    %251 = tpu.matmul %249, %250, %cst_213 {dimension_numbers = #tpu.dot_dimension_numbers<[1], [0], [0], [1], [0, 0, 1, 1], [], []>} : vector<32x32xbf16>, vector<32x128xbf16>, vector<32x128xf32> -> vector<32x128xf32>
    %c0_214 = arith.constant 0 : index
    %c0_215 = arith.constant 0 : index
    %252 = vector.load %arg16[%c0_214, %c0_215] : memref<32x1xf32, #tpu.memory_space<vmem>>, vector<32x1xf32>
    %253 = vector.broadcast %252 : vector<32x1xf32> to vector<32x128xf32>
    %254 = arith.addf %251, %253 : vector<32x128xf32>
    %cst_216 = arith.constant 0.000000e+00 : f32
    %255 = vector.broadcast %cst_216 : f32 to vector<32x128xf32>
    %256 = arith.maximumf %254, %255 : vector<32x128xf32>
    %c0_217 = arith.constant 0 : index
    %c0_218 = arith.constant 0 : index
    %257 = vector.load %arg17[%c0_217, %c0_218] : memref<1x32xbf16, #tpu.memory_space<vmem>>, vector<1x32xbf16>
    %258 = arith.truncf %256 : vector<32x128xf32> to vector<32x128xbf16>
    %cst_219 = arith.constant dense<0.000000e+00> : vector<1x128xf32>
    %259 = tpu.matmul %257, %258, %cst_219 {dimension_numbers = #tpu.dot_dimension_numbers<[1], [0], [0], [1], [0, 0, 1, 1], [], []>} : vector<1x32xbf16>, vector<32x128xbf16>, vector<1x128xf32> -> vector<1x128xf32>
    %c0_220 = arith.constant 0 : index
    %c0_221 = arith.constant 0 : index
    %260 = vector.load %arg18[%c0_220, %c0_221] : memref<1x1xf32, #tpu.memory_space<vmem>>, vector<1x1xf32>
    %261 = vector.broadcast %260 : vector<1x1xf32> to vector<1x128xf32>
    %262 = arith.addf %259, %261 : vector<1x128xf32>
    %c0_222 = arith.constant 0 : index
    %c0_223 = arith.constant 0 : index
    %263 = vector.load %arg1[%c0_222, %c0_223] : memref<1x128xf32, #tpu.memory_space<vmem>>, vector<1x128xf32>
    %264 = arith.mulf %262, %263 : vector<1x128xf32>
    %c0_224 = arith.constant 0 : index
    %c0_225 = arith.constant 0 : index
    %265 = vector.load %arg19[%c0_224, %c0_225] : memref<1x128xf32, #tpu.memory_space<vmem>>, vector<1x128xf32>
    tpu.vector_store %arg19[%c0_224, %c0_225], %264 {strides = array<i32>} : memref<1x128xf32, #tpu.memory_space<vmem>>, vector<1x128xf32>,
    return
  }
}

</mosaic_0001>

<llo_original>
// kernel: div.8
$region0: #{div.8}
  #allocation0 [shape = 's32[1]{0}', space=sflag, size = 0x4, scoped, tag = 'scoped memory for div.8']
  %s0 = inlined_call_operand.vmem [shape: f32[8], index: 0, kind: input, shape index: {}]
  %s1 = inlined_call_operand.vmem [shape: f32[8,16], index: 1, kind: output, shape index: {}]
  // Predicated region
  $region2: #{div.8} parent=0 // pred_check
    _
  $region3: #{div.8} parent=0 // pred_check_branch
    %3 = sbr.rel (0) target = $region5
  $region4: #{div.8} parent=0 // pred_region
    _
  $region5: #{div.8} parent=0 // pred_fallthru
    _
  %v4 = vld [vmem:[%s0] ss:$0 sm:$0xff]
  %6 = vbcast.lane.b32.xlu0 %v4, 256
  %v7 = vpop.permute.xlu0 %6
  %8 = vst [vmem:[%s1] sm:$0xff] %v7

// kernel: resgcn_forward_pallas.1
$region0: #{resgcn_forward_pallas.1}
  #allocation0 [shape = 'u32[]', space=smem, size = 0x4, offset = 0x4, fixed_abs, tag = 'smem constant byte address 0x4 - core index']
  #allocation1 [shape = 'u32[144,128]{1,0:T(1,128)}', space=vmem, size = 0x12000, scoped, tag = 'internal scratch']
  #allocation2 [shape = 'f32[64,128]{1,0:T(8,128)}', space=vmem, size = 0x8000, scoped, tag = 'scratch operand']
  #allocation3 [shape = 'f32[1,1]{1,0:T(1,128)S(1)}', space=vmem, size = 0x200, scoped, tag = 'scoped memory for resgcn_forward_pallas.1']
  %s0 = inlined_call_operand.vmem [shape: f32[1,128], index: 0, kind: input, shape index: {}]
  %s1 = inlined_call_operand.vmem [shape: f32[1,128], index: 1, kind: input, shape index: {}]
  %s2 = inlined_call_operand.vmem [shape: bf16[16,16], index: 2, kind: input, shape index: {}]
  %s3 = inlined_call_operand.vmem [shape: f32[32,1], index: 3, kind: input, shape index: {}]
  %s4 = inlined_call_operand.vmem [shape: f32[32,1], index: 4, kind: input, shape index: {}]
  %s5 = inlined_call_operand.vmem [shape: bf16[32,32], index: 5, kind: input, shape index: {}]
  %s6 = inlined_call_operand.vmem [shape: f32[32,1], index: 6, kind: input, shape index: {}]
  %s7 = inlined_call_operand.vmem [shape: bf16[32,32], index: 7, kind: input, shape index: {}]
  %s8 = inlined_call_operand.vmem [shape: f32[32,1], index: 8, kind: input, shape index: {}]
  %s9 = inlined_call_operand.vmem [shape: bf16[3,32,64], index: 9, kind: input, shape index: {}]
  %s10 = inlined_call_operand.vmem [shape: f32[3,32,1], index: 10, kind: input, shape index: {}]
  %s11 = inlined_call_operand.vmem [shape: f32[3,32,1], index: 11, kind: input, shape index: {}]
  %s12 = inlined_call_operand.vmem [shape: f32[3,32,1], index: 12, kind: input, shape index: {}]
  %s13 = inlined_call_operand.vmem [shape: bf16[32,32], index: 13, kind: input, shape index: {}]
  %s14 = inlined_call_operand.vmem [shape: f32[32,1], index: 14, kind: input, shape index: {}]
  %s15 = inlined_call_operand.vmem [shape: bf16[32,32], index: 15, kind: input, shape index: {}]
  %s16 = inlined_call_operand.vmem [shape: f32[32,1], index: 16, kind: input, shape index: {}]
  %s17 = inlined_call_operand.vmem [shape: bf16[1,32], index: 17, kind: input, shape index: {}]
  %s18 = inlined_call_operand.<no memory space> [shape: f32[1,1], index: 18, kind: input, shape index: {}]
  %s19 = inlined_call_operand.vmem [shape: f32[1,128], index: 19, kind: output, shape index: {}]
  %s20 = sld [smem:[#allocation0]]
  $region86: #{resgcn_forward_pallas.1} parent=0
    _
  %s22 = ssub.s32 1, %s20
  %s23 = scalar_select 0, %s22, %s20
  %v24 = vstv %s18
  %25 = vst [vmem:[#allocation3] sm:$0x1] %v24
  // Predicated region
  $region2: #{resgcn_forward_pallas.1} parent=0 // pred_check
    _
  $region3: #{resgcn_forward_pallas.1} parent=0 // pred_check_branch
    %27 = sbr.rel (0) target = $region5
  $region4: #{resgcn_forward_pallas.1} parent=0 // pred_region
    _
  $region5: #{resgcn_forward_pallas.1} parent=0 // pred_fallthru
    _
  // Predicated region
  $region6: #{resgcn_forward_pallas.1} parent=0 // pred_check
    _
  $region7: #{resgcn_forward_pallas.1} parent=0 // pred_check_branch
    %29 = sbr.rel (0) target = $region9
  $region8: #{resgcn_forward_pallas.1} parent=0 // pred_region
    _
  $region9: #{resgcn_forward_pallas.1} parent=0 // pred_fallthru
    _
  // Predicated region
  $region10: #{resgcn_forward_pallas.1} parent=0 // pred_check
    _
  $region11: #{resgcn_forward_pallas.1} parent=0 // pred_check_branch
    %31 = sbr.rel (0) target = $region13
  $region12: #{resgcn_forward_pallas.1} parent=0 // pred_region
    _
  $region13: #{resgcn_forward_pallas.1} parent=0 // pred_fallthru
    _
  // Predicated region
  $region14: #{resgcn_forward_pallas.1} parent=0 // pred_check
    _
  $region15: #{resgcn_forward_pallas.1} parent=0 // pred_check_branch
    %33 = sbr.rel (0) target = $region17
  $region16: #{resgcn_forward_pallas.1} parent=0 // pred_region
    _
  $region17: #{resgcn_forward_pallas.1} parent=0 // pred_fallthru
    _
  // Predicated region
  $region18: #{resgcn_forward_pallas.1} parent=0 // pred_check
    _
  $region19: #{resgcn_forward_pallas.1} parent=0 // pred_check_branch
    %35 = sbr.rel (0) target = $region21
  $region20: #{resgcn_forward_pallas.1} parent=0 // pred_region
    _
  $region21: #{resgcn_forward_pallas.1} parent=0 // pred_fallthru
    _
  // Predicated region
  $region22: #{resgcn_forward_pallas.1} parent=0 // pred_check
    _
  $region23: #{resgcn_forward_pallas.1} parent=0 // pred_check_branch
    %37 = sbr.rel (0) target = $region25
  $region24: #{resgcn_forward_pallas.1} parent=0 // pred_region
    _
  $region25: #{resgcn_forward_pallas.1} parent=0 // pred_fallthru
    _
  // Predicated region
  $region26: #{resgcn_forward_pallas.1} parent=0 // pred_check
    _
  $region27: #{resgcn_forward_pallas.1} parent=0 // pred_check_branch
    %39 = sbr.rel (0) target = $region29
  $region28: #{resgcn_forward_pallas.1} parent=0 // pred_region
    _
  $region29: #{resgcn_forward_pallas.1} parent=0 // pred_fallthru
    _
  // Predicated region
  $region30: #{resgcn_forward_pallas.1} parent=0 // pred_check
    _
  $region31: #{resgcn_forward_pallas.1} parent=0 // pred_check_branch
    %41 = sbr.rel (0) target = $region33
  $region32: #{resgcn_forward_pallas.1} parent=0 // pred_region
    _
  $region33: #{resgcn_forward_pallas.1} parent=0 // pred_fallthru
    _
  // Predicated region
  $region34: #{resgcn_forward_pallas.1} parent=0 // pred_check
    _
  $region35: #{resgcn_forward_pallas.1} parent=0 // pred_check_branch
    %43 = sbr.rel (0) target = $region37
  $region36: #{resgcn_forward_pallas.1} parent=0 // pred_region
    _
  $region37: #{resgcn_forward_pallas.1} parent=0 // pred_fallthru
    _
  // Predicated region
  $region38: #{resgcn_forward_pallas.1} parent=0 // pred_check
    _
  $region39: #{resgcn_forward_pallas.1} parent=0 // pred_check_branch
    %45 = sbr.rel (0) target = $region41
  $region40: #{resgcn_forward_pallas.1} parent=0 // pred_region
    _
  $region41: #{resgcn_forward_pallas.1} parent=0 // pred_fallthru
    _
  // Predicated region
  $region42: #{resgcn_forward_pallas.1} parent=0 // pred_check
    _
  $region43: #{resgcn_forward_pallas.1} parent=0 // pred_check_branch
    %47 = sbr.rel (0) target = $region45
  $region44: #{resgcn_forward_pallas.1} parent=0 // pred_region
    _
  $region45: #{resgcn_forward_pallas.1} parent=0 // pred_fallthru
    _
  // Predicated region
  $region46: #{resgcn_forward_pallas.1} parent=0 // pred_check
    _
  $region47: #{resgcn_forward_pallas.1} parent=0 // pred_check_branch
    %49 = sbr.rel (0) target = $region49
  $region48: #{resgcn_forward_pallas.1} parent=0 // pred_region
    _
  $region49: #{resgcn_forward_pallas.1} parent=0 // pred_fallthru
    _
  // Predicated region
  $region50: #{resgcn_forward_pallas.1} parent=0 // pred_check
    _
  $region51: #{resgcn_forward_pallas.1} parent=0 // pred_check_branch
    %51 = sbr.rel (0) target = $region53
  $region52: #{resgcn_forward_pallas.1} parent=0 // pred_region
    _
  $region53: #{resgcn_forward_pallas.1} parent=0 // pred_fallthru
    _
  // Predicated region
  $region54: #{resgcn_forward_pallas.1} parent=0 // pred_check
    _
  $region55: #{resgcn_forward_pallas.1} parent=0 // pred_check_branch
    %53 = sbr.rel (0) target = $region57
  $region56: #{resgcn_forward_pallas.1} parent=0 // pred_region
    _
  $region57: #{resgcn_forward_pallas.1} parent=0 // pred_fallthru
    _
  // Predicated region
  $region58: #{resgcn_forward_pallas.1} parent=0 // pred_check
    _
  $region59: #{resgcn_forward_pallas.1} parent=0 // pred_check_branch
    %55 = sbr.rel (0) target = $region61
  $region60: #{resgcn_forward_pallas.1} parent=0 // pred_region
    _
  $region61: #{resgcn_forward_pallas.1} parent=0 // pred_fallthru
    _
  // Predicated region
  $region62: #{resgcn_forward_pallas.1} parent=0 // pred_check
    _
  $region63: #{resgcn_forward_pallas.1} parent=0 // pred_check_branch
    %57 = sbr.rel (0) target = $region65
  $region64: #{resgcn_forward_pallas.1} parent=0 // pred_region
    _
  $region65: #{resgcn_forward_pallas.1} parent=0 // pred_fallthru
    _
  // Predicated region
  $region66: #{resgcn_forward_pallas.1} parent=0 // pred_check
    _
  $region67: #{resgcn_forward_pallas.1} parent=0 // pred_check_branch
    %59 = sbr.rel (0) target = $region69
  $region68: #{resgcn_forward_pallas.1} parent=0 // pred_region
    _
  $region69: #{resgcn_forward_pallas.1} parent=0 // pred_fallthru
    _
  // Predicated region
  $region70: #{resgcn_forward_pallas.1} parent=0 // pred_check
    _
  $region71: #{resgcn_forward_pallas.1} parent=0 // pred_check_branch
    %61 = sbr.rel (0) target = $region73
  $region72: #{resgcn_forward_pallas.1} parent=0 // pred_region
    _
  $region73: #{resgcn_forward_pallas.1} parent=0 // pred_fallthru
    _
  // Predicated region
  $region74: #{resgcn_forward_pallas.1} parent=0 // pred_check
    _
  $region75: #{resgcn_forward_pallas.1} parent=0 // pred_check_branch
    %63 = sbr.rel (0) target = $region77
  $region76: #{resgcn_forward_pallas.1} parent=0 // pred_region
    _
  $region77: #{resgcn_forward_pallas.1} parent=0 // pred_fallthru
    _
  %v65 = vld [vmem:[%s0] sm:$0x1]
  %v66 = vld [vmem:[%s3] sm:$0xff]
  %v67 = vld [vmem:[%s3 + $0x8] sm:$0xff]
  %v68 = vld [vmem:[%s3 + $0x10] sm:$0xff]
  %v69 = vld [vmem:[%s3 + $0x18] sm:$0xff]
  %71 = vset.pattern.permute.xlu0 0
  %72 = vperm.xlu0 %71, %v66
  %v73 = vpop.permute.xlu0 %72
  %76 = vset.pattern.permute.xlu0 0
  %77 = vperm.xlu0 %76, %v67
  %v78 = vpop.permute.xlu0 %77
  %81 = vset.pattern.permute.xlu0 0
  %82 = vperm.xlu0 %81, %v68
  %v83 = vpop.permute.xlu0 %82
  %86 = vset.pattern.permute.xlu0 0
  %87 = vperm.xlu0 %86, %v69
  %v88 = vpop.permute.xlu0 %87
  %v91 = vlaneseq
  %v92 = vshrl.u32 %v91, 7
  %v93 = vsub.s32 0, %v92
  %v94 = vrot.slane %v65, %v93
  %v96 = vmul.f32 %v73, %v94
  %v97 = vmul.f32 %v78, %v94
  %v98 = vmul.f32 %v83, %v94
  %v99 = vmul.f32 %v88, %v94
  %v100 = vld [vmem:[%s4] sm:$0xff]
  %v101 = vld [vmem:[%s4 + $0x8] sm:$0xff]
  %v102 = vld [vmem:[%s4 + $0x10] sm:$0xff]
  %v103 = vld [vmem:[%s4 + $0x18] sm:$0xff]
  %105 = vset.pattern.permute.xlu0 0
  %106 = vperm.xlu0 %105, %v100
  %v107 = vpop.permute.xlu0 %106
  %110 = vset.pattern.permute.xlu0 0
  %111 = vperm.xlu0 %110, %v101
  %v112 = vpop.permute.xlu0 %111
  %115 = vset.pattern.permute.xlu0 0
  %116 = vperm.xlu0 %115, %v102
  %v117 = vpop.permute.xlu0 %116
  %120 = vset.pattern.permute.xlu0 0
  %121 = vperm.xlu0 %120, %v103
  %v122 = vpop.permute.xlu0 %121
  %v124 = vadd.f32 %v96, %v107
  %v125 = vadd.f32 %v97, %v112
  %v126 = vadd.f32 %v98, %v117
  %v127 = vadd.f32 %v99, %v122
  %v128 = vmax.f32 %v124, 0.0
  %v129 = vmax.f32 %v125, 0.0
  %v130 = vmax.f32 %v126, 0.0
  %v131 = vmax.f32 %v127, 0.0
  %v132 = vld [vmem:[%s5] sm:$0xf]
  %v133 = vld [vmem:[%s5 + $0x4] sm:$0xf]
  %v134 = vld [vmem:[%s5 + $0x8] sm:$0xf]
  %v135 = vld [vmem:[%s5 + $0xc] sm:$0xf]
  %v136 = vpack.c.bf16 %v129, %v128
  %v137 = vpack.c.bf16 %v131, %v130
  %v138 = vld [vmem:[%s6] sm:$0xff]
  %v139 = vld [vmem:[%s6 + $0x8] sm:$0xff]
  %v140 = vld [vmem:[%s6 + $0x10] sm:$0xff]
  %v141 = vld [vmem:[%s6 + $0x18] sm:$0xff]
  %143 = vset.pattern.permute.xlu0 0
  %144 = vperm.xlu0 %143, %v138
  %v145 = vpop.permute.xlu0 %144
  %148 = vset.pattern.permute.xlu0 0
  %149 = vperm.xlu0 %148, %v139
  %v150 = vpop.permute.xlu0 %149
  %153 = vset.pattern.permute.xlu0 0
  %154 = vperm.xlu0 %153, %v140
  %v155 = vpop.permute.xlu0 %154
  %158 = vset.pattern.permute.xlu0 0
  %159 = vperm.xlu0 %158, %v141
  %v160 = vpop.permute.xlu0 %159
  %v166 = vunpack.c.l.b16 %v132
  %v167 = vunpack.c.l.b16 %v133
  %v168 = vunpack.c.l.b16 %v134
  %v169 = vunpack.c.l.b16 %v135
  %v170 = vpack.c.b16 %v167, %v166
  %v171 = vpack.c.b16 %v169, %v168
  %vm172 = vcmask 261120
  %v174 = vsel %vm172, %v170, 0
  %v177 = vsel %vm172, %v171, 0
  %179 = vmatprep.subr.bf16.mxu0 0
  %180 = vmatpush1.bf16.msra.mxu0 0
  %181 = vmatprep.subr.bf16.mxu0 0
  %182 = vmatpush1.bf16.msra.mxu0 0
  %183 = vmatprep.subr.bf16.mxu0 0
  %184 = vmatpush1.bf16.msra.mxu0 0
  %185 = vmatprep.subr.bf16.mxu0 0
  %186 = vmatpush1.bf16.msra.mxu0 0
  %187 = vmatprep.subr.bf16.mxu0 0
  %188 = vmatpush1.bf16.msra.mxu0 0
  %189 = vmatprep.subr.bf16.mxu0 0
  %190 = vmatpush1.bf16.msra.mxu0 0
  %191 = vmatprep.subr.bf16.mxu0 0
  %192 = vmatpush1.bf16.msra.mxu0 %v137
  %193 = vmatprep.subr.bf16.mxu0 0
  %194 = vmatpush1.bf16.msra.mxu0 %v136
  %195 = vmatprep.subr.bf16.mxu0 0
  %196 = vmatpush2.bf16.msra.mxu0 0
  %197 = vmatprep.subr.bf16.mxu0 0
  %198 = vmatpush2.bf16.msra.mxu0 0
  %199 = vmatprep.subr.bf16.mxu0 0
  %200 = vmatpush2.bf16.msra.mxu0 0
  %201 = vmatprep.subr.bf16.mxu0 0
  %202 = vmatpush2.bf16.msra.mxu0 0
  %203 = vmatprep.subr.bf16.mxu0 0
  %204 = vmatpush2.bf16.msra.mxu0 0
  %205 = vmatprep.subr.bf16.mxu0 0
  %206 = vmatpush2.bf16.msra.mxu0 0
  %207 = vmatprep.subr.bf16.mxu0 0
  %208 = vmatpush2.bf16.msra.mxu0 0
  %209 = vmatprep.subr.bf16.mxu0 0
  %210 = vmatpush2.bf16.msra.mxu0 0
  %211 = vmatprep.mubr.bf16.mxu0 0
  %212 = vmatmul.mubr.bf16.gmra.mxu0 %v174
  %v213 = vpop.f32.mrf.mxu0
  %v214 = vadd.f32 %v145, %v213
  %v215 = vpop.f32.mrf.mxu0
  %v216 = vpop.f32.mrf.mxu0
  %v217 = vadd.f32 %v150, %v216
  %v218 = vpop.f32.mrf.mxu0
  %219 = vmatprep.mubr.bf16.mxu0 0
  %220 = vmatmul.mubr.bf16.gmra.mxu0 %v177
  %v221 = vpop.f32.mrf.mxu0
  %v222 = vadd.f32 %v155, %v221
  %v223 = vpop.f32.mrf.mxu0
  %v224 = vpop.f32.mrf.mxu0
  %v225 = vadd.f32 %v160, %v224
  %v226 = vpop.f32.mrf.mxu0
  %227 = vdwg.mxu0
  %v228 = vmax.f32 %v214, 0.0
  %v229 = vmax.f32 %v217, 0.0
  %v230 = vmax.f32 %v222, 0.0
  %v231 = vmax.f32 %v225, 0.0
  %v232 = vld [vmem:[%s7] sm:$0xf]
  %v233 = vld [vmem:[%s7 + $0x4] sm:$0xf]
  %v234 = vld [vmem:[%s7 + $0x8] sm:$0xf]
  %v235 = vld [vmem:[%s7 + $0xc] sm:$0xf]
  %v236 = vpack.c.bf16 %v229, %v228
  %v237 = vpack.c.bf16 %v231, %v230
  %v238 = vld [vmem:[%s8] sm:$0xff]
  %v239 = vld [vmem:[%s8 + $0x8] sm:$0xff]
  %v240 = vld [vmem:[%s8 + $0x10] sm:$0xff]
  %v241 = vld [vmem:[%s8 + $0x18] sm:$0xff]
  %243 = vset.pattern.permute.xlu0 0
  %244 = vperm.xlu0 %243, %v238
  %v245 = vpop.permute.xlu0 %244
  %248 = vset.pattern.permute.xlu0 0
  %249 = vperm.xlu0 %248, %v239
  %v250 = vpop.permute.xlu0 %249
  %253 = vset.pattern.permute.xlu0 0
  %254 = vperm.xlu0 %253, %v240
  %v255 = vpop.permute.xlu0 %254
  %258 = vset.pattern.permute.xlu0 0
  %259 = vperm.xlu0 %258, %v241
  %v260 = vpop.permute.xlu0 %259
  %v266 = vunpack.c.l.b16 %v232
  %v267 = vunpack.c.l.b16 %v233
  %v268 = vunpack.c.l.b16 %v234
  %v269 = vunpack.c.l.b16 %v235
  %v270 = vpack.c.b16 %v267, %v266
  %v271 = vpack.c.b16 %v269, %v268
  %v273 = vsel %vm172, %v270, 0
  %v276 = vsel %vm172, %v271, 0
  %278 = vmatprep.subr.bf16.mxu0 0
  %279 = vmatpush1.bf16.msra.mxu0 0
  %280 = vmatprep.subr.bf16.mxu0 0
  %281 = vmatpush1.bf16.msra.mxu0 0
  %282 = vmatprep.subr.bf16.mxu0 0
  %283 = vmatpush1.bf16.msra.mxu0 0
  %284 = vmatprep.subr.bf16.mxu0 0
  %285 = vmatpush1.bf16.msra.mxu0 0
  %286 = vmatprep.subr.bf16.mxu0 0
  %287 = vmatpush1.bf16.msra.mxu0 0
  %288 = vmatprep.subr.bf16.mxu0 0
  %289 = vmatpush1.bf16.msra.mxu0 0
  %290 = vmatprep.subr.bf16.mxu0 0
  %291 = vmatpush1.bf16.msra.mxu0 %v237
  %292 = vmatprep.subr.bf16.mxu0 0
  %293 = vmatpush1.bf16.msra.mxu0 %v236
  %294 = vmatprep.subr.bf16.mxu0 0
  %295 = vmatpush2.bf16.msra.mxu0 0
  %296 = vmatprep.subr.bf16.mxu0 0
  %297 = vmatpush2.bf16.msra.mxu0 0
  %298 = vmatprep.subr.bf16.mxu0 0
  %299 = vmatpush2.bf16.msra.mxu0 0
  %300 = vmatprep.subr.bf16.mxu0 0
  %301 = vmatpush2.bf16.msra.mxu0 0
  %302 = vmatprep.subr.bf16.mxu0 0
  %303 = vmatpush2.bf16.msra.mxu0 0
  %304 = vmatprep.subr.bf16.mxu0 0
  %305 = vmatpush2.bf16.msra.mxu0 0
  %306 = vmatprep.subr.bf16.mxu0 0
  %307 = vmatpush2.bf16.msra.mxu0 0
  %308 = vmatprep.subr.bf16.mxu0 0
  %309 = vmatpush2.bf16.msra.mxu0 0
  %310 = vmatprep.mubr.bf16.mxu0 0
  %311 = vmatmul.mubr.bf16.gmra.mxu0 %v273
  %v312 = vpop.f32.mrf.mxu0
  %v313 = vadd.f32 %v245, %v312
  %v314 = vpop.f32.mrf.mxu0
  %v315 = vpop.f32.mrf.mxu0
  %v316 = vadd.f32 %v250, %v315
  %v317 = vpop.f32.mrf.mxu0
  %318 = vmatprep.mubr.bf16.mxu0 0
  %319 = vmatmul.mubr.bf16.gmra.mxu0 %v276
  %v320 = vpop.f32.mrf.mxu0
  %v321 = vadd.f32 %v255, %v320
  %v322 = vpop.f32.mrf.mxu0
  %v323 = vpop.f32.mrf.mxu0
  %v324 = vadd.f32 %v260, %v323
  %v325 = vpop.f32.mrf.mxu0
  %326 = vdwg.mxu0
  %v327 = vmax.f32 %v313, 0.0
  %v328 = vmax.f32 %v316, 0.0
  %v329 = vmax.f32 %v321, 0.0
  %v330 = vmax.f32 %v324, 0.0
  %331 = vst [vmem:[#allocation2 + $0x20] sm:$0xff] %v327
  %332 = vst [vmem:[#allocation2 + $0x28] sm:$0xff] %v328
  %333 = vst [vmem:[#allocation2 + $0x30] sm:$0xff] %v329
  %334 = vst [vmem:[#allocation2 + $0x38] sm:$0xff] %v330
  %v335 = vld [vmem:[%s2] sm:$0xf]
  %v336 = vld [vmem:[%s2 + $0x4] sm:$0xf]
  %v337 = vld [vmem:[#allocation2 + $0x20] sm:$0xff]
  %v338 = vld [vmem:[#allocation2 + $0x28] sm:$0xff]
  %v339 = vld [vmem:[#allocation2 + $0x30] sm:$0xff]
  %v340 = vld [vmem:[#allocation2 + $0x38] sm:$0xff]
  %v341 = vpack.c.bf16 %v338, %v337
  %v342 = vpack.c.bf16 %v340, %v339
  %v345 = vunpack.c.l.b16 %v335
  %v346 = vunpack.c.l.b16 %v336
  %v347 = vpack.c.b16 %v346, %v345
  %vm349 = vcmask 130048
  %v351 = vsel %vm349, %v341, 0
  %v354 = vsel %vm349, %v342, 0
  %356 = vmatprep.subr.bf16.mxu0 0
  %357 = vmatpush1.bf16.msra.mxu0 0
  %358 = vmatprep.subr.bf16.mxu0 0
  %359 = vmatpush1.bf16.msra.mxu0 0
  %360 = vmatprep.subr.bf16.mxu0 0
  %361 = vmatpush1.bf16.msra.mxu0 0
  %362 = vmatprep.subr.bf16.mxu0 0
  %363 = vmatpush1.bf16.msra.mxu0 0
  %364 = vmatprep.subr.bf16.mxu0 0
  %365 = vmatpush1.bf16.msra.mxu0 0
  %366 = vmatprep.subr.bf16.mxu0 0
  %367 = vmatpush1.bf16.msra.mxu0 0
  %368 = vmatprep.subr.bf16.mxu0 0
  %369 = vmatpush1.bf16.msra.mxu0 0
  %370 = vmatprep.subr.bf16.mxu0 0
  %371 = vmatpush1.bf16.msra.mxu0 %v347
  %372 = vmatprep.subr.bf16.mxu0 0
  %373 = vmatpush2.bf16.msra.mxu0 0
  %374 = vmatprep.subr.bf16.mxu0 0
  %375 = vmatpush2.bf16.msra.mxu0 0
  %376 = vmatprep.subr.bf16.mxu0 0
  %377 = vmatpush2.bf16.msra.mxu0 0
  %378 = vmatprep.subr.bf16.mxu0 0
  %379 = vmatpush2.bf16.msra.mxu0 0
  %380 = vmatprep.subr.bf16.mxu0 0
  %381 = vmatpush2.bf16.msra.mxu0 0
  %382 = vmatprep.subr.bf16.mxu0 0
  %383 = vmatpush2.bf16.msra.mxu0 0
  %384 = vmatprep.subr.bf16.mxu0 0
  %385 = vmatpush2.bf16.msra.mxu0 0
  %386 = vmatprep.subr.bf16.mxu0 0
  %387 = vmatpush2.bf16.msra.mxu0 0
  %388 = vmatprep.mubr.bf16.mxu0 0
  %389 = vmatmul.mubr.bf16.gmra.mxu0 %v351
  %v390 = vpop.f32.mrf.mxu0
  %v391 = vadd.f32 0.0, %v390
  %v392 = vpop.f32.mrf.mxu0
  %v393 = vpop.f32.mrf.mxu0
  %v394 = vadd.f32 0.0, %v393
  %v395 = vpop.f32.mrf.mxu0
  %396 = vmatprep.mubr.bf16.mxu0 0
  %397 = vmatmul.mubr.bf16.gmra.mxu0 %v354
  %v398 = vpop.f32.mrf.mxu0
  %v399 = vadd.f32 0.0, %v398
  %v400 = vpop.f32.mrf.mxu0
  %v401 = vpop.f32.mrf.mxu0
  %v402 = vadd.f32 0.0, %v401
  %v403 = vpop.f32.mrf.mxu0
  %404 = vdwg.mxu0
  %405 = vst.msk [vmem:[#allocation2] sm:$0xff] %vm349, %v391
  %406 = vst.msk [vmem:[#allocation2 + $0x8] sm:$0xff] %vm349, %v394
  %407 = vst.msk [vmem:[#allocation2 + $0x10] sm:$0xff] %vm349, %v399
  %408 = vst.msk [vmem:[#allocation2 + $0x18] sm:$0xff] %vm349, %v402
  %v409 = vld [vmem:[#allocation2 + $0x20] sm:$0xff]
  %v410 = vld [vmem:[#allocation2 + $0x28] sm:$0xff]
  %v411 = vld [vmem:[#allocation2 + $0x30] sm:$0xff]
  %v412 = vld [vmem:[#allocation2 + $0x38] sm:$0xff]
  %v413 = vpack.c.bf16 %v410, %v409
  %v414 = vpack.c.bf16 %v412, %v411
  %417 = vrot.lane.b32.xlu0 %v413, 112
  %v418 = vpop.permute.xlu0 %417
  %419 = vrot.lane.b32.xlu0 %v414, 112
  %v420 = vpop.permute.xlu0 %419
  %v422 = vsel %vm349, %v418, 0
  %v425 = vsel %vm349, %v420, 0
  %427 = vmatprep.subr.bf16.mxu0 0
  %428 = vmatpush1.bf16.msra.mxu0 0
  %429 = vmatprep.subr.bf16.mxu0 0
  %430 = vmatpush1.bf16.msra.mxu0 0
  %431 = vmatprep.subr.bf16.mxu0 0
  %432 = vmatpush1.bf16.msra.mxu0 0
  %433 = vmatprep.subr.bf16.mxu0 0
  %434 = vmatpush1.bf16.msra.mxu0 0
  %435 = vmatprep.subr.bf16.mxu0 0
  %436 = vmatpush1.bf16.msra.mxu0 0
  %437 = vmatprep.subr.bf16.mxu0 0
  %438 = vmatpush1.bf16.msra.mxu0 0
  %439 = vmatprep.subr.bf16.mxu0 0
  %440 = vmatpush1.bf16.msra.mxu0 0
  %441 = vmatprep.subr.bf16.mxu0 0
  %442 = vmatpush1.bf16.msra.mxu0 %v347
  %443 = vmatprep.subr.bf16.mxu0 0
  %444 = vmatpush2.bf16.msra.mxu0 0
  %445 = vmatprep.subr.bf16.mxu0 0
  %446 = vmatpush2.bf16.msra.mxu0 0
  %447 = vmatprep.subr.bf16.mxu0 0
  %448 = vmatpush2.bf16.msra.mxu0 0
  %449 = vmatprep.subr.bf16.mxu0 0
  %450 = vmatpush2.bf16.msra.mxu0 0
  %451 = vmatprep.subr.bf16.mxu0 0
  %452 = vmatpush2.bf16.msra.mxu0 0
  %453 = vmatprep.subr.bf16.mxu0 0
  %454 = vmatpush2.bf16.msra.mxu0 0
  %455 = vmatprep.subr.bf16.mxu0 0
  %456 = vmatpush2.bf16.msra.mxu0 0
  %457 = vmatprep.subr.bf16.mxu0 0
  %458 = vmatpush2.bf16.msra.mxu0 0
  %459 = vmatprep.mubr.bf16.mxu0 0
  %460 = vmatmul.mubr.bf16.gmra.mxu0 %v422
  %v461 = vpop.f32.mrf.mxu0
  %v462 = vadd.f32 0.0, %v461
  %v463 = vpop.f32.mrf.mxu0
  %v464 = vpop.f32.mrf.mxu0
  %v465 = vadd.f32 0.0, %v464
  %v466 = vpop.f32.mrf.mxu0
  %467 = vmatprep.mubr.bf16.mxu0 0
  %468 = vmatmul.mubr.bf16.gmra.mxu0 %v425
  %v469 = vpop.f32.mrf.mxu0
  %v470 = vadd.f32 0.0, %v469
  %v471 = vpop.f32.mrf.mxu0
  %v472 = vpop.f32.mrf.mxu0
  %v473 = vadd.f32 0.0, %v472
  %v474 = vpop.f32.mrf.mxu0
  %475 = vdwg.mxu0
  %480 = vrot.lane.b32.xlu0 %v462, 16
  %v481 = vpop.permute.xlu0 %480
  %482 = vrot.lane.b32.xlu0 %v465, 16
  %v483 = vpop.permute.xlu0 %482
  %484 = vrot.lane.b32.xlu0 %v470, 16
  %v485 = vpop.permute.xlu0 %484
  %486 = vrot.lane.b32.xlu0 %v473, 16
  %v487 = vpop.permute.xlu0 %486
  %vm492 = vcmask 261248
  %493 = vst.msk [vmem:[#allocation2] sm:$0xff] %vm492, %v481
  %494 = vst.msk [vmem:[#allocation2 + $0x8] sm:$0xff] %vm492, %v483
  %495 = vst.msk [vmem:[#allocation2 + $0x10] sm:$0xff] %vm492, %v485
  %496 = vst.msk [vmem:[#allocation2 + $0x18] sm:$0xff] %vm492, %v487
  %v497 = vld [vmem:[#allocation2 + $0x20] sm:$0xff]
  %v498 = vld [vmem:[#allocation2 + $0x28] sm:$0xff]
  %v499 = vld [vmem:[#allocation2 + $0x30] sm:$0xff]
  %v500 = vld [vmem:[#allocation2 + $0x38] sm:$0xff]
  %v501 = vpack.c.bf16 %v498, %v497
  %v502 = vpack.c.bf16 %v500, %v499
  %505 = vrot.lane.b32.xlu0 %v501, 96
  %v506 = vpop.permute.xlu0 %505
  %507 = vrot.lane.b32.xlu0 %v502, 96
  %v508 = vpop.permute.xlu0 %507
  %v510 = vsel %vm349, %v506, 0
  %v513 = vsel %vm349, %v508, 0
  %515 = vmatprep.subr.bf16.mxu0 0
  %516 = vmatpush1.bf16.msra.mxu0 0
  %517 = vmatprep.subr.bf16.mxu0 0
  %518 = vmatpush1.bf16.msra.mxu0 0
  %519 = vmatprep.subr.bf16.mxu0 0
  %520 = vmatpush1.bf16.msra.mxu0 0
  %521 = vmatprep.subr.bf16.mxu0 0
  %522 = vmatpush1.bf16.msra.mxu0 0
  %523 = vmatprep.subr.bf16.mxu0 0
  %524 = vmatpush1.bf16.msra.mxu0 0
  %525 = vmatprep.subr.bf16.mxu0 0
  %526 = vmatpush1.bf16.msra.mxu0 0
  %527 = vmatprep.subr.bf16.mxu0 0
  %528 = vmatpush1.bf16.msra.mxu0 0
  %529 = vmatprep.subr.bf16.mxu0 0
  %530 = vmatpush1.bf16.msra.mxu0 %v347
  %531 = vmatprep.subr.bf16.mxu0 0
  %532 = vmatpush2.bf16.msra.mxu0 0
  %533 = vmatprep.subr.bf16.mxu0 0
  %534 = vmatpush2.bf16.msra.mxu0 0
  %535 = vmatprep.subr.bf16.mxu0 0
  %536 = vmatpush2.bf16.msra.mxu0 0
  %537 = vmatprep.subr.bf16.mxu0 0
  %538 = vmatpush2.bf16.msra.mxu0 0
  %539 = vmatprep.subr.bf16.mxu0 0
  %540 = vmatpush2.bf16.msra.mxu0 0
  %541 = vmatprep.subr.bf16.mxu0 0
  %542 = vmatpush2.bf16.msra.mxu0 0
  %543 = vmatprep.subr.bf16.mxu0 0
  %544 = vmatpush2.bf16.msra.mxu0 0
  %545 = vmatprep.subr.bf16.mxu0 0
  %546 = vmatpush2.bf16.msra.mxu0 0
  %547 = vmatprep.mubr.bf16.mxu0 0
  %548 = vmatmul.mubr.bf16.gmra.mxu0 %v510
  %v549 = vpop.f32.mrf.mxu0
  %v550 = vadd.f32 0.0, %v549
  %v551 = vpop.f32.mrf.mxu0
  %v552 = vpop.f32.mrf.mxu0
  %v553 = vadd.f32 0.0, %v552
  %v554 = vpop.f32.mrf.mxu0
  %555 = vmatprep.mubr.bf16.mxu0 0
  %556 = vmatmul.mubr.bf16.gmra.mxu0 %v513
  %v557 = vpop.f32.mrf.mxu0
  %v558 = vadd.f32 0.0, %v557
  %v559 = vpop.f32.mrf.mxu0
  %v560 = vpop.f32.mrf.mxu0
  %v561 = vadd.f32 0.0, %v560
  %v562 = vpop.f32.mrf.mxu0
  %563 = vdwg.mxu0
  %568 = vrot.lane.b32.xlu0 %v550, 32
  %v569 = vpop.permute.xlu0 %568
  %570 = vrot.lane.b32.xlu0 %v553, 32
  %v571 = vpop.permute.xlu0 %570
  %572 = vrot.lane.b32.xlu0 %v558, 32
  %v573 = vpop.permute.xlu0 %572
  %574 = vrot.lane.b32.xlu0 %v561, 32
  %v575 = vpop.permute.xlu0 %574
  %vm580 = vcmask 392448
  %581 = vst.msk [vmem:[#allocation2] sm:$0xff] %vm580, %v569
  %582 = vst.msk [vmem:[#allocation2 + $0x8] sm:$0xff] %vm580, %v571
  %583 = vst.msk [vmem:[#allocation2 + $0x10] sm:$0xff] %vm580, %v573
  %584 = vst.msk [vmem:[#allocation2 + $0x18] sm:$0xff] %vm580, %v575
  %v585 = vld [vmem:[#allocation2 + $0x20] sm:$0xff]
  %v586 = vld [vmem:[#allocation2 + $0x28] sm:$0xff]
  %v587 = vld [vmem:[#allocation2 + $0x30] sm:$0xff]
  %v588 = vld [vmem:[#allocation2 + $0x38] sm:$0xff]
  %v589 = vpack.c.bf16 %v586, %v585
  %v590 = vpack.c.bf16 %v588, %v587
  %593 = vrot.lane.b32.xlu0 %v589, 80
  %v594 = vpop.permute.xlu0 %593
  %595 = vrot.lane.b32.xlu0 %v590, 80
  %v596 = vpop.permute.xlu0 %595
  %v598 = vsel %vm349, %v594, 0
  %v601 = vsel %vm349, %v596, 0
  %603 = vmatprep.subr.bf16.mxu0 0
  %604 = vmatpush1.bf16.msra.mxu0 0
  %605 = vmatprep.subr.bf16.mxu0 0
  %606 = vmatpush1.bf16.msra.mxu0 0
  %607 = vmatprep.subr.bf16.mxu0 0
  %608 = vmatpush1.bf16.msra.mxu0 0
  %609 = vmatprep.subr.bf16.mxu0 0
  %610 = vmatpush1.bf16.msra.mxu0 0
  %611 = vmatprep.subr.bf16.mxu0 0
  %612 = vmatpush1.bf16.msra.mxu0 0
  %613 = vmatprep.subr.bf16.mxu0 0
  %614 = vmatpush1.bf16.msra.mxu0 0
  %615 = vmatprep.subr.bf16.mxu0 0
  %616 = vmatpush1.bf16.msra.mxu0 0
  %617 = vmatprep.subr.bf16.mxu0 0
  %618 = vmatpush1.bf16.msra.mxu0 %v347
  %619 = vmatprep.subr.bf16.mxu0 0
  %620 = vmatpush2.bf16.msra.mxu0 0
  %621 = vmatprep.subr.bf16.mxu0 0
  %622 = vmatpush2.bf16.msra.mxu0 0
  %623 = vmatprep.subr.bf16.mxu0 0
  %624 = vmatpush2.bf16.msra.mxu0 0
  %625 = vmatprep.subr.bf16.mxu0 0
  %626 = vmatpush2.bf16.msra.mxu0 0
  %627 = vmatprep.subr.bf16.mxu0 0
  %628 = vmatpush2.bf16.msra.mxu0 0
  %629 = vmatprep.subr.bf16.mxu0 0
  %630 = vmatpush2.bf16.msra.mxu0 0
  %631 = vmatprep.subr.bf16.mxu0 0
  %632 = vmatpush2.bf16.msra.mxu0 0
  %633 = vmatprep.subr.bf16.mxu0 0
  %634 = vmatpush2.bf16.msra.mxu0 0
  %635 = vmatprep.mubr.bf16.mxu0 0
  %636 = vmatmul.mubr.bf16.gmra.mxu0 %v598
  %v637 = vpop.f32.mrf.mxu0
  %v638 = vadd.f32 0.0, %v637
  %v639 = vpop.f32.mrf.mxu0
  %v640 = vpop.f32.mrf.mxu0
  %v641 = vadd.f32 0.0, %v640
  %v642 = vpop.f32.mrf.mxu0
  %643 = vmatprep.mubr.bf16.mxu0 0
  %644 = vmatmul.mubr.bf16.gmra.mxu0 %v601
  %v645 = vpop.f32.mrf.mxu0
  %v646 = vadd.f32 0.0, %v645
  %v647 = vpop.f32.mrf.mxu0
  %v648 = vpop.f32.mrf.mxu0
  %v649 = vadd.f32 0.0, %v648
  %v650 = vpop.f32.mrf.mxu0
  %651 = vdwg.mxu0
  %656 = vrot.lane.b32.xlu0 %v638, 48
  %v657 = vpop.permute.xlu0 %656
  %658 = vrot.lane.b32.xlu0 %v641, 48
  %v659 = vpop.permute.xlu0 %658
  %660 = vrot.lane.b32.xlu0 %v646, 48
  %v661 = vpop.permute.xlu0 %660
  %662 = vrot.lane.b32.xlu0 %v649, 48
  %v663 = vpop.permute.xlu0 %662
  %vm668 = vcmask 523648
  %669 = vst.msk [vmem:[#allocation2] sm:$0xff] %vm668, %v657
  %670 = vst.msk [vmem:[#allocation2 + $0x8] sm:$0xff] %vm668, %v659
  %671 = vst.msk [vmem:[#allocation2 + $0x10] sm:$0xff] %vm668, %v661
  %672 = vst.msk [vmem:[#allocation2 + $0x18] sm:$0xff] %vm668, %v663
  %v673 = vld [vmem:[#allocation2 + $0x20] sm:$0xff]
  %v674 = vld [vmem:[#allocation2 + $0x28] sm:$0xff]
  %v675 = vld [vmem:[#allocation2 + $0x30] sm:$0xff]
  %v676 = vld [vmem:[#allocation2 + $0x38] sm:$0xff]
  %v677 = vpack.c.bf16 %v674, %v673
  %v678 = vpack.c.bf16 %v676, %v675
  %681 = vrot.lane.b32.xlu0 %v677, 64
  %v682 = vpop.permute.xlu0 %681
  %683 = vrot.lane.b32.xlu0 %v678, 64
  %v684 = vpop.permute.xlu0 %683
  %v686 = vsel %vm349, %v682, 0
  %v689 = vsel %vm349, %v684, 0
  %691 = vmatprep.subr.bf16.mxu0 0
  %692 = vmatpush1.bf16.msra.mxu0 0
  %693 = vmatprep.subr.bf16.mxu0 0
  %694 = vmatpush1.bf16.msra.mxu0 0
  %695 = vmatprep.subr.bf16.mxu0 0
  %696 = vmatpush1.bf16.msra.mxu0 0
  %697 = vmatprep.subr.bf16.mxu0 0
  %698 = vmatpush1.bf16.msra.mxu0 0
  %699 = vmatprep.subr.bf16.mxu0 0
  %700 = vmatpush1.bf16.msra.mxu0 0
  %701 = vmatprep.subr.bf16.mxu0 0
  %702 = vmatpush1.bf16.msra.mxu0 0
  %703 = vmatprep.subr.bf16.mxu0 0
  %704 = vmatpush1.bf16.msra.mxu0 0
  %705 = vmatprep.subr.bf16.mxu0 0
  %706 = vmatpush1.bf16.msra.mxu0 %v347
  %707 = vmatprep.subr.bf16.mxu0 0
  %708 = vmatpush2.bf16.msra.mxu0 0
  %709 = vmatprep.subr.bf16.mxu0 0
  %710 = vmatpush2.bf16.msra.mxu0 0
  %711 = vmatprep.subr.bf16.mxu0 0
  %712 = vmatpush2.bf16.msra.mxu0 0
  %713 = vmatprep.subr.bf16.mxu0 0
  %714 = vmatpush2.bf16.msra.mxu0 0
  %715 = vmatprep.subr.bf16.mxu0 0
  %716 = vmatpush2.bf16.msra.mxu0 0
  %717 = vmatprep.subr.bf16.mxu0 0
  %718 = vmatpush2.bf16.msra.mxu0 0
  %719 = vmatprep.subr.bf16.mxu0 0
  %720 = vmatpush2.bf16.msra.mxu0 0
  %721 = vmatprep.subr.bf16.mxu0 0
  %722 = vmatpush2.bf16.msra.mxu0 0
  %723 = vmatprep.mubr.bf16.mxu0 0
  %724 = vmatmul.mubr.bf16.gmra.mxu0 %v686
  %v725 = vpop.f32.mrf.mxu0
  %v726 = vadd.f32 0.0, %v725
  %v727 = vpop.f32.mrf.mxu0
  %v728 = vpop.f32.mrf.mxu0
  %v729 = vadd.f32 0.0, %v728
  %v730 = vpop.f32.mrf.mxu0
  %731 = vmatprep.mubr.bf16.mxu0 0
  %732 = vmatmul.mubr.bf16.gmra.mxu0 %v689
  %v733 = vpop.f32.mrf.mxu0
  %v734 = vadd.f32 0.0, %v733
  %v735 = vpop.f32.mrf.mxu0
  %v736 = vpop.f32.mrf.mxu0
  %v737 = vadd.f32 0.0, %v736
  %v738 = vpop.f32.mrf.mxu0
  %739 = vdwg.mxu0
  %744 = vrot.lane.b32.xlu0 %v726, 64
  %v745 = vpop.permute.xlu0 %744
  %746 = vrot.lane.b32.xlu0 %v729, 64
  %v747 = vpop.permute.xlu0 %746
  %748 = vrot.lane.b32.xlu0 %v734, 64
  %v749 = vpop.permute.xlu0 %748
  %750 = vrot.lane.b32.xlu0 %v737, 64
  %v751 = vpop.permute.xlu0 %750
  %vm756 = vcmask 654848
  %757 = vst.msk [vmem:[#allocation2] sm:$0xff] %vm756, %v745
  %758 = vst.msk [vmem:[#allocation2 + $0x8] sm:$0xff] %vm756, %v747
  %759 = vst.msk [vmem:[#allocation2 + $0x10] sm:$0xff] %vm756, %v749
  %760 = vst.msk [vmem:[#allocation2 + $0x18] sm:$0xff] %vm756, %v751
  %v761 = vld [vmem:[#allocation2 + $0x20] sm:$0xff]
  %v762 = vld [vmem:[#allocation2 + $0x28] sm:$0xff]
  %v763 = vld [vmem:[#allocation2 + $0x30] sm:$0xff]
  %v764 = vld [vmem:[#allocation2 + $0x38] sm:$0xff]
  %v765 = vpack.c.bf16 %v762, %v761
  %v766 = vpack.c.bf16 %v764, %v763
  %769 = vrot.lane.b32.xlu0 %v765, 48
  %v770 = vpop.permute.xlu0 %769
  %771 = vrot.lane.b32.xlu0 %v766, 48
  %v772 = vpop.permute.xlu0 %771
  %v774 = vsel %vm349, %v770, 0
  %v777 = vsel %vm349, %v772, 0
  %779 = vmatprep.subr.bf16.mxu0 0
  %780 = vmatpush1.bf16.msra.mxu0 0
  %781 = vmatprep.subr.bf16.mxu0 0
  %782 = vmatpush1.bf16.msra.mxu0 0
  %783 = vmatprep.subr.bf16.mxu0 0
  %784 = vmatpush1.bf16.msra.mxu0 0
  %785 = vmatprep.subr.bf16.mxu0 0
  %786 = vmatpush1.bf16.msra.mxu0 0
  %787 = vmatprep.subr.bf16.mxu0 0
  %788 = vmatpush1.bf16.msra.mxu0 0
  %789 = vmatprep.subr.bf16.mxu0 0
  %790 = vmatpush1.bf16.msra.mxu0 0
  %791 = vmatprep.subr.bf16.mxu0 0
  %792 = vmatpush1.bf16.msra.mxu0 0
  %793 = vmatprep.subr.bf16.mxu0 0
  %794 = vmatpush1.bf16.msra.mxu0 %v347
  %795 = vmatprep.subr.bf16.mxu0 0
  %796 = vmatpush2.bf16.msra.mxu0 0
  %797 = vmatprep.subr.bf16.mxu0 0
  %798 = vmatpush2.bf16.msra.mxu0 0
  %799 = vmatprep.subr.bf16.mxu0 0
  %800 = vmatpush2.bf16.msra.mxu0 0
  %801 = vmatprep.subr.bf16.mxu0 0
  %802 = vmatpush2.bf16.msra.mxu0 0
  %803 = vmatprep.subr.bf16.mxu0 0
  %804 = vmatpush2.bf16.msra.mxu0 0
  %805 = vmatprep.subr.bf16.mxu0 0
  %806 = vmatpush2.bf16.msra.mxu0 0
  %807 = vmatprep.subr.bf16.mxu0 0
  %808 = vmatpush2.bf16.msra.mxu0 0
  %809 = vmatprep.subr.bf16.mxu0 0
  %810 = vmatpush2.bf16.msra.mxu0 0
  %811 = vmatprep.mubr.bf16.mxu0 0
  %812 = vmatmul.mubr.bf16.gmra.mxu0 %v774
  %v813 = vpop.f32.mrf.mxu0
  %v814 = vadd.f32 0.0, %v813
  %v815 = vpop.f32.mrf.mxu0
  %v816 = vpop.f32.mrf.mxu0
  %v817 = vadd.f32 0.0, %v816
  %v818 = vpop.f32.mrf.mxu0
  %819 = vmatprep.mubr.bf16.mxu0 0
  %820 = vmatmul.mubr.bf16.gmra.mxu0 %v777
  %v821 = vpop.f32.mrf.mxu0
  %v822 = vadd.f32 0.0, %v821
  %v823 = vpop.f32.mrf.mxu0
  %v824 = vpop.f32.mrf.mxu0
  %v825 = vadd.f32 0.0, %v824
  %v826 = vpop.f32.mrf.mxu0
  %827 = vdwg.mxu0
  %832 = vrot.lane.b32.xlu0 %v814, 80
  %v833 = vpop.permute.xlu0 %832
  %834 = vrot.lane.b32.xlu0 %v817, 80
  %v835 = vpop.permute.xlu0 %834
  %836 = vrot.lane.b32.xlu0 %v822, 80
  %v837 = vpop.permute.xlu0 %836
  %838 = vrot.lane.b32.xlu0 %v825, 80
  %v839 = vpop.permute.xlu0 %838
  %vm844 = vcmask 786048
  %845 = vst.msk [vmem:[#allocation2] sm:$0xff] %vm844, %v833
  %846 = vst.msk [vmem:[#allocation2 + $0x8] sm:$0xff] %vm844, %v835
  %847 = vst.msk [vmem:[#allocation2 + $0x10] sm:$0xff] %vm844, %v837
  %848 = vst.msk [vmem:[#allocation2 + $0x18] sm:$0xff] %vm844, %v839
  %v849 = vld [vmem:[#allocation2 + $0x20] sm:$0xff]
  %v850 = vld [vmem:[#allocation2 + $0x28] sm:$0xff]
  %v851 = vld [vmem:[#allocation2 + $0x30] sm:$0xff]
  %v852 = vld [vmem:[#allocation2 + $0x38] sm:$0xff]
  %v853 = vpack.c.bf16 %v850, %v849
  %v854 = vpack.c.bf16 %v852, %v851
  %857 = vrot.lane.b32.xlu0 %v853, 32
  %v858 = vpop.permute.xlu0 %857
  %859 = vrot.lane.b32.xlu0 %v854, 32
  %v860 = vpop.permute.xlu0 %859
  %v862 = vsel %vm349, %v858, 0
  %v865 = vsel %vm349, %v860, 0
  %867 = vmatprep.subr.bf16.mxu0 0
  %868 = vmatpush1.bf16.msra.mxu0 0
  %869 = vmatprep.subr.bf16.mxu0 0
  %870 = vmatpush1.bf16.msra.mxu0 0
  %871 = vmatprep.subr.bf16.mxu0 0
  %872 = vmatpush1.bf16.msra.mxu0 0
  %873 = vmatprep.subr.bf16.mxu0 0
  %874 = vmatpush1.bf16.msra.mxu0 0
  %875 = vmatprep.subr.bf16.mxu0 0
  %876 = vmatpush1.bf16.msra.mxu0 0
  %877 = vmatprep.subr.bf16.mxu0 0
  %878 = vmatpush1.bf16.msra.mxu0 0
  %879 = vmatprep.subr.bf16.mxu0 0
  %880 = vmatpush1.bf16.msra.mxu0 0
  %881 = vmatprep.subr.bf16.mxu0 0
  %882 = vmatpush1.bf16.msra.mxu0 %v347
  %883 = vmatprep.subr.bf16.mxu0 0
  %884 = vmatpush2.bf16.msra.mxu0 0
  %885 = vmatprep.subr.bf16.mxu0 0
  %886 = vmatpush2.bf16.msra.mxu0 0
  %887 = vmatprep.subr.bf16.mxu0 0
  %888 = vmatpush2.bf16.msra.mxu0 0
  %889 = vmatprep.subr.bf16.mxu0 0
  %890 = vmatpush2.bf16.msra.mxu0 0
  %891 = vmatprep.subr.bf16.mxu0 0
  %892 = vmatpush2.bf16.msra.mxu0 0
  %893 = vmatprep.subr.bf16.mxu0 0
  %894 = vmatpush2.bf16.msra.mxu0 0
  %895 = vmatprep.subr.bf16.mxu0 0
  %896 = vmatpush2.bf16.msra.mxu0 0
  %897 = vmatprep.subr.bf16.mxu0 0
  %898 = vmatpush2.bf16.msra.mxu0 0
  %899 = vmatprep.mubr.bf16.mxu0 0
  %900 = vmatmul.mubr.bf16.gmra.mxu0 %v862
  %v901 = vpop.f32.mrf.mxu0
  %v902 = vadd.f32 0.0, %v901
  %v903 = vpop.f32.mrf.mxu0
  %v904 = vpop.f32.mrf.mxu0
  %v905 = vadd.f32 0.0, %v904
  %v906 = vpop.f32.mrf.mxu0
  %907 = vmatprep.mubr.bf16.mxu0 0
  %908 = vmatmul.mubr.bf16.gmra.mxu0 %v865
  %v909 = vpop.f32.mrf.mxu0
  %v910 = vadd.f32 0.0, %v909
  %v911 = vpop.f32.mrf.mxu0
  %v912 = vpop.f32.mrf.mxu0
  %v913 = vadd.f32 0.0, %v912
  %v914 = vpop.f32.mrf.mxu0
  %915 = vdwg.mxu0
  %920 = vrot.lane.b32.xlu0 %v902, 96
  %v921 = vpop.permute.xlu0 %920
  %922 = vrot.lane.b32.xlu0 %v905, 96
  %v923 = vpop.permute.xlu0 %922
  %924 = vrot.lane.b32.xlu0 %v910, 96
  %v925 = vpop.permute.xlu0 %924
  %926 = vrot.lane.b32.xlu0 %v913, 96
  %v927 = vpop.permute.xlu0 %926
  %vm932 = vcmask 917248
  %933 = vst.msk [vmem:[#allocation2] sm:$0xff] %vm932, %v921
  %934 = vst.msk [vmem:[#allocation2 + $0x8] sm:$0xff] %vm932, %v923
  %935 = vst.msk [vmem:[#allocation2 + $0x10] sm:$0xff] %vm932, %v925
  %936 = vst.msk [vmem:[#allocation2 + $0x18] sm:$0xff] %vm932, %v927
  %v937 = vld [vmem:[#allocation2 + $0x20] sm:$0xff]
  %v938 = vld [vmem:[#allocation2 + $0x28] sm:$0xff]
  %v939 = vld [vmem:[#allocation2 + $0x30] sm:$0xff]
  %v940 = vld [vmem:[#allocation2 + $0x38] sm:$0xff]
  %v941 = vpack.c.bf16 %v938, %v937
  %v942 = vpack.c.bf16 %v940, %v939
  %945 = vrot.lane.b32.xlu0 %v941, 16
  %v946 = vpop.permute.xlu0 %945
  %947 = vrot.lane.b32.xlu0 %v942, 16
  %v948 = vpop.permute.xlu0 %947
  %v950 = vsel %vm349, %v946, 0
  %v953 = vsel %vm349, %v948, 0
  %955 = vmatprep.subr.bf16.mxu0 0
  %956 = vmatpush1.bf16.msra.mxu0 0
  %957 = vmatprep.subr.bf16.mxu0 0
  %958 = vmatpush1.bf16.msra.mxu0 0
  %959 = vmatprep.subr.bf16.mxu0 0
  %960 = vmatpush1.bf16.msra.mxu0 0
  %961 = vmatprep.subr.bf16.mxu0 0
  %962 = vmatpush1.bf16.msra.mxu0 0
  %963 = vmatprep.subr.bf16.mxu0 0
  %964 = vmatpush1.bf16.msra.mxu0 0
  %965 = vmatprep.subr.bf16.mxu0 0
  %966 = vmatpush1.bf16.msra.mxu0 0
  %967 = vmatprep.subr.bf16.mxu0 0
  %968 = vmatpush1.bf16.msra.mxu0 0
  %969 = vmatprep.subr.bf16.mxu0 0
  %970 = vmatpush1.bf16.msra.mxu0 %v347
  %971 = vmatprep.subr.bf16.mxu0 0
  %972 = vmatpush2.bf16.msra.mxu0 0
  %973 = vmatprep.subr.bf16.mxu0 0
  %974 = vmatpush2.bf16.msra.mxu0 0
  %975 = vmatprep.subr.bf16.mxu0 0
  %976 = vmatpush2.bf16.msra.mxu0 0
  %977 = vmatprep.subr.bf16.mxu0 0
  %978 = vmatpush2.bf16.msra.mxu0 0
  %979 = vmatprep.subr.bf16.mxu0 0
  %980 = vmatpush2.bf16.msra.mxu0 0
  %981 = vmatprep.subr.bf16.mxu0 0
  %982 = vmatpush2.bf16.msra.mxu0 0
  %983 = vmatprep.subr.bf16.mxu0 0
  %984 = vmatpush2.bf16.msra.mxu0 0
  %985 = vmatprep.subr.bf16.mxu0 0
  %986 = vmatpush2.bf16.msra.mxu0 0
  %987 = vmatprep.mubr.bf16.mxu0 0
  %988 = vmatmul.mubr.bf16.gmra.mxu0 %v950
  %v989 = vpop.f32.mrf.mxu0
  %v990 = vadd.f32 0.0, %v989
  %v991 = vpop.f32.mrf.mxu0
  %v992 = vpop.f32.mrf.mxu0
  %v993 = vadd.f32 0.0, %v992
  %v994 = vpop.f32.mrf.mxu0
  %995 = vmatprep.mubr.bf16.mxu0 0
  %996 = vmatmul.mubr.bf16.gmra.mxu0 %v953
  %v997 = vpop.f32.mrf.mxu0
  %v998 = vadd.f32 0.0, %v997
  %v999 = vpop.f32.mrf.mxu0
  %v1000 = vpop.f32.mrf.mxu0
  %v1001 = vadd.f32 0.0, %v1000
  %v1002 = vpop.f32.mrf.mxu0
  %1003 = vdwg.mxu0
  %1008 = vrot.lane.b32.xlu0 %v990, 112
  %v1009 = vpop.permute.xlu0 %1008
  %1010 = vrot.lane.b32.xlu0 %v993, 112
  %v1011 = vpop.permute.xlu0 %1010
  %1012 = vrot.lane.b32.xlu0 %v998, 112
  %v1013 = vpop.permute.xlu0 %1012
  %1014 = vrot.lane.b32.xlu0 %v1001, 112
  %v1015 = vpop.permute.xlu0 %1014
  %vm1020 = vcmask 1048448
  %1021 = vst.msk [vmem:[#allocation2] sm:$0xff] %vm1020, %v1009
  %1022 = vst.msk [vmem:[#allocation2 + $0x8] sm:$0xff] %vm1020, %v1011
  %1023 = vst.msk [vmem:[#allocation2 + $0x10] sm:$0xff] %vm1020, %v1013
  %1024 = vst.msk [vmem:[#allocation2 + $0x18] sm:$0xff] %vm1020, %v1015
  %v1025 = vld [vmem:[%s9] sm:$0xf]
  %v1026 = vld [vmem:[%s9 + $0x4] sm:$0xf]
  %v1027 = vld [vmem:[%s9 + $0x8] sm:$0xf]
  %v1028 = vld [vmem:[%s9 + $0xc] sm:$0xf]
  %v1029 = vld [vmem:[#allocation2] sm:$0xff]
  %v1030 = vld [vmem:[#allocation2 + $0x8] sm:$0xff]
  %v1031 = vld [vmem:[#allocation2 + $0x10] sm:$0xff]
  %v1032 = vld [vmem:[#allocation2 + $0x18] sm:$0xff]
  %v1033 = vld [vmem:[#allocation2 + $0x20] sm:$0xff]
  %v1034 = vld [vmem:[#allocation2 + $0x28] sm:$0xff]
  %v1035 = vld [vmem:[#allocation2 + $0x30] sm:$0xff]
  %v1036 = vld [vmem:[#allocation2 + $0x38] sm:$0xff]
  %v1037 = vpack.c.bf16 %v1030, %v1029
  %v1038 = vpack.c.bf16 %v1032, %v1031
  %v1039 = vpack.c.bf16 %v1034, %v1033
  %v1040 = vpack.c.bf16 %v1036, %v1035
  %v1041 = vld [vmem:[%s10] sm:$0xff]
  %v1042 = vld [vmem:[%s10 + $0x8] sm:$0xff]
  %v1043 = vld [vmem:[%s10 + $0x10] sm:$0xff]
  %v1044 = vld [vmem:[%s10 + $0x18] sm:$0xff]
  %1046 = vset.pattern.permute.xlu0 0
  %1047 = vperm.xlu0 %1046, %v1041
  %v1048 = vpop.permute.xlu0 %1047
  %1051 = vset.pattern.permute.xlu0 0
  %1052 = vperm.xlu0 %1051, %v1042
  %v1053 = vpop.permute.xlu0 %1052
  %1056 = vset.pattern.permute.xlu0 0
  %1057 = vperm.xlu0 %1056, %v1043
  %v1058 = vpop.permute.xlu0 %1057
  %1061 = vset.pattern.permute.xlu0 0
  %1062 = vperm.xlu0 %1061, %v1044
  %v1063 = vpop.permute.xlu0 %1062
  %v1069 = vunpack.c.l.b16 %v1025
  %v1070 = vunpack.c.l.b16 %v1026
  %v1071 = vunpack.c.l.b16 %v1027
  %v1072 = vunpack.c.l.b16 %v1028
  %v1073 = vpack.c.b16 %v1070, %v1069
  %v1074 = vpack.c.b16 %v1072, %v1071
  %vm1075 = vcmask 523264
  %v1077 = vsel %vm1075, %v1073, 0
  %v1080 = vsel %vm1075, %v1074, 0
  %1082 = vmatprep.subr.bf16.mxu0 0
  %1083 = vmatpush1.bf16.msra.mxu0 0
  %1084 = vmatprep.subr.bf16.mxu0 0
  %1085 = vmatpush1.bf16.msra.mxu0 0
  %1086 = vmatprep.subr.bf16.mxu0 0
  %1087 = vmatpush1.bf16.msra.mxu0 0
  %1088 = vmatprep.subr.bf16.mxu0 0
  %1089 = vmatpush1.bf16.msra.mxu0 0
  %1090 = vmatprep.subr.bf16.mxu0 0
  %1091 = vmatpush1.bf16.msra.mxu0 %v1040
  %1092 = vmatprep.subr.bf16.mxu0 0
  %1093 = vmatpush1.bf16.msra.mxu0 %v1039
  %1094 = vmatprep.subr.bf16.mxu0 0
  %1095 = vmatpush1.bf16.msra.mxu0 %v1038
  %1096 = vmatprep.subr.bf16.mxu0 0
  %1097 = vmatpush1.bf16.msra.mxu0 %v1037
  %1098 = vmatprep.subr.bf16.mxu0 0
  %1099 = vmatpush2.bf16.msra.mxu0 0
  %1100 = vmatprep.subr.bf16.mxu0 0
  %1101 = vmatpush2.bf16.msra.mxu0 0
  %1102 = vmatprep.subr.bf16.mxu0 0
  %1103 = vmatpush2.bf16.msra.mxu0 0
  %1104 = vmatprep.subr.bf16.mxu0 0
  %1105 = vmatpush2.bf16.msra.mxu0 0
  %1106 = vmatprep.subr.bf16.mxu0 0
  %1107 = vmatpush2.bf16.msra.mxu0 0
  %1108 = vmatprep.subr.bf16.mxu0 0
  %1109 = vmatpush2.bf16.msra.mxu0 0
  %1110 = vmatprep.subr.bf16.mxu0 0
  %1111 = vmatpush2.bf16.msra.mxu0 0
  %1112 = vmatprep.subr.bf16.mxu0 0
  %1113 = vmatpush2.bf16.msra.mxu0 0
  %1114 = vmatprep.mubr.bf16.mxu0 0
  %1115 = vmatmul.mubr.bf16.gmra.mxu0 %v1077
  %v1116 = vpop.f32.mrf.mxu0
  %v1117 = vadd.f32 %v1048, %v1116
  %v1118 = vpop.f32.mrf.mxu0
  %v1119 = vpop.f32.mrf.mxu0
  %v1120 = vadd.f32 %v1053, %v1119
  %v1121 = vpop.f32.mrf.mxu0
  %1122 = vmatprep.mubr.bf16.mxu0 0
  %1123 = vmatmul.mubr.bf16.gmra.mxu0 %v1080
  %v1124 = vpop.f32.mrf.mxu0
  %v1125 = vadd.f32 %v1058, %v1124
  %v1126 = vpop.f32.mrf.mxu0
  %v1127 = vpop.f32.mrf.mxu0
  %v1128 = vadd.f32 %v1063, %v1127
  %v1129 = vpop.f32.mrf.mxu0
  %1130 = vdwg.mxu0
  %v1131 = vadd.f32 %v1117, %v1120
  %v1132 = vadd.f32 %v1131, %v1125
  %v1133 = vadd.f32 %v1132, %v1128
  %v1134 = vrot.slane %v1133, 4
  %v1135 = vadd.f32 %v1133, %v1134
  %v1136 = vrot.slane %v1135, 2
  %v1137 = vadd.f32 %v1135, %v1136
  %v1138 = vrot.slane %v1137, 1
  %v1139 = vadd.f32 %v1137, %v1138
  %v1140 = vrcp.pop 32.0
  %v1141 = vmul.f32 %v1139, %v1140
  %v1142 = vsub.f32 %v1117, %v1141
  %v1143 = vsub.f32 %v1120, %v1141
  %v1144 = vsub.f32 %v1125, %v1141
  %v1145 = vsub.f32 %v1128, %v1141
  %v1146 = vmul.f32 %v1142, %v1142
  %v1147 = vmul.f32 %v1143, %v1143
  %v1148 = vmul.f32 %v1144, %v1144
  %v1149 = vmul.f32 %v1145, %v1145
  %v1150 = vadd.f32 %v1146, %v1147
  %v1151 = vadd.f32 %v1150, %v1148
  %v1152 = vadd.f32 %v1151, %v1149
  %v1153 = vrot.slane %v1152, 4
  %v1154 = vadd.f32 %v1152, %v1153
  %v1155 = vrot.slane %v1154, 2
  %v1156 = vadd.f32 %v1154, %v1155
  %v1157 = vrot.slane %v1156, 1
  %v1158 = vadd.f32 %v1156, %v1157
  %v1159 = vmul.f32 %v1158, %v1140
  %v1160 = vadd.f32 %v1159, 1e-05
  %v1161 = vrsqrt.pop %v1160
  %v1162 = vmul.f32 %v1142, %v1161
  %v1163 = vmul.f32 %v1143, %v1161
  %v1164 = vmul.f32 %v1144, %v1161
  %v1165 = vmul.f32 %v1145, %v1161
  %v1166 = vld [vmem:[%s11] sm:$0xff]
  %v1167 = vld [vmem:[%s11 + $0x8] sm:$0xff]
  %v1168 = vld [vmem:[%s11 + $0x10] sm:$0xff]
  %v1169 = vld [vmem:[%s11 + $0x18] sm:$0xff]
  %1171 = vset.pattern.permute.xlu0 0
  %1172 = vperm.xlu0 %1171, %v1166
  %v1173 = vpop.permute.xlu0 %1172
  %1176 = vset.pattern.permute.xlu0 0
  %1177 = vperm.xlu0 %1176, %v1167
  %v1178 = vpop.permute.xlu0 %1177
  %1181 = vset.pattern.permute.xlu0 0
  %1182 = vperm.xlu0 %1181, %v1168
  %v1183 = vpop.permute.xlu0 %1182
  %1186 = vset.pattern.permute.xlu0 0
  %1187 = vperm.xlu0 %1186, %v1169
  %v1188 = vpop.permute.xlu0 %1187
  %v1190 = vmul.f32 %v1162, %v1173
  %v1191 = vmul.f32 %v1163, %v1178
  %v1192 = vmul.f32 %v1164, %v1183
  %v1193 = vmul.f32 %v1165, %v1188
  %v1194 = vld [vmem:[%s12] sm:$0xff]
  %v1195 = vld [vmem:[%s12 + $0x8] sm:$0xff]
  %v1196 = vld [vmem:[%s12 + $0x10] sm:$0xff]
  %v1197 = vld [vmem:[%s12 + $0x18] sm:$0xff]
  %1199 = vset.pattern.permute.xlu0 0
  %1200 = vperm.xlu0 %1199, %v1194
  %v1201 = vpop.permute.xlu0 %1200
  %1204 = vset.pattern.permute.xlu0 0
  %1205 = vperm.xlu0 %1204, %v1195
  %v1206 = vpop.permute.xlu0 %1205
  %1209 = vset.pattern.permute.xlu0 0
  %1210 = vperm.xlu0 %1209, %v1196
  %v1211 = vpop.permute.xlu0 %1210
  %1214 = vset.pattern.permute.xlu0 0
  %1215 = vperm.xlu0 %1214, %v1197
  %v1216 = vpop.permute.xlu0 %1215
  %v1218 = vadd.f32 %v1190, %v1201
  %v1219 = vadd.f32 %v1191, %v1206
  %v1220 = vadd.f32 %v1192, %v1211
  %v1221 = vadd.f32 %v1193, %v1216
  %v1222 = vmax.f32 %v1218, 0.0
  %v1223 = vmax.f32 %v1219, 0.0
  %v1224 = vmax.f32 %v1220, 0.0
  %v1225 = vmax.f32 %v1221, 0.0
  %1226 = vst [vmem:[#allocation2 + $0x20] sm:$0xff] %v1222
  %1227 = vst [vmem:[#allocation2 + $0x28] sm:$0xff] %v1223
  %1228 = vst [vmem:[#allocation2 + $0x30] sm:$0xff] %v1224
  %1229 = vst [vmem:[#allocation2 + $0x38] sm:$0xff] %v1225
  %v1230 = vld [vmem:[#allocation2 + $0x20] sm:$0xff]
  %v1231 = vld [vmem:[#allocation2 + $0x28] sm:$0xff]
  %v1232 = vld [vmem:[#allocation2 + $0x30] sm:$0xff]
  %v1233 = vld [vmem:[#allocation2 + $0x38] sm:$0xff]
  %v1234 = vpack.c.bf16 %v1231, %v1230
  %v1235 = vpack.c.bf16 %v1233, %v1232
  %v1237 = vsel %vm349, %v1234, 0
  %v1240 = vsel %vm349, %v1235, 0
  %1242 = vmatprep.subr.bf16.mxu0 0
  %1243 = vmatpush1.bf16.msra.mxu0 0
  %1244 = vmatprep.subr.bf16.mxu0 0
  %1245 = vmatpush1.bf16.msra.mxu0 0
  %1246 = vmatprep.subr.bf16.mxu0 0
  %1247 = vmatpush1.bf16.msra.mxu0 0
  %1248 = vmatprep.subr.bf16.mxu0 0
  %1249 = vmatpush1.bf16.msra.mxu0 0
  %1250 = vmatprep.subr.bf16.mxu0 0
  %1251 = vmatpush1.bf16.msra.mxu0 0
  %1252 = vmatprep.subr.bf16.mxu0 0
  %1253 = vmatpush1.bf16.msra.mxu0 0
  %1254 = vmatprep.subr.bf16.mxu0 0
  %1255 = vmatpush1.bf16.msra.mxu0 0
  %1256 = vmatprep.subr.bf16.mxu0 0
  %1257 = vmatpush1.bf16.msra.mxu0 %v347
  %1258 = vmatprep.subr.bf16.mxu0 0
  %1259 = vmatpush2.bf16.msra.mxu0 0
  %1260 = vmatprep.subr.bf16.mxu0 0
  %1261 = vmatpush2.bf16.msra.mxu0 0
  %1262 = vmatprep.subr.bf16.mxu0 0
  %1263 = vmatpush2.bf16.msra.mxu0 0
  %1264 = vmatprep.subr.bf16.mxu0 0
  %1265 = vmatpush2.bf16.msra.mxu0 0
  %1266 = vmatprep.subr.bf16.mxu0 0
  %1267 = vmatpush2.bf16.msra.mxu0 0
  %1268 = vmatprep.subr.bf16.mxu0 0
  %1269 = vmatpush2.bf16.msra.mxu0 0
  %1270 = vmatprep.subr.bf16.mxu0 0
  %1271 = vmatpush2.bf16.msra.mxu0 0
  %1272 = vmatprep.subr.bf16.mxu0 0
  %1273 = vmatpush2.bf16.msra.mxu0 0
  %1274 = vmatprep.mubr.bf16.mxu0 0
  %1275 = vmatmul.mubr.bf16.gmra.mxu0 %v1237
  %v1276 = vpop.f32.mrf.mxu0
  %v1277 = vadd.f32 0.0, %v1276
  %v1278 = vpop.f32.mrf.mxu0
  %v1279 = vpop.f32.mrf.mxu0
  %v1280 = vadd.f32 0.0, %v1279
  %v1281 = vpop.f32.mrf.mxu0
  %1282 = vmatprep.mubr.bf16.mxu0 0
  %1283 = vmatmul.mubr.bf16.gmra.mxu0 %v1240
  %v1284 = vpop.f32.mrf.mxu0
  %v1285 = vadd.f32 0.0, %v1284
  %v1286 = vpop.f32.mrf.mxu0
  %v1287 = vpop.f32.mrf.mxu0
  %v1288 = vadd.f32 0.0, %v1287
  %v1289 = vpop.f32.mrf.mxu0
  %1290 = vdwg.mxu0
  %1291 = vst.msk [vmem:[#allocation2] sm:$0xff] %vm349, %v1277
  %1292 = vst.msk [vmem:[#allocation2 + $0x8] sm:$0xff] %vm349, %v1280
  %1293 = vst.msk [vmem:[#allocation2 + $0x10] sm:$0xff] %vm349, %v1285
  %1294 = vst.msk [vmem:[#allocation2 + $0x18] sm:$0xff] %vm349, %v1288
  %v1295 = vld [vmem:[#allocation2 + $0x20] sm:$0xff]
  %v1296 = vld [vmem:[#allocation2 + $0x28] sm:$0xff]
  %v1297 = vld [vmem:[#allocation2 + $0x30] sm:$0xff]
  %v1298 = vld [vmem:[#allocation2 + $0x38] sm:$0xff]
  %v1299 = vpack.c.bf16 %v1296, %v1295
  %v1300 = vpack.c.bf16 %v1298, %v1297
  %1303 = vrot.lane.b32.xlu0 %v1299, 112
  %v1304 = vpop.permute.xlu0 %1303
  %1305 = vrot.lane.b32.xlu0 %v1300, 112
  %v1306 = vpop.permute.xlu0 %1305
  %v1308 = vsel %vm349, %v1304, 0
  %v1311 = vsel %vm349, %v1306, 0
  %1313 = vmatprep.subr.bf16.mxu0 0
  %1314 = vmatpush1.bf16.msra.mxu0 0
  %1315 = vmatprep.subr.bf16.mxu0 0
  %1316 = vmatpush1.bf16.msra.mxu0 0
  %1317 = vmatprep.subr.bf16.mxu0 0
  %1318 = vmatpush1.bf16.msra.mxu0 0
  %1319 = vmatprep.subr.bf16.mxu0 0
  %1320 = vmatpush1.bf16.msra.mxu0 0
  %1321 = vmatprep.subr.bf16.mxu0 0
  %1322 = vmatpush1.bf16.msra.mxu0 0
  %1323 = vmatprep.subr.bf16.mxu0 0
  %1324 = vmatpush1.bf16.msra.mxu0 0
  %1325 = vmatprep.subr.bf16.mxu0 0
  %1326 = vmatpush1.bf16.msra.mxu0 0
  %1327 = vmatprep.subr.bf16.mxu0 0
  %1328 = vmatpush1.bf16.msra.mxu0 %v347
  %1329 = vmatprep.subr.bf16.mxu0 0
  %1330 = vmatpush2.bf16.msra.mxu0 0
  %1331 = vmatprep.subr.bf16.mxu0 0
  %1332 = vmatpush2.bf16.msra.mxu0 0
  %1333 = vmatprep.subr.bf16.mxu0 0
  %1334 = vmatpush2.bf16.msra.mxu0 0
  %1335 = vmatprep.subr.bf16.mxu0 0
  %1336 = vmatpush2.bf16.msra.mxu0 0
  %1337 = vmatprep.subr.bf16.mxu0 0
  %1338 = vmatpush2.bf16.msra.mxu0 0
  %1339 = vmatprep.subr.bf16.mxu0 0
  %1340 = vmatpush2.bf16.msra.mxu0 0
  %1341 = vmatprep.subr.bf16.mxu0 0
  %1342 = vmatpush2.bf16.msra.mxu0 0
  %1343 = vmatprep.subr.bf16.mxu0 0
  %1344 = vmatpush2.bf16.msra.mxu0 0
  %1345 = vmatprep.mubr.bf16.mxu0 0
  %1346 = vmatmul.mubr.bf16.gmra.mxu0 %v1308
  %v1347 = vpop.f32.mrf.mxu0
  %v1348 = vadd.f32 0.0, %v1347
  %v1349 = vpop.f32.mrf.mxu0
  %v1350 = vpop.f32.mrf.mxu0
  %v1351 = vadd.f32 0.0, %v1350
  %v1352 = vpop.f32.mrf.mxu0
  %1353 = vmatprep.mubr.bf16.mxu0 0
  %1354 = vmatmul.mubr.bf16.gmra.mxu0 %v1311
  %v1355 = vpop.f32.mrf.mxu0
  %v1356 = vadd.f32 0.0, %v1355
  %v1357 = vpop.f32.mrf.mxu0
  %v1358 = vpop.f32.mrf.mxu0
  %v1359 = vadd.f32 0.0, %v1358
  %v1360 = vpop.f32.mrf.mxu0
  %1361 = vdwg.mxu0
  %1366 = vrot.lane.b32.xlu0 %v1348, 16
  %v1367 = vpop.permute.xlu0 %1366
  %1368 = vrot.lane.b32.xlu0 %v1351, 16
  %v1369 = vpop.permute.xlu0 %1368
  %1370 = vrot.lane.b32.xlu0 %v1356, 16
  %v1371 = vpop.permute.xlu0 %1370
  %1372 = vrot.lane.b32.xlu0 %v1359, 16
  %v1373 = vpop.permute.xlu0 %1372
  %1378 = vst.msk [vmem:[#allocation2] sm:$0xff] %vm492, %v1367
  %1379 = vst.msk [vmem:[#allocation2 + $0x8] sm:$0xff] %vm492, %v1369
  %1380 = vst.msk [vmem:[#allocation2 + $0x10] sm:$0xff] %vm492, %v1371
  %1381 = vst.msk [vmem:[#allocation2 + $0x18] sm:$0xff] %vm492, %v1373
  %v1382 = vld [vmem:[#allocation2 + $0x20] sm:$0xff]
  %v1383 = vld [vmem:[#allocation2 + $0x28] sm:$0xff]
  %v1384 = vld [vmem:[#allocation2 + $0x30] sm:$0xff]
  %v1385 = vld [vmem:[#allocation2 + $0x38] sm:$0xff]
  %v1386 = vpack.c.bf16 %v1383, %v1382
  %v1387 = vpack.c.bf16 %v1385, %v1384
  %1390 = vrot.lane.b32.xlu0 %v1386, 96
  %v1391 = vpop.permute.xlu0 %1390
  %1392 = vrot.lane.b32.xlu0 %v1387, 96
  %v1393 = vpop.permute.xlu0 %1392
  %v1395 = vsel %vm349, %v1391, 0
  %v1398 = vsel %vm349, %v1393, 0
  %1400 = vmatprep.subr.bf16.mxu0 0
  %1401 = vmatpush1.bf16.msra.mxu0 0
  %1402 = vmatprep.subr.bf16.mxu0 0
  %1403 = vmatpush1.bf16.msra.mxu0 0
  %1404 = vmatprep.subr.bf16.mxu0 0
  %1405 = vmatpush1.bf16.msra.mxu0 0
  %1406 = vmatprep.subr.bf16.mxu0 0
  %1407 = vmatpush1.bf16.msra.mxu0 0
  %1408 = vmatprep.subr.bf16.mxu0 0
  %1409 = vmatpush1.bf16.msra.mxu0 0
  %1410 = vmatprep.subr.bf16.mxu0 0
  %1411 = vmatpush1.bf16.msra.mxu0 0
  %1412 = vmatprep.subr.bf16.mxu0 0
  %1413 = vmatpush1.bf16.msra.mxu0 0
  %1414 = vmatprep.subr.bf16.mxu0 0
  %1415 = vmatpush1.bf16.msra.mxu0 %v347
  %1416 = vmatprep.subr.bf16.mxu0 0
  %1417 = vmatpush2.bf16.msra.mxu0 0
  %1418 = vmatprep.subr.bf16.mxu0 0
  %1419 = vmatpush2.bf16.msra.mxu0 0
  %1420 = vmatprep.subr.bf16.mxu0 0
  %1421 = vmatpush2.bf16.msra.mxu0 0
  %1422 = vmatprep.subr.bf16.mxu0 0
  %1423 = vmatpush2.bf16.msra.mxu0 0
  %1424 = vmatprep.subr.bf16.mxu0 0
  %1425 = vmatpush2.bf16.msra.mxu0 0
  %1426 = vmatprep.subr.bf16.mxu0 0
  %1427 = vmatpush2.bf16.msra.mxu0 0
  %1428 = vmatprep.subr.bf16.mxu0 0
  %1429 = vmatpush2.bf16.msra.mxu0 0
  %1430 = vmatprep.subr.bf16.mxu0 0
  %1431 = vmatpush2.bf16.msra.mxu0 0
  %1432 = vmatprep.mubr.bf16.mxu0 0
  %1433 = vmatmul.mubr.bf16.gmra.mxu0 %v1395
  %v1434 = vpop.f32.mrf.mxu0
  %v1435 = vadd.f32 0.0, %v1434
  %v1436 = vpop.f32.mrf.mxu0
  %v1437 = vpop.f32.mrf.mxu0
  %v1438 = vadd.f32 0.0, %v1437
  %v1439 = vpop.f32.mrf.mxu0
  %1440 = vmatprep.mubr.bf16.mxu0 0
  %1441 = vmatmul.mubr.bf16.gmra.mxu0 %v1398
  %v1442 = vpop.f32.mrf.mxu0
  %v1443 = vadd.f32 0.0, %v1442
  %v1444 = vpop.f32.mrf.mxu0
  %v1445 = vpop.f32.mrf.mxu0
  %v1446 = vadd.f32 0.0, %v1445
  %v1447 = vpop.f32.mrf.mxu0
  %1448 = vdwg.mxu0
  %1453 = vrot.lane.b32.xlu0 %v1435, 32
  %v1454 = vpop.permute.xlu0 %1453
  %1455 = vrot.lane.b32.xlu0 %v1438, 32
  %v1456 = vpop.permute.xlu0 %1455
  %1457 = vrot.lane.b32.xlu0 %v1443, 32
  %v1458 = vpop.permute.xlu0 %1457
  %1459 = vrot.lane.b32.xlu0 %v1446, 32
  %v1460 = vpop.permute.xlu0 %1459
  %1465 = vst.msk [vmem:[#allocation2] sm:$0xff] %vm580, %v1454
  %1466 = vst.msk [vmem:[#allocation2 + $0x8] sm:$0xff] %vm580, %v1456
  %1467 = vst.msk [vmem:[#allocation2 + $0x10] sm:$0xff] %vm580, %v1458
  %1468 = vst.msk [vmem:[#allocation2 + $0x18] sm:$0xff] %vm580, %v1460
  %v1469 = vld [vmem:[#allocation2 + $0x20] sm:$0xff]
  %v1470 = vld [vmem:[#allocation2 + $0x28] sm:$0xff]
  %v1471 = vld [vmem:[#allocation2 + $0x30] sm:$0xff]
  %v1472 = vld [vmem:[#allocation2 + $0x38] sm:$0xff]
  %v1473 = vpack.c.bf16 %v1470, %v1469
  %v1474 = vpack.c.bf16 %v1472, %v1471
  %1477 = vrot.lane.b32.xlu0 %v1473, 80
  %v1478 = vpop.permute.xlu0 %1477
  %1479 = vrot.lane.b32.xlu0 %v1474, 80
  %v1480 = vpop.permute.xlu0 %1479
  %v1482 = vsel %vm349, %v1478, 0
  %v1485 = vsel %vm349, %v1480, 0
  %1487 = vmatprep.subr.bf16.mxu0 0
  %1488 = vmatpush1.bf16.msra.mxu0 0
  %1489 = vmatprep.subr.bf16.mxu0 0
  %1490 = vmatpush1.bf16.msra.mxu0 0
  %1491 = vmatprep.subr.bf16.mxu0 0
  %1492 = vmatpush1.bf16.msra.mxu0 0
  %1493 = vmatprep.subr.bf16.mxu0 0
  %1494 = vmatpush1.bf16.msra.mxu0 0
  %1495 = vmatprep.subr.bf16.mxu0 0
  %1496 = vmatpush1.bf16.msra.mxu0 0
  %1497 = vmatprep.subr.bf16.mxu0 0
  %1498 = vmatpush1.bf16.msra.mxu0 0
  %1499 = vmatprep.subr.bf16.mxu0 0
  %1500 = vmatpush1.bf16.msra.mxu0 0
  %1501 = vmatprep.subr.bf16.mxu0 0
  %1502 = vmatpush1.bf16.msra.mxu0 %v347
  %1503 = vmatprep.subr.bf16.mxu0 0
  %1504 = vmatpush2.bf16.msra.mxu0 0
  %1505 = vmatprep.subr.bf16.mxu0 0
  %1506 = vmatpush2.bf16.msra.mxu0 0
  %1507 = vmatprep.subr.bf16.mxu0 0
  %1508 = vmatpush2.bf16.msra.mxu0 0
  %1509 = vmatprep.subr.bf16.mxu0 0
  %1510 = vmatpush2.bf16.msra.mxu0 0
  %1511 = vmatprep.subr.bf16.mxu0 0
  %1512 = vmatpush2.bf16.msra.mxu0 0
  %1513 = vmatprep.subr.bf16.mxu0 0
  %1514 = vmatpush2.bf16.msra.mxu0 0
  %1515 = vmatprep.subr.bf16.mxu0 0
  %1516 = vmatpush2.bf16.msra.mxu0 0
  %1517 = vmatprep.subr.bf16.mxu0 0
  %1518 = vmatpush2.bf16.msra.mxu0 0
  %1519 = vmatprep.mubr.bf16.mxu0 0
  %1520 = vmatmul.mubr.bf16.gmra.mxu0 %v1482
  %v1521 = vpop.f32.mrf.mxu0
  %v1522 = vadd.f32 0.0, %v1521
  %v1523 = vpop.f32.mrf.mxu0
  %v1524 = vpop.f32.mrf.mxu0
  %v1525 = vadd.f32 0.0, %v1524
  %v1526 = vpop.f32.mrf.mxu0
  %1527 = vmatprep.mubr.bf16.mxu0 0
  %1528 = vmatmul.mubr.bf16.gmra.mxu0 %v1485
  %v1529 = vpop.f32.mrf.mxu0
  %v1530 = vadd.f32 0.0, %v1529
  %v1531 = vpop.f32.mrf.mxu0
  %v1532 = vpop.f32.mrf.mxu0
  %v1533 = vadd.f32 0.0, %v1532
  %v1534 = vpop.f32.mrf.mxu0
  %1535 = vdwg.mxu0
  %1540 = vrot.lane.b32.xlu0 %v1522, 48
  %v1541 = vpop.permute.xlu0 %1540
  %1542 = vrot.lane.b32.xlu0 %v1525, 48
  %v1543 = vpop.permute.xlu0 %1542
  %1544 = vrot.lane.b32.xlu0 %v1530, 48
  %v1545 = vpop.permute.xlu0 %1544
  %1546 = vrot.lane.b32.xlu0 %v1533, 48
  %v1547 = vpop.permute.xlu0 %1546
  %1552 = vst.msk [vmem:[#allocation2] sm:$0xff] %vm668, %v1541
  %1553 = vst.msk [vmem:[#allocation2 + $0x8] sm:$0xff] %vm668, %v1543
  %1554 = vst.msk [vmem:[#allocation2 + $0x10] sm:$0xff] %vm668, %v1545
  %1555 = vst.msk [vmem:[#allocation2 + $0x18] sm:$0xff] %vm668, %v1547
  %v1556 = vld [vmem:[#allocation2 + $0x20] sm:$0xff]
  %v1557 = vld [vmem:[#allocation2 + $0x28] sm:$0xff]
  %v1558 = vld [vmem:[#allocation2 + $0x30] sm:$0xff]
  %v1559 = vld [vmem:[#allocation2 + $0x38] sm:$0xff]
  %v1560 = vpack.c.bf16 %v1557, %v1556
  %v1561 = vpack.c.bf16 %v1559, %v1558
  %1564 = vrot.lane.b32.xlu0 %v1560, 64
  %v1565 = vpop.permute.xlu0 %1564
  %1566 = vrot.lane.b32.xlu0 %v1561, 64
  %v1567 = vpop.permute.xlu0 %1566
  %v1569 = vsel %vm349, %v1565, 0
  %v1572 = vsel %vm349, %v1567, 0
  %1574 = vmatprep.subr.bf16.mxu0 0
  %1575 = vmatpush1.bf16.msra.mxu0 0
  %1576 = vmatprep.subr.bf16.mxu0 0
  %1577 = vmatpush1.bf16.msra.mxu0 0
  %1578 = vmatprep.subr.bf16.mxu0 0
  %1579 = vmatpush1.bf16.msra.mxu0 0
  %1580 = vmatprep.subr.bf16.mxu0 0
  %1581 = vmatpush1.bf16.msra.mxu0 0
  %1582 = vmatprep.subr.bf16.mxu0 0
  %1583 = vmatpush1.bf16.msra.mxu0 0
  %1584 = vmatprep.subr.bf16.mxu0 0
  %1585 = vmatpush1.bf16.msra.mxu0 0
  %1586 = vmatprep.subr.bf16.mxu0 0
  %1587 = vmatpush1.bf16.msra.mxu0 0
  %1588 = vmatprep.subr.bf16.mxu0 0
  %1589 = vmatpush1.bf16.msra.mxu0 %v347
  %1590 = vmatprep.subr.bf16.mxu0 0
  %1591 = vmatpush2.bf16.msra.mxu0 0
  %1592 = vmatprep.subr.bf16.mxu0 0
  %1593 = vmatpush2.bf16.msra.mxu0 0
  %1594 = vmatprep.subr.bf16.mxu0 0
  %1595 = vmatpush2.bf16.msra.mxu0 0
  %1596 = vmatprep.subr.bf16.mxu0 0
  %1597 = vmatpush2.bf16.msra.mxu0 0
  %1598 = vmatprep.subr.bf16.mxu0 0
  %1599 = vmatpush2.bf16.msra.mxu0 0
  %1600 = vmatprep.subr.bf16.mxu0 0
  %1601 = vmatpush2.bf16.msra.mxu0 0
  %1602 = vmatprep.subr.bf16.mxu0 0
  %1603 = vmatpush2.bf16.msra.mxu0 0
  %1604 = vmatprep.subr.bf16.mxu0 0
  %1605 = vmatpush2.bf16.msra.mxu0 0
  %1606 = vmatprep.mubr.bf16.mxu0 0
  %1607 = vmatmul.mubr.bf16.gmra.mxu0 %v1569
  %v1608 = vpop.f32.mrf.mxu0
  %v1609 = vadd.f32 0.0, %v1608
  %v1610 = vpop.f32.mrf.mxu0
  %v1611 = vpop.f32.mrf.mxu0
  %v1612 = vadd.f32 0.0, %v1611
  %v1613 = vpop.f32.mrf.mxu0
  %1614 = vmatprep.mubr.bf16.mxu0 0
  %1615 = vmatmul.mubr.bf16.gmra.mxu0 %v1572
  %v1616 = vpop.f32.mrf.mxu0
  %v1617 = vadd.f32 0.0, %v1616
  %v1618 = vpop.f32.mrf.mxu0
  %v1619 = vpop.f32.mrf.mxu0
  %v1620 = vadd.f32 0.0, %v1619
  %v1621 = vpop.f32.mrf.mxu0
  %1622 = vdwg.mxu0
  %1627 = vrot.lane.b32.xlu0 %v1609, 64
  %v1628 = vpop.permute.xlu0 %1627
  %1629 = vrot.lane.b32.xlu0 %v1612, 64
  %v1630 = vpop.permute.xlu0 %1629
  %1631 = vrot.lane.b32.xlu0 %v1617, 64
  %v1632 = vpop.permute.xlu0 %1631
  %1633 = vrot.lane.b32.xlu0 %v1620, 64
  %v1634 = vpop.permute.xlu0 %1633
  %1639 = vst.msk [vmem:[#allocation2] sm:$0xff] %vm756, %v1628
  %1640 = vst.msk [vmem:[#allocation2 + $0x8] sm:$0xff] %vm756, %v1630
  %1641 = vst.msk [vmem:[#allocation2 + $0x10] sm:$0xff] %vm756, %v1632
  %1642 = vst.msk [vmem:[#allocation2 + $0x18] sm:$0xff] %vm756, %v1634
  %v1643 = vld [vmem:[#allocation2 + $0x20] sm:$0xff]
  %v1644 = vld [vmem:[#allocation2 + $0x28] sm:$0xff]
  %v1645 = vld [vmem:[#allocation2 + $0x30] sm:$0xff]
  %v1646 = vld [vmem:[#allocation2 + $0x38] sm:$0xff]
  %v1647 = vpack.c.bf16 %v1644, %v1643
  %v1648 = vpack.c.bf16 %v1646, %v1645
  %1651 = vrot.lane.b32.xlu0 %v1647, 48
  %v1652 = vpop.permute.xlu0 %1651
  %1653 = vrot.lane.b32.xlu0 %v1648, 48
  %v1654 = vpop.permute.xlu0 %1653
  %v1656 = vsel %vm349, %v1652, 0
  %v1659 = vsel %vm349, %v1654, 0
  %1661 = vmatprep.subr.bf16.mxu0 0
  %1662 = vmatpush1.bf16.msra.mxu0 0
  %1663 = vmatprep.subr.bf16.mxu0 0
  %1664 = vmatpush1.bf16.msra.mxu0 0
  %1665 = vmatprep.subr.bf16.mxu0 0
  %1666 = vmatpush1.bf16.msra.mxu0 0
  %1667 = vmatprep.subr.bf16.mxu0 0
  %1668 = vmatpush1.bf16.msra.mxu0 0
  %1669 = vmatprep.subr.bf16.mxu0 0
  %1670 = vmatpush1.bf16.msra.mxu0 0
  %1671 = vmatprep.subr.bf16.mxu0 0
  %1672 = vmatpush1.bf16.msra.mxu0 0
  %1673 = vmatprep.subr.bf16.mxu0 0
  %1674 = vmatpush1.bf16.msra.mxu0 0
  %1675 = vmatprep.subr.bf16.mxu0 0
  %1676 = vmatpush1.bf16.msra.mxu0 %v347
  %1677 = vmatprep.subr.bf16.mxu0 0
  %1678 = vmatpush2.bf16.msra.mxu0 0
  %1679 = vmatprep.subr.bf16.mxu0 0
  %1680 = vmatpush2.bf16.msra.mxu0 0
  %1681 = vmatprep.subr.bf16.mxu0 0
  %1682 = vmatpush2.bf16.msra.mxu0 0
  %1683 = vmatprep.subr.bf16.mxu0 0
  %1684 = vmatpush2.bf16.msra.mxu0 0
  %1685 = vmatprep.subr.bf16.mxu0 0
  %1686 = vmatpush2.bf16.msra.mxu0 0
  %1687 = vmatprep.subr.bf16.mxu0 0
  %1688 = vmatpush2.bf16.msra.mxu0 0
  %1689 = vmatprep.subr.bf16.mxu0 0
  %1690 = vmatpush2.bf16.msra.mxu0 0
  %1691 = vmatprep.subr.bf16.mxu0 0
  %1692 = vmatpush2.bf16.msra.mxu0 0
  %1693 = vmatprep.mubr.bf16.mxu0 0
  %1694 = vmatmul.mubr.bf16.gmra.mxu0 %v1656
  %v1695 = vpop.f32.mrf.mxu0
  %v1696 = vadd.f32 0.0, %v1695
  %v1697 = vpop.f32.mrf.mxu0
  %v1698 = vpop.f32.mrf.mxu0
  %v1699 = vadd.f32 0.0, %v1698
  %v1700 = vpop.f32.mrf.mxu0
  %1701 = vmatprep.mubr.bf16.mxu0 0
  %1702 = vmatmul.mubr.bf16.gmra.mxu0 %v1659
  %v1703 = vpop.f32.mrf.mxu0
  %v1704 = vadd.f32 0.0, %v1703
  %v1705 = vpop.f32.mrf.mxu0
  %v1706 = vpop.f32.mrf.mxu0
  %v1707 = vadd.f32 0.0, %v1706
  %v1708 = vpop.f32.mrf.mxu0
  %1709 = vdwg.mxu0
  %1714 = vrot.lane.b32.xlu0 %v1696, 80
  %v1715 = vpop.permute.xlu0 %1714
  %1716 = vrot.lane.b32.xlu0 %v1699, 80
  %v1717 = vpop.permute.xlu0 %1716
  %1718 = vrot.lane.b32.xlu0 %v1704, 80
  %v1719 = vpop.permute.xlu0 %1718
  %1720 = vrot.lane.b32.xlu0 %v1707, 80
  %v1721 = vpop.permute.xlu0 %1720
  %1726 = vst.msk [vmem:[#allocation2] sm:$0xff] %vm844, %v1715
  %1727 = vst.msk [vmem:[#allocation2 + $0x8] sm:$0xff] %vm844, %v1717
  %1728 = vst.msk [vmem:[#allocation2 + $0x10] sm:$0xff] %vm844, %v1719
  %1729 = vst.msk [vmem:[#allocation2 + $0x18] sm:$0xff] %vm844, %v1721
  %v1730 = vld [vmem:[#allocation2 + $0x20] sm:$0xff]
  %v1731 = vld [vmem:[#allocation2 + $0x28] sm:$0xff]
  %v1732 = vld [vmem:[#allocation2 + $0x30] sm:$0xff]
  %v1733 = vld [vmem:[#allocation2 + $0x38] sm:$0xff]
  %v1734 = vpack.c.bf16 %v1731, %v1730
  %v1735 = vpack.c.bf16 %v1733, %v1732
  %1738 = vrot.lane.b32.xlu0 %v1734, 32
  %v1739 = vpop.permute.xlu0 %1738
  %1740 = vrot.lane.b32.xlu0 %v1735, 32
  %v1741 = vpop.permute.xlu0 %1740
  %v1743 = vsel %vm349, %v1739, 0
  %v1746 = vsel %vm349, %v1741, 0
  %1748 = vmatprep.subr.bf16.mxu0 0
  %1749 = vmatpush1.bf16.msra.mxu0 0
  %1750 = vmatprep.subr.bf16.mxu0 0
  %1751 = vmatpush1.bf16.msra.mxu0 0
  %1752 = vmatprep.subr.bf16.mxu0 0
  %1753 = vmatpush1.bf16.msra.mxu0 0
  %1754 = vmatprep.subr.bf16.mxu0 0
  %1755 = vmatpush1.bf16.msra.mxu0 0
  %1756 = vmatprep.subr.bf16.mxu0 0
  %1757 = vmatpush1.bf16.msra.mxu0 0
  %1758 = vmatprep.subr.bf16.mxu0 0
  %1759 = vmatpush1.bf16.msra.mxu0 0
  %1760 = vmatprep.subr.bf16.mxu0 0
  %1761 = vmatpush1.bf16.msra.mxu0 0
  %1762 = vmatprep.subr.bf16.mxu0 0
  %1763 = vmatpush1.bf16.msra.mxu0 %v347
  %1764 = vmatprep.subr.bf16.mxu0 0
  %1765 = vmatpush2.bf16.msra.mxu0 0
  %1766 = vmatprep.subr.bf16.mxu0 0
  %1767 = vmatpush2.bf16.msra.mxu0 0
  %1768 = vmatprep.subr.bf16.mxu0 0
  %1769 = vmatpush2.bf16.msra.mxu0 0
  %1770 = vmatprep.subr.bf16.mxu0 0
  %1771 = vmatpush2.bf16.msra.mxu0 0
  %1772 = vmatprep.subr.bf16.mxu0 0
  %1773 = vmatpush2.bf16.msra.mxu0 0
  %1774 = vmatprep.subr.bf16.mxu0 0
  %1775 = vmatpush2.bf16.msra.mxu0 0
  %1776 = vmatprep.subr.bf16.mxu0 0
  %1777 = vmatpush2.bf16.msra.mxu0 0
  %1778 = vmatprep.subr.bf16.mxu0 0
  %1779 = vmatpush2.bf16.msra.mxu0 0
  %1780 = vmatprep.mubr.bf16.mxu0 0
  %1781 = vmatmul.mubr.bf16.gmra.mxu0 %v1743
  %v1782 = vpop.f32.mrf.mxu0
  %v1783 = vadd.f32 0.0, %v1782
  %v1784 = vpop.f32.mrf.mxu0
  %v1785 = vpop.f32.mrf.mxu0
  %v1786 = vadd.f32 0.0, %v1785
  %v1787 = vpop.f32.mrf.mxu0
  %1788 = vmatprep.mubr.bf16.mxu0 0
  %1789 = vmatmul.mubr.bf16.gmra.mxu0 %v1746
  %v1790 = vpop.f32.mrf.mxu0
  %v1791 = vadd.f32 0.0, %v1790
  %v1792 = vpop.f32.mrf.mxu0
  %v1793 = vpop.f32.mrf.mxu0
  %v1794 = vadd.f32 0.0, %v1793
  %v1795 = vpop.f32.mrf.mxu0
  %1796 = vdwg.mxu0
  %1801 = vrot.lane.b32.xlu0 %v1783, 96
  %v1802 = vpop.permute.xlu0 %1801
  %1803 = vrot.lane.b32.xlu0 %v1786, 96
  %v1804 = vpop.permute.xlu0 %1803
  %1805 = vrot.lane.b32.xlu0 %v1791, 96
  %v1806 = vpop.permute.xlu0 %1805
  %1807 = vrot.lane.b32.xlu0 %v1794, 96
  %v1808 = vpop.permute.xlu0 %1807
  %1813 = vst.msk [vmem:[#allocation2] sm:$0xff] %vm932, %v1802
  %1814 = vst.msk [vmem:[#allocation2 + $0x8] sm:$0xff] %vm932, %v1804
  %1815 = vst.msk [vmem:[#allocation2 + $0x10] sm:$0xff] %vm932, %v1806
  %1816 = vst.msk [vmem:[#allocation2 + $0x18] sm:$0xff] %vm932, %v1808
  %v1817 = vld [vmem:[#allocation2 + $0x20] sm:$0xff]
  %v1818 = vld [vmem:[#allocation2 + $0x28] sm:$0xff]
  %v1819 = vld [vmem:[#allocation2 + $0x30] sm:$0xff]
  %v1820 = vld [vmem:[#allocation2 + $0x38] sm:$0xff]
  %v1821 = vpack.c.bf16 %v1818, %v1817
  %v1822 = vpack.c.bf16 %v1820, %v1819
  %1825 = vrot.lane.b32.xlu0 %v1821, 16
  %v1826 = vpop.permute.xlu0 %1825
  %1827 = vrot.lane.b32.xlu0 %v1822, 16
  %v1828 = vpop.permute.xlu0 %1827
  %v1830 = vsel %vm349, %v1826, 0
  %v1833 = vsel %vm349, %v1828, 0
  %1835 = vmatprep.subr.bf16.mxu0 0
  %1836 = vmatpush1.bf16.msra.mxu0 0
  %1837 = vmatprep.subr.bf16.mxu0 0
  %1838 = vmatpush1.bf16.msra.mxu0 0
  %1839 = vmatprep.subr.bf16.mxu0 0
  %1840 = vmatpush1.bf16.msra.mxu0 0
  %1841 = vmatprep.subr.bf16.mxu0 0
  %1842 = vmatpush1.bf16.msra.mxu0 0
  %1843 = vmatprep.subr.bf16.mxu0 0
  %1844 = vmatpush1.bf16.msra.mxu0 0
  %1845 = vmatprep.subr.bf16.mxu0 0
  %1846 = vmatpush1.bf16.msra.mxu0 0
  %1847 = vmatprep.subr.bf16.mxu0 0
  %1848 = vmatpush1.bf16.msra.mxu0 0
  %1849 = vmatprep.subr.bf16.mxu0 0
  %1850 = vmatpush1.bf16.msra.mxu0 %v347
  %1851 = vmatprep.subr.bf16.mxu0 0
  %1852 = vmatpush2.bf16.msra.mxu0 0
  %1853 = vmatprep.subr.bf16.mxu0 0
  %1854 = vmatpush2.bf16.msra.mxu0 0
  %1855 = vmatprep.subr.bf16.mxu0 0
  %1856 = vmatpush2.bf16.msra.mxu0 0
  %1857 = vmatprep.subr.bf16.mxu0 0
  %1858 = vmatpush2.bf16.msra.mxu0 0
  %1859 = vmatprep.subr.bf16.mxu0 0
  %1860 = vmatpush2.bf16.msra.mxu0 0
  %1861 = vmatprep.subr.bf16.mxu0 0
  %1862 = vmatpush2.bf16.msra.mxu0 0
  %1863 = vmatprep.subr.bf16.mxu0 0
  %1864 = vmatpush2.bf16.msra.mxu0 0
  %1865 = vmatprep.subr.bf16.mxu0 0
  %1866 = vmatpush2.bf16.msra.mxu0 0
  %1867 = vmatprep.mubr.bf16.mxu0 0
  %1868 = vmatmul.mubr.bf16.gmra.mxu0 %v1830
  %v1869 = vpop.f32.mrf.mxu0
  %v1870 = vadd.f32 0.0, %v1869
  %v1871 = vpop.f32.mrf.mxu0
  %v1872 = vpop.f32.mrf.mxu0
  %v1873 = vadd.f32 0.0, %v1872
  %v1874 = vpop.f32.mrf.mxu0
  %1875 = vmatprep.mubr.bf16.mxu0 0
  %1876 = vmatmul.mubr.bf16.gmra.mxu0 %v1833
  %v1877 = vpop.f32.mrf.mxu0
  %v1878 = vadd.f32 0.0, %v1877
  %v1879 = vpop.f32.mrf.mxu0
  %v1880 = vpop.f32.mrf.mxu0
  %v1881 = vadd.f32 0.0, %v1880
  %v1882 = vpop.f32.mrf.mxu0
  %1883 = vdwg.mxu0
  %1888 = vrot.lane.b32.xlu0 %v1870, 112
  %v1889 = vpop.permute.xlu0 %1888
  %1890 = vrot.lane.b32.xlu0 %v1873, 112
  %v1891 = vpop.permute.xlu0 %1890
  %1892 = vrot.lane.b32.xlu0 %v1878, 112
  %v1893 = vpop.permute.xlu0 %1892
  %1894 = vrot.lane.b32.xlu0 %v1881, 112
  %v1895 = vpop.permute.xlu0 %1894
  %1900 = vst.msk [vmem:[#allocation2] sm:$0xff] %vm1020, %v1889
  %1901 = vst.msk [vmem:[#allocation2 + $0x8] sm:$0xff] %vm1020, %v1891
  %1902 = vst.msk [vmem:[#allocation2 + $0x10] sm:$0xff] %vm1020, %v1893
  %1903 = vst.msk [vmem:[#allocation2 + $0x18] sm:$0xff] %vm1020, %v1895
  %v1904 = vld [vmem:[#allocation2 + $0x20] sm:$0xff]
  %v1905 = vld [vmem:[#allocation2 + $0x28] sm:$0xff]
  %v1906 = vld [vmem:[#allocation2 + $0x30] sm:$0xff]
  %v1907 = vld [vmem:[#allocation2 + $0x38] sm:$0xff]
  %s1908 = scalar_lea.vmem %s9, 16
  %v1909 = vld [vmem:[%s1908] sm:$0xf]
  %v1910 = vld [vmem:[%s1908 + $0x4] sm:$0xf]
  %v1911 = vld [vmem:[%s1908 + $0x8] sm:$0xf]
  %v1912 = vld [vmem:[%s1908 + $0xc] sm:$0xf]
  %v1913 = vld [vmem:[#allocation2] sm:$0xff]
  %v1914 = vld [vmem:[#allocation2 + $0x8] sm:$0xff]
  %v1915 = vld [vmem:[#allocation2 + $0x10] sm:$0xff]
  %v1916 = vld [vmem:[#allocation2 + $0x18] sm:$0xff]
  %v1917 = vpack.c.bf16 %v1914, %v1913
  %v1918 = vpack.c.bf16 %v1916, %v1915
  %v1919 = vpack.c.bf16 %v1905, %v1904
  %v1920 = vpack.c.bf16 %v1907, %v1906
  %s1921 = scalar_lea.vmem %s10, 32
  %v1922 = vld [vmem:[%s1921] sm:$0xff]
  %v1923 = vld [vmem:[%s1921 + $0x8] sm:$0xff]
  %v1924 = vld [vmem:[%s1921 + $0x10] sm:$0xff]
  %v1925 = vld [vmem:[%s1921 + $0x18] sm:$0xff]
  %1927 = vset.pattern.permute.xlu0 0
  %1928 = vperm.xlu0 %1927, %v1922
  %v1929 = vpop.permute.xlu0 %1928
  %1932 = vset.pattern.permute.xlu0 0
  %1933 = vperm.xlu0 %1932, %v1923
  %v1934 = vpop.permute.xlu0 %1933
  %1937 = vset.pattern.permute.xlu0 0
  %1938 = vperm.xlu0 %1937, %v1924
  %v1939 = vpop.permute.xlu0 %1938
  %1942 = vset.pattern.permute.xlu0 0
  %1943 = vperm.xlu0 %1942, %v1925
  %v1944 = vpop.permute.xlu0 %1943
  %v1950 = vunpack.c.l.b16 %v1909
  %v1951 = vunpack.c.l.b16 %v1910
  %v1952 = vunpack.c.l.b16 %v1911
  %v1953 = vunpack.c.l.b16 %v1912
  %v1954 = vpack.c.b16 %v1951, %v1950
  %v1955 = vpack.c.b16 %v1953, %v1952
  %v1957 = vsel %vm1075, %v1954, 0
  %v1960 = vsel %vm1075, %v1955, 0
  %1962 = vmatprep.subr.bf16.mxu0 0
  %1963 = vmatpush1.bf16.msra.mxu0 0
  %1964 = vmatprep.subr.bf16.mxu0 0
  %1965 = vmatpush1.bf16.msra.mxu0 0
  %1966 = vmatprep.subr.bf16.mxu0 0
  %1967 = vmatpush1.bf16.msra.mxu0 0
  %1968 = vmatprep.subr.bf16.mxu0 0
  %1969 = vmatpush1.bf16.msra.mxu0 0
  %1970 = vmatprep.subr.bf16.mxu0 0
  %1971 = vmatpush1.bf16.msra.mxu0 %v1920
  %1972 = vmatprep.subr.bf16.mxu0 0
  %1973 = vmatpush1.bf16.msra.mxu0 %v1919
  %1974 = vmatprep.subr.bf16.mxu0 0
  %1975 = vmatpush1.bf16.msra.mxu0 %v1918
  %1976 = vmatprep.subr.bf16.mxu0 0
  %1977 = vmatpush1.bf16.msra.mxu0 %v1917
  %1978 = vmatprep.subr.bf16.mxu0 0
  %1979 = vmatpush2.bf16.msra.mxu0 0
  %1980 = vmatprep.subr.bf16.mxu0 0
  %1981 = vmatpush2.bf16.msra.mxu0 0
  %1982 = vmatprep.subr.bf16.mxu0 0
  %1983 = vmatpush2.bf16.msra.mxu0 0
  %1984 = vmatprep.subr.bf16.mxu0 0
  %1985 = vmatpush2.bf16.msra.mxu0 0
  %1986 = vmatprep.subr.bf16.mxu0 0
  %1987 = vmatpush2.bf16.msra.mxu0 0
  %1988 = vmatprep.subr.bf16.mxu0 0
  %1989 = vmatpush2.bf16.msra.mxu0 0
  %1990 = vmatprep.subr.bf16.mxu0 0
  %1991 = vmatpush2.bf16.msra.mxu0 0
  %1992 = vmatprep.subr.bf16.mxu0 0
  %1993 = vmatpush2.bf16.msra.mxu0 0
  %1994 = vmatprep.mubr.bf16.mxu0 0
  %1995 = vmatmul.mubr.bf16.gmra.mxu0 %v1957
  %v1996 = vpop.f32.mrf.mxu0
  %v1997 = vadd.f32 %v1929, %v1996
  %v1998 = vpop.f32.mrf.mxu0
  %v1999 = vpop.f32.mrf.mxu0
  %v2000 = vadd.f32 %v1934, %v1999
  %v2001 = vpop.f32.mrf.mxu0
  %2002 = vmatprep.mubr.bf16.mxu0 0
  %2003 = vmatmul.mubr.bf16.gmra.mxu0 %v1960
  %v2004 = vpop.f32.mrf.mxu0
  %v2005 = vadd.f32 %v1939, %v2004
  %v2006 = vpop.f32.mrf.mxu0
  %v2007 = vpop.f32.mrf.mxu0
  %v2008 = vadd.f32 %v1944, %v2007
  %v2009 = vpop.f32.mrf.mxu0
  %2010 = vdwg.mxu0
  %v2011 = vadd.f32 %v1997, %v1904
  %v2012 = vadd.f32 %v2000, %v1905
  %v2013 = vadd.f32 %v2005, %v1906
  %v2014 = vadd.f32 %v2008, %v1907
  %v2015 = vadd.f32 %v2011, %v2012
  %v2016 = vadd.f32 %v2015, %v2013
  %v2017 = vadd.f32 %v2016, %v2014
  %v2018 = vrot.slane %v2017, 4
  %v2019 = vadd.f32 %v2017, %v2018
  %v2020 = vrot.slane %v2019, 2
  %v2021 = vadd.f32 %v2019, %v2020
  %v2022 = vrot.slane %v2021, 1
  %v2023 = vadd.f32 %v2021, %v2022
  %v2024 = vmul.f32 %v2023, %v1140
  %v2025 = vsub.f32 %v2011, %v2024
  %v2026 = vsub.f32 %v2012, %v2024
  %v2027 = vsub.f32 %v2013, %v2024
  %v2028 = vsub.f32 %v2014, %v2024
  %v2029 = vmul.f32 %v2025, %v2025
  %v2030 = vmul.f32 %v2026, %v2026
  %v2031 = vmul.f32 %v2027, %v2027
  %v2032 = vmul.f32 %v2028, %v2028
  %v2033 = vadd.f32 %v2029, %v2030
  %v2034 = vadd.f32 %v2033, %v2031
  %v2035 = vadd.f32 %v2034, %v2032
  %v2036 = vrot.slane %v2035, 4
  %v2037 = vadd.f32 %v2035, %v2036
  %v2038 = vrot.slane %v2037, 2
  %v2039 = vadd.f32 %v2037, %v2038
  %v2040 = vrot.slane %v2039, 1
  %v2041 = vadd.f32 %v2039, %v2040
  %v2042 = vmul.f32 %v2041, %v1140
  %v2043 = vadd.f32 %v2042, 1e-05
  %v2044 = vrsqrt.pop %v2043
  %v2045 = vmul.f32 %v2025, %v2044
  %v2046 = vmul.f32 %v2026, %v2044
  %v2047 = vmul.f32 %v2027, %v2044
  %v2048 = vmul.f32 %v2028, %v2044
  %s2049 = scalar_lea.vmem %s11, 32
  %v2050 = vld [vmem:[%s2049] sm:$0xff]
  %v2051 = vld [vmem:[%s2049 + $0x8] sm:$0xff]
  %v2052 = vld [vmem:[%s2049 + $0x10] sm:$0xff]
  %v2053 = vld [vmem:[%s2049 + $0x18] sm:$0xff]
  %2055 = vset.pattern.permute.xlu0 0
  %2056 = vperm.xlu0 %2055, %v2050
  %v2057 = vpop.permute.xlu0 %2056
  %2060 = vset.pattern.permute.xlu0 0
  %2061 = vperm.xlu0 %2060, %v2051
  %v2062 = vpop.permute.xlu0 %2061
  %2065 = vset.pattern.permute.xlu0 0
  %2066 = vperm.xlu0 %2065, %v2052
  %v2067 = vpop.permute.xlu0 %2066
  %2070 = vset.pattern.permute.xlu0 0
  %2071 = vperm.xlu0 %2070, %v2053
  %v2072 = vpop.permute.xlu0 %2071
  %v2074 = vmul.f32 %v2045, %v2057
  %v2075 = vmul.f32 %v2046, %v2062
  %v2076 = vmul.f32 %v2047, %v2067
  %v2077 = vmul.f32 %v2048, %v2072
  %s2078 = scalar_lea.vmem %s12, 32
  %v2079 = vld [vmem:[%s2078] sm:$0xff]
  %v2080 = vld [vmem:[%s2078 + $0x8] sm:$0xff]
  %v2081 = vld [vmem:[%s2078 + $0x10] sm:$0xff]
  %v2082 = vld [vmem:[%s2078 + $0x18] sm:$0xff]
  %2084 = vset.pattern.permute.xlu0 0
  %2085 = vperm.xlu0 %2084, %v2079
  %v2086 = vpop.permute.xlu0 %2085
  %2089 = vset.pattern.permute.xlu0 0
  %2090 = vperm.xlu0 %2089, %v2080
  %v2091 = vpop.permute.xlu0 %2090
  %2094 = vset.pattern.permute.xlu0 0
  %2095 = vperm.xlu0 %2094, %v2081
  %v2096 = vpop.permute.xlu0 %2095
  %2099 = vset.pattern.permute.xlu0 0
  %2100 = vperm.xlu0 %2099, %v2082
  %v2101 = vpop.permute.xlu0 %2100
  %v2103 = vadd.f32 %v2074, %v2086
  %v2104 = vadd.f32 %v2075, %v2091
  %v2105 = vadd.f32 %v2076, %v2096
  %v2106 = vadd.f32 %v2077, %v2101
  %v2107 = vmax.f32 %v2103, 0.0
  %v2108 = vmax.f32 %v2104, 0.0
  %v2109 = vmax.f32 %v2105, 0.0
  %v2110 = vmax.f32 %v2106, 0.0
  %2111 = vst [vmem:[#allocation2 + $0x20] sm:$0xff] %v2107
  %2112 = vst [vmem:[#allocation2 + $0x28] sm:$0xff] %v2108
  %2113 = vst [vmem:[#allocation2 + $0x30] sm:$0xff] %v2109
  %2114 = vst [vmem:[#allocation2 + $0x38] sm:$0xff] %v2110
  %v2115 = vld [vmem:[#allocation2 + $0x20] sm:$0xff]
  %v2116 = vld [vmem:[#allocation2 + $0x28] sm:$0xff]
  %v2117 = vld [vmem:[#allocation2 + $0x30] sm:$0xff]
  %v2118 = vld [vmem:[#allocation2 + $0x38] sm:$0xff]
  %v2119 = vpack.c.bf16 %v2116, %v2115
  %v2120 = vpack.c.bf16 %v2118, %v2117
  %v2122 = vsel %vm349, %v2119, 0
  %v2125 = vsel %vm349, %v2120, 0
  %2127 = vmatprep.subr.bf16.mxu0 0
  %2128 = vmatpush1.bf16.msra.mxu0 0
  %2129 = vmatprep.subr.bf16.mxu0 0
  %2130 = vmatpush1.bf16.msra.mxu0 0
  %2131 = vmatprep.subr.bf16.mxu0 0
  %2132 = vmatpush1.bf16.msra.mxu0 0
  %2133 = vmatprep.subr.bf16.mxu0 0
  %2134 = vmatpush1.bf16.msra.mxu0 0
  %2135 = vmatprep.subr.bf16.mxu0 0
  %2136 = vmatpush1.bf16.msra.mxu0 0
  %2137 = vmatprep.subr.bf16.mxu0 0
  %2138 = vmatpush1.bf16.msra.mxu0 0
  %2139 = vmatprep.subr.bf16.mxu0 0
  %2140 = vmatpush1.bf16.msra.mxu0 0
  %2141 = vmatprep.subr.bf16.mxu0 0
  %2142 = vmatpush1.bf16.msra.mxu0 %v347
  %2143 = vmatprep.subr.bf16.mxu0 0
  %2144 = vmatpush2.bf16.msra.mxu0 0
  %2145 = vmatprep.subr.bf16.mxu0 0
  %2146 = vmatpush2.bf16.msra.mxu0 0
  %2147 = vmatprep.subr.bf16.mxu0 0
  %2148 = vmatpush2.bf16.msra.mxu0 0
  %2149 = vmatprep.subr.bf16.mxu0 0
  %2150 = vmatpush2.bf16.msra.mxu0 0
  %2151 = vmatprep.subr.bf16.mxu0 0
  %2152 = vmatpush2.bf16.msra.mxu0 0
  %2153 = vmatprep.subr.bf16.mxu0 0
  %2154 = vmatpush2.bf16.msra.mxu0 0
  %2155 = vmatprep.subr.bf16.mxu0 0
  %2156 = vmatpush2.bf16.msra.mxu0 0
  %2157 = vmatprep.subr.bf16.mxu0 0
  %2158 = vmatpush2.bf16.msra.mxu0 0
  %2159 = vmatprep.mubr.bf16.mxu0 0
  %2160 = vmatmul.mubr.bf16.gmra.mxu0 %v2122
  %v2161 = vpop.f32.mrf.mxu0
  %v2162 = vadd.f32 0.0, %v2161
  %v2163 = vpop.f32.mrf.mxu0
  %v2164 = vpop.f32.mrf.mxu0
  %v2165 = vadd.f32 0.0, %v2164
  %v2166 = vpop.f32.mrf.mxu0
  %2167 = vmatprep.mubr.bf16.mxu0 0
  %2168 = vmatmul.mubr.bf16.gmra.mxu0 %v2125
  %v2169 = vpop.f32.mrf.mxu0
  %v2170 = vadd.f32 0.0, %v2169
  %v2171 = vpop.f32.mrf.mxu0
  %v2172 = vpop.f32.mrf.mxu0
  %v2173 = vadd.f32 0.0, %v2172
  %v2174 = vpop.f32.mrf.mxu0
  %2175 = vdwg.mxu0
  %2176 = vst.msk [vmem:[#allocation2] sm:$0xff] %vm349, %v2162
  %2177 = vst.msk [vmem:[#allocation2 + $0x8] sm:$0xff] %vm349, %v2165
  %2178 = vst.msk [vmem:[#allocation2 + $0x10] sm:$0xff] %vm349, %v2170
  %2179 = vst.msk [vmem:[#allocation2 + $0x18] sm:$0xff] %vm349, %v2173
  %v2180 = vld [vmem:[#allocation2 + $0x20] sm:$0xff]
  %v2181 = vld [vmem:[#allocation2 + $0x28] sm:$0xff]
  %v2182 = vld [vmem:[#allocation2 + $0x30] sm:$0xff]
  %v2183 = vld [vmem:[#allocation2 + $0x38] sm:$0xff]
  %v2184 = vpack.c.bf16 %v2181, %v2180
  %v2185 = vpack.c.bf16 %v2183, %v2182
  %2188 = vrot.lane.b32.xlu0 %v2184, 112
  %v2189 = vpop.permute.xlu0 %2188
  %2190 = vrot.lane.b32.xlu0 %v2185, 112
  %v2191 = vpop.permute.xlu0 %2190
  %v2193 = vsel %vm349, %v2189, 0
  %v2196 = vsel %vm349, %v2191, 0
  %2198 = vmatprep.subr.bf16.mxu0 0
  %2199 = vmatpush1.bf16.msra.mxu0 0
  %2200 = vmatprep.subr.bf16.mxu0 0
  %2201 = vmatpush1.bf16.msra.mxu0 0
  %2202 = vmatprep.subr.bf16.mxu0 0
  %2203 = vmatpush1.bf16.msra.mxu0 0
  %2204 = vmatprep.subr.bf16.mxu0 0
  %2205 = vmatpush1.bf16.msra.mxu0 0
  %2206 = vmatprep.subr.bf16.mxu0 0
  %2207 = vmatpush1.bf16.msra.mxu0 0
  %2208 = vmatprep.subr.bf16.mxu0 0
  %2209 = vmatpush1.bf16.msra.mxu0 0
  %2210 = vmatprep.subr.bf16.mxu0 0
  %2211 = vmatpush1.bf16.msra.mxu0 0
  %2212 = vmatprep.subr.bf16.mxu0 0
  %2213 = vmatpush1.bf16.msra.mxu0 %v347
  %2214 = vmatprep.subr.bf16.mxu0 0
  %2215 = vmatpush2.bf16.msra.mxu0 0
  %2216 = vmatprep.subr.bf16.mxu0 0
  %2217 = vmatpush2.bf16.msra.mxu0 0
  %2218 = vmatprep.subr.bf16.mxu0 0
  %2219 = vmatpush2.bf16.msra.mxu0 0
  %2220 = vmatprep.subr.bf16.mxu0 0
  %2221 = vmatpush2.bf16.msra.mxu0 0
  %2222 = vmatprep.subr.bf16.mxu0 0
  %2223 = vmatpush2.bf16.msra.mxu0 0
  %2224 = vmatprep.subr.bf16.mxu0 0
  %2225 = vmatpush2.bf16.msra.mxu0 0
  %2226 = vmatprep.subr.bf16.mxu0 0
  %2227 = vmatpush2.bf16.msra.mxu0 0
  %2228 = vmatprep.subr.bf16.mxu0 0
  %2229 = vmatpush2.bf16.msra.mxu0 0
  %2230 = vmatprep.mubr.bf16.mxu0 0
  %2231 = vmatmul.mubr.bf16.gmra.mxu0 %v2193
  %v2232 = vpop.f32.mrf.mxu0
  %v2233 = vadd.f32 0.0, %v2232
  %v2234 = vpop.f32.mrf.mxu0
  %v2235 = vpop.f32.mrf.mxu0
  %v2236 = vadd.f32 0.0, %v2235
  %v2237 = vpop.f32.mrf.mxu0
  %2238 = vmatprep.mubr.bf16.mxu0 0
  %2239 = vmatmul.mubr.bf16.gmra.mxu0 %v2196
  %v2240 = vpop.f32.mrf.mxu0
  %v2241 = vadd.f32 0.0, %v2240
  %v2242 = vpop.f32.mrf.mxu0
  %v2243 = vpop.f32.mrf.mxu0
  %v2244 = vadd.f32 0.0, %v2243
  %v2245 = vpop.f32.mrf.mxu0
  %2246 = vdwg.mxu0
  %2251 = vrot.lane.b32.xlu0 %v2233, 16
  %v2252 = vpop.permute.xlu0 %2251
  %2253 = vrot.lane.b32.xlu0 %v2236, 16
  %v2254 = vpop.permute.xlu0 %2253
  %2255 = vrot.lane.b32.xlu0 %v2241, 16
  %v2256 = vpop.permute.xlu0 %2255
  %2257 = vrot.lane.b32.xlu0 %v2244, 16
  %v2258 = vpop.permute.xlu0 %2257
  %2263 = vst.msk [vmem:[#allocation2] sm:$0xff] %vm492, %v2252
  %2264 = vst.msk [vmem:[#allocation2 + $0x8] sm:$0xff] %vm492, %v2254
  %2265 = vst.msk [vmem:[#allocation2 + $0x10] sm:$0xff] %vm492, %v2256
  %2266 = vst.msk [vmem:[#allocation2 + $0x18] sm:$0xff] %vm492, %v2258
  %v2267 = vld [vmem:[#allocation2 + $0x20] sm:$0xff]
  %v2268 = vld [vmem:[#allocation2 + $0x28] sm:$0xff]
  %v2269 = vld [vmem:[#allocation2 + $0x30] sm:$0xff]
  %v2270 = vld [vmem:[#allocation2 + $0x38] sm:$0xff]
  %v2271 = vpack.c.bf16 %v2268, %v2267
  %v2272 = vpack.c.bf16 %v2270, %v2269
  %2275 = vrot.lane.b32.xlu0 %v2271, 96
  %v2276 = vpop.permute.xlu0 %2275
  %2277 = vrot.lane.b32.xlu0 %v2272, 96
  %v2278 = vpop.permute.xlu0 %2277
  %v2280 = vsel %vm349, %v2276, 0
  %v2283 = vsel %vm349, %v2278, 0
  %2285 = vmatprep.subr.bf16.mxu0 0
  %2286 = vmatpush1.bf16.msra.mxu0 0
  %2287 = vmatprep.subr.bf16.mxu0 0
  %2288 = vmatpush1.bf16.msra.mxu0 0
  %2289 = vmatprep.subr.bf16.mxu0 0
  %2290 = vmatpush1.bf16.msra.mxu0 0
  %2291 = vmatprep.subr.bf16.mxu0 0
  %2292 = vmatpush1.bf16.msra.mxu0 0
  %2293 = vmatprep.subr.bf16.mxu0 0
  %2294 = vmatpush1.bf16.msra.mxu0 0
  %2295 = vmatprep.subr.bf16.mxu0 0
  %2296 = vmatpush1.bf16.msra.mxu0 0
  %2297 = vmatprep.subr.bf16.mxu0 0
  %2298 = vmatpush1.bf16.msra.mxu0 0
  %2299 = vmatprep.subr.bf16.mxu0 0
  %2300 = vmatpush1.bf16.msra.mxu0 %v347
  %2301 = vmatprep.subr.bf16.mxu0 0
  %2302 = vmatpush2.bf16.msra.mxu0 0
  %2303 = vmatprep.subr.bf16.mxu0 0
  %2304 = vmatpush2.bf16.msra.mxu0 0
  %2305 = vmatprep.subr.bf16.mxu0 0
  %2306 = vmatpush2.bf16.msra.mxu0 0
  %2307 = vmatprep.subr.bf16.mxu0 0
  %2308 = vmatpush2.bf16.msra.mxu0 0
  %2309 = vmatprep.subr.bf16.mxu0 0
  %2310 = vmatpush2.bf16.msra.mxu0 0
  %2311 = vmatprep.subr.bf16.mxu0 0
  %2312 = vmatpush2.bf16.msra.mxu0 0
  %2313 = vmatprep.subr.bf16.mxu0 0
  %2314 = vmatpush2.bf16.msra.mxu0 0
  %2315 = vmatprep.subr.bf16.mxu0 0
  %2316 = vmatpush2.bf16.msra.mxu0 0
  %2317 = vmatprep.mubr.bf16.mxu0 0
  %2318 = vmatmul.mubr.bf16.gmra.mxu0 %v2280
  %v2319 = vpop.f32.mrf.mxu0
  %v2320 = vadd.f32 0.0, %v2319
  %v2321 = vpop.f32.mrf.mxu0
  %v2322 = vpop.f32.mrf.mxu0
  %v2323 = vadd.f32 0.0, %v2322
  %v2324 = vpop.f32.mrf.mxu0
  %2325 = vmatprep.mubr.bf16.mxu0 0
  %2326 = vmatmul.mubr.bf16.gmra.mxu0 %v2283
  %v2327 = vpop.f32.mrf.mxu0
  %v2328 = vadd.f32 0.0, %v2327
  %v2329 = vpop.f32.mrf.mxu0
  %v2330 = vpop.f32.mrf.mxu0
  %v2331 = vadd.f32 0.0, %v2330
  %v2332 = vpop.f32.mrf.mxu0
  %2333 = vdwg.mxu0
  %2338 = vrot.lane.b32.xlu0 %v2320, 32
  %v2339 = vpop.permute.xlu0 %2338
  %2340 = vrot.lane.b32.xlu0 %v2323, 32
  %v2341 = vpop.permute.xlu0 %2340
  %2342 = vrot.lane.b32.xlu0 %v2328, 32
  %v2343 = vpop.permute.xlu0 %2342
  %2344 = vrot.lane.b32.xlu0 %v2331, 32
  %v2345 = vpop.permute.xlu0 %2344
  %2350 = vst.msk [vmem:[#allocation2] sm:$0xff] %vm580, %v2339
  %2351 = vst.msk [vmem:[#allocation2 + $0x8] sm:$0xff] %vm580, %v2341
  %2352 = vst.msk [vmem:[#allocation2 + $0x10] sm:$0xff] %vm580, %v2343
  %2353 = vst.msk [vmem:[#allocation2 + $0x18] sm:$0xff] %vm580, %v2345
  %v2354 = vld [vmem:[#allocation2 + $0x20] sm:$0xff]
  %v2355 = vld [vmem:[#allocation2 + $0x28] sm:$0xff]
  %v2356 = vld [vmem:[#allocation2 + $0x30] sm:$0xff]
  %v2357 = vld [vmem:[#allocation2 + $0x38] sm:$0xff]
  %v2358 = vpack.c.bf16 %v2355, %v2354
  %v2359 = vpack.c.bf16 %v2357, %v2356
  %2362 = vrot.lane.b32.xlu0 %v2358, 80
  %v2363 = vpop.permute.xlu0 %2362
  %2364 = vrot.lane.b32.xlu0 %v2359, 80
  %v2365 = vpop.permute.xlu0 %2364
  %v2367 = vsel %vm349, %v2363, 0
  %v2370 = vsel %vm349, %v2365, 0
  %2372 = vmatprep.subr.bf16.mxu0 0
  %2373 = vmatpush1.bf16.msra.mxu0 0
  %2374 = vmatprep.subr.bf16.mxu0 0
  %2375 = vmatpush1.bf16.msra.mxu0 0
  %2376 = vmatprep.subr.bf16.mxu0 0
  %2377 = vmatpush1.bf16.msra.mxu0 0
  %2378 = vmatprep.subr.bf16.mxu0 0
  %2379 = vmatpush1.bf16.msra.mxu0 0
  %2380 = vmatprep.subr.bf16.mxu0 0
  %2381 = vmatpush1.bf16.msra.mxu0 0
  %2382 = vmatprep.subr.bf16.mxu0 0
  %2383 = vmatpush1.bf16.msra.mxu0 0
  %2384 = vmatprep.subr.bf16.mxu0 0
  %2385 = vmatpush1.bf16.msra.mxu0 0
  %2386 = vmatprep.subr.bf16.mxu0 0
  %2387 = vmatpush1.bf16.msra.mxu0 %v347
  %2388 = vmatprep.subr.bf16.mxu0 0
  %2389 = vmatpush2.bf16.msra.mxu0 0
  %2390 = vmatprep.subr.bf16.mxu0 0
  %2391 = vmatpush2.bf16.msra.mxu0 0
  %2392 = vmatprep.subr.bf16.mxu0 0
  %2393 = vmatpush2.bf16.msra.mxu0 0
  %2394 = vmatprep.subr.bf16.mxu0 0
  %2395 = vmatpush2.bf16.msra.mxu0 0
  %2396 = vmatprep.subr.bf16.mxu0 0
  %2397 = vmatpush2.bf16.msra.mxu0 0
  %2398 = vmatprep.subr.bf16.mxu0 0
  %2399 = vmatpush2.bf16.msra.mxu0 0
  %2400 = vmatprep.subr.bf16.mxu0 0
  %2401 = vmatpush2.bf16.msra.mxu0 0
  %2402 = vmatprep.subr.bf16.mxu0 0
  %2403 = vmatpush2.bf16.msra.mxu0 0
  %2404 = vmatprep.mubr.bf16.mxu0 0
  %2405 = vmatmul.mubr.bf16.gmra.mxu0 %v2367
  %v2406 = vpop.f32.mrf.mxu0
  %v2407 = vadd.f32 0.0, %v2406
  %v2408 = vpop.f32.mrf.mxu0
  %v2409 = vpop.f32.mrf.mxu0
  %v2410 = vadd.f32 0.0, %v2409
  %v2411 = vpop.f32.mrf.mxu0
  %2412 = vmatprep.mubr.bf16.mxu0 0
  %2413 = vmatmul.mubr.bf16.gmra.mxu0 %v2370
  %v2414 = vpop.f32.mrf.mxu0
  %v2415 = vadd.f32 0.0, %v2414
  %v2416 = vpop.f32.mrf.mxu0
  %v2417 = vpop.f32.mrf.mxu0
  %v2418 = vadd.f32 0.0, %v2417
  %v2419 = vpop.f32.mrf.mxu0
  %2420 = vdwg.mxu0
  %2425 = vrot.lane.b32.xlu0 %v2407, 48
  %v2426 = vpop.permute.xlu0 %2425
  %2427 = vrot.lane.b32.xlu0 %v2410, 48
  %v2428 = vpop.permute.xlu0 %2427
  %2429 = vrot.lane.b32.xlu0 %v2415, 48
  %v2430 = vpop.permute.xlu0 %2429
  %2431 = vrot.lane.b32.xlu0 %v2418, 48
  %v2432 = vpop.permute.xlu0 %2431
  %2437 = vst.msk [vmem:[#allocation2] sm:$0xff] %vm668, %v2426
  %2438 = vst.msk [vmem:[#allocation2 + $0x8] sm:$0xff] %vm668, %v2428
  %2439 = vst.msk [vmem:[#allocation2 + $0x10] sm:$0xff] %vm668, %v2430
  %2440 = vst.msk [vmem:[#allocation2 + $0x18] sm:$0xff] %vm668, %v2432
  %v2441 = vld [vmem:[#allocation2 + $0x20] sm:$0xff]
  %v2442 = vld [vmem:[#allocation2 + $0x28] sm:$0xff]
  %v2443 = vld [vmem:[#allocation2 + $0x30] sm:$0xff]
  %v2444 = vld [vmem:[#allocation2 + $0x38] sm:$0xff]
  %v2445 = vpack.c.bf16 %v2442, %v2441
  %v2446 = vpack.c.bf16 %v2444, %v2443
  %2449 = vrot.lane.b32.xlu0 %v2445, 64
  %v2450 = vpop.permute.xlu0 %2449
  %2451 = vrot.lane.b32.xlu0 %v2446, 64
  %v2452 = vpop.permute.xlu0 %2451
  %v2454 = vsel %vm349, %v2450, 0
  %v2457 = vsel %vm349, %v2452, 0
  %2459 = vmatprep.subr.bf16.mxu0 0
  %2460 = vmatpush1.bf16.msra.mxu0 0
  %2461 = vmatprep.subr.bf16.mxu0 0
  %2462 = vmatpush1.bf16.msra.mxu0 0
  %2463 = vmatprep.subr.bf16.mxu0 0
  %2464 = vmatpush1.bf16.msra.mxu0 0
  %2465 = vmatprep.subr.bf16.mxu0 0
  %2466 = vmatpush1.bf16.msra.mxu0 0
  %2467 = vmatprep.subr.bf16.mxu0 0
  %2468 = vmatpush1.bf16.msra.mxu0 0
  %2469 = vmatprep.subr.bf16.mxu0 0
  %2470 = vmatpush1.bf16.msra.mxu0 0
  %2471 = vmatprep.subr.bf16.mxu0 0
  %2472 = vmatpush1.bf16.msra.mxu0 0
  %2473 = vmatprep.subr.bf16.mxu0 0
  %2474 = vmatpush1.bf16.msra.mxu0 %v347
  %2475 = vmatprep.subr.bf16.mxu0 0
  %2476 = vmatpush2.bf16.msra.mxu0 0
  %2477 = vmatprep.subr.bf16.mxu0 0
  %2478 = vmatpush2.bf16.msra.mxu0 0
  %2479 = vmatprep.subr.bf16.mxu0 0
  %2480 = vmatpush2.bf16.msra.mxu0 0
  %2481 = vmatprep.subr.bf16.mxu0 0
  %2482 = vmatpush2.bf16.msra.mxu0 0
  %2483 = vmatprep.subr.bf16.mxu0 0
  %2484 = vmatpush2.bf16.msra.mxu0 0
  %2485 = vmatprep.subr.bf16.mxu0 0
  %2486 = vmatpush2.bf16.msra.mxu0 0
  %2487 = vmatprep.subr.bf16.mxu0 0
  %2488 = vmatpush2.bf16.msra.mxu0 0
  %2489 = vmatprep.subr.bf16.mxu0 0
  %2490 = vmatpush2.bf16.msra.mxu0 0
  %2491 = vmatprep.mubr.bf16.mxu0 0
  %2492 = vmatmul.mubr.bf16.gmra.mxu0 %v2454
  %v2493 = vpop.f32.mrf.mxu0
  %v2494 = vadd.f32 0.0, %v2493
  %v2495 = vpop.f32.mrf.mxu0
  %v2496 = vpop.f32.mrf.mxu0
  %v2497 = vadd.f32 0.0, %v2496
  %v2498 = vpop.f32.mrf.mxu0
  %2499 = vmatprep.mubr.bf16.mxu0 0
  %2500 = vmatmul.mubr.bf16.gmra.mxu0 %v2457
  %v2501 = vpop.f32.mrf.mxu0
  %v2502 = vadd.f32 0.0, %v2501
  %v2503 = vpop.f32.mrf.mxu0
  %v2504 = vpop.f32.mrf.mxu0
  %v2505 = vadd.f32 0.0, %v2504
  %v2506 = vpop.f32.mrf.mxu0
  %2507 = vdwg.mxu0
  %2512 = vrot.lane.b32.xlu0 %v2494, 64
  %v2513 = vpop.permute.xlu0 %2512
  %2514 = vrot.lane.b32.xlu0 %v2497, 64
  %v2515 = vpop.permute.xlu0 %2514
  %2516 = vrot.lane.b32.xlu0 %v2502, 64
  %v2517 = vpop.permute.xlu0 %2516
  %2518 = vrot.lane.b32.xlu0 %v2505, 64
  %v2519 = vpop.permute.xlu0 %2518
  %2524 = vst.msk [vmem:[#allocation2] sm:$0xff] %vm756, %v2513
  %2525 = vst.msk [vmem:[#allocation2 + $0x8] sm:$0xff] %vm756, %v2515
  %2526 = vst.msk [vmem:[#allocation2 + $0x10] sm:$0xff] %vm756, %v2517
  %2527 = vst.msk [vmem:[#allocation2 + $0x18] sm:$0xff] %vm756, %v2519
  %v2528 = vld [vmem:[#allocation2 + $0x20] sm:$0xff]
  %v2529 = vld [vmem:[#allocation2 + $0x28] sm:$0xff]
  %v2530 = vld [vmem:[#allocation2 + $0x30] sm:$0xff]
  %v2531 = vld [vmem:[#allocation2 + $0x38] sm:$0xff]
  %v2532 = vpack.c.bf16 %v2529, %v2528
  %v2533 = vpack.c.bf16 %v2531, %v2530
  %2536 = vrot.lane.b32.xlu0 %v2532, 48
  %v2537 = vpop.permute.xlu0 %2536
  %2538 = vrot.lane.b32.xlu0 %v2533, 48
  %v2539 = vpop.permute.xlu0 %2538
  %v2541 = vsel %vm349, %v2537, 0
  %v2544 = vsel %vm349, %v2539, 0
  %2546 = vmatprep.subr.bf16.mxu0 0
  %2547 = vmatpush1.bf16.msra.mxu0 0
  %2548 = vmatprep.subr.bf16.mxu0 0
  %2549 = vmatpush1.bf16.msra.mxu0 0
  %2550 = vmatprep.subr.bf16.mxu0 0
  %2551 = vmatpush1.bf16.msra.mxu0 0
  %2552 = vmatprep.subr.bf16.mxu0 0
  %2553 = vmatpush1.bf16.msra.mxu0 0
  %2554 = vmatprep.subr.bf16.mxu0 0
  %2555 = vmatpush1.bf16.msra.mxu0 0
  %2556 = vmatprep.subr.bf16.mxu0 0
  %2557 = vmatpush1.bf16.msra.mxu0 0
  %2558 = vmatprep.subr.bf16.mxu0 0
  %2559 = vmatpush1.bf16.msra.mxu0 0
  %2560 = vmatprep.subr.bf16.mxu0 0
  %2561 = vmatpush1.bf16.msra.mxu0 %v347
  %2562 = vmatprep.subr.bf16.mxu0 0
  %2563 = vmatpush2.bf16.msra.mxu0 0
  %2564 = vmatprep.subr.bf16.mxu0 0
  %2565 = vmatpush2.bf16.msra.mxu0 0
  %2566 = vmatprep.subr.bf16.mxu0 0
  %2567 = vmatpush2.bf16.msra.mxu0 0
  %2568 = vmatprep.subr.bf16.mxu0 0
  %2569 = vmatpush2.bf16.msra.mxu0 0
  %2570 = vmatprep.subr.bf16.mxu0 0
  %2571 = vmatpush2.bf16.msra.mxu0 0
  %2572 = vmatprep.subr.bf16.mxu0 0
  %2573 = vmatpush2.bf16.msra.mxu0 0
  %2574 = vmatprep.subr.bf16.mxu0 0
  %2575 = vmatpush2.bf16.msra.mxu0 0
  %2576 = vmatprep.subr.bf16.mxu0 0
  %2577 = vmatpush2.bf16.msra.mxu0 0
  %2578 = vmatprep.mubr.bf16.mxu0 0
  %2579 = vmatmul.mubr.bf16.gmra.mxu0 %v2541
  %v2580 = vpop.f32.mrf.mxu0
  %v2581 = vadd.f32 0.0, %v2580
  %v2582 = vpop.f32.mrf.mxu0
  %v2583 = vpop.f32.mrf.mxu0
  %v2584 = vadd.f32 0.0, %v2583
  %v2585 = vpop.f32.mrf.mxu0
  %2586 = vmatprep.mubr.bf16.mxu0 0
  %2587 = vmatmul.mubr.bf16.gmra.mxu0 %v2544
  %v2588 = vpop.f32.mrf.mxu0
  %v2589 = vadd.f32 0.0, %v2588
  %v2590 = vpop.f32.mrf.mxu0
  %v2591 = vpop.f32.mrf.mxu0
  %v2592 = vadd.f32 0.0, %v2591
  %v2593 = vpop.f32.mrf.mxu0
  %2594 = vdwg.mxu0
  %2599 = vrot.lane.b32.xlu0 %v2581, 80
  %v2600 = vpop.permute.xlu0 %2599
  %2601 = vrot.lane.b32.xlu0 %v2584, 80
  %v2602 = vpop.permute.xlu0 %2601
  %2603 = vrot.lane.b32.xlu0 %v2589, 80
  %v2604 = vpop.permute.xlu0 %2603
  %2605 = vrot.lane.b32.xlu0 %v2592, 80
  %v2606 = vpop.permute.xlu0 %2605
  %2611 = vst.msk [vmem:[#allocation2] sm:$0xff] %vm844, %v2600
  %2612 = vst.msk [vmem:[#allocation2 + $0x8] sm:$0xff] %vm844, %v2602
  %2613 = vst.msk [vmem:[#allocation2 + $0x10] sm:$0xff] %vm844, %v2604
  %2614 = vst.msk [vmem:[#allocation2 + $0x18] sm:$0xff] %vm844, %v2606
  %v2615 = vld [vmem:[#allocation2 + $0x20] sm:$0xff]
  %v2616 = vld [vmem:[#allocation2 + $0x28] sm:$0xff]
  %v2617 = vld [vmem:[#allocation2 + $0x30] sm:$0xff]
  %v2618 = vld [vmem:[#allocation2 + $0x38] sm:$0xff]
  %v2619 = vpack.c.bf16 %v2616, %v2615
  %v2620 = vpack.c.bf16 %v2618, %v2617
  %2623 = vrot.lane.b32.xlu0 %v2619, 32
  %v2624 = vpop.permute.xlu0 %2623
  %2625 = vrot.lane.b32.xlu0 %v2620, 32
  %v2626 = vpop.permute.xlu0 %2625
  %v2628 = vsel %vm349, %v2624, 0
  %v2631 = vsel %vm349, %v2626, 0
  %2633 = vmatprep.subr.bf16.mxu0 0
  %2634 = vmatpush1.bf16.msra.mxu0 0
  %2635 = vmatprep.subr.bf16.mxu0 0
  %2636 = vmatpush1.bf16.msra.mxu0 0
  %2637 = vmatprep.subr.bf16.mxu0 0
  %2638 = vmatpush1.bf16.msra.mxu0 0
  %2639 = vmatprep.subr.bf16.mxu0 0
  %2640 = vmatpush1.bf16.msra.mxu0 0
  %2641 = vmatprep.subr.bf16.mxu0 0
  %2642 = vmatpush1.bf16.msra.mxu0 0
  %2643 = vmatprep.subr.bf16.mxu0 0
  %2644 = vmatpush1.bf16.msra.mxu0 0
  %2645 = vmatprep.subr.bf16.mxu0 0
  %2646 = vmatpush1.bf16.msra.mxu0 0
  %2647 = vmatprep.subr.bf16.mxu0 0
  %2648 = vmatpush1.bf16.msra.mxu0 %v347
  %2649 = vmatprep.subr.bf16.mxu0 0
  %2650 = vmatpush2.bf16.msra.mxu0 0
  %2651 = vmatprep.subr.bf16.mxu0 0
  %2652 = vmatpush2.bf16.msra.mxu0 0
  %2653 = vmatprep.subr.bf16.mxu0 0
  %2654 = vmatpush2.bf16.msra.mxu0 0
  %2655 = vmatprep.subr.bf16.mxu0 0
  %2656 = vmatpush2.bf16.msra.mxu0 0
  %2657 = vmatprep.subr.bf16.mxu0 0
  %2658 = vmatpush2.bf16.msra.mxu0 0
  %2659 = vmatprep.subr.bf16.mxu0 0
  %2660 = vmatpush2.bf16.msra.mxu0 0
  %2661 = vmatprep.subr.bf16.mxu0 0
  %2662 = vmatpush2.bf16.msra.mxu0 0
  %2663 = vmatprep.subr.bf16.mxu0 0
  %2664 = vmatpush2.bf16.msra.mxu0 0
  %2665 = vmatprep.mubr.bf16.mxu0 0
  %2666 = vmatmul.mubr.bf16.gmra.mxu0 %v2628
  %v2667 = vpop.f32.mrf.mxu0
  %v2668 = vadd.f32 0.0, %v2667
  %v2669 = vpop.f32.mrf.mxu0
  %v2670 = vpop.f32.mrf.mxu0
  %v2671 = vadd.f32 0.0, %v2670
  %v2672 = vpop.f32.mrf.mxu0
  %2673 = vmatprep.mubr.bf16.mxu0 0
  %2674 = vmatmul.mubr.bf16.gmra.mxu0 %v2631
  %v2675 = vpop.f32.mrf.mxu0
  %v2676 = vadd.f32 0.0, %v2675
  %v2677 = vpop.f32.mrf.mxu0
  %v2678 = vpop.f32.mrf.mxu0
  %v2679 = vadd.f32 0.0, %v2678
  %v2680 = vpop.f32.mrf.mxu0
  %2681 = vdwg.mxu0
  %2686 = vrot.lane.b32.xlu0 %v2668, 96
  %v2687 = vpop.permute.xlu0 %2686
  %2688 = vrot.lane.b32.xlu0 %v2671, 96
  %v2689 = vpop.permute.xlu0 %2688
  %2690 = vrot.lane.b32.xlu0 %v2676, 96
  %v2691 = vpop.permute.xlu0 %2690
  %2692 = vrot.lane.b32.xlu0 %v2679, 96
  %v2693 = vpop.permute.xlu0 %2692
  %2698 = vst.msk [vmem:[#allocation2] sm:$0xff] %vm932, %v2687
  %2699 = vst.msk [vmem:[#allocation2 + $0x8] sm:$0xff] %vm932, %v2689
  %2700 = vst.msk [vmem:[#allocation2 + $0x10] sm:$0xff] %vm932, %v2691
  %2701 = vst.msk [vmem:[#allocation2 + $0x18] sm:$0xff] %vm932, %v2693
  %v2702 = vld [vmem:[#allocation2 + $0x20] sm:$0xff]
  %v2703 = vld [vmem:[#allocation2 + $0x28] sm:$0xff]
  %v2704 = vld [vmem:[#allocation2 + $0x30] sm:$0xff]
  %v2705 = vld [vmem:[#allocation2 + $0x38] sm:$0xff]
  %v2706 = vpack.c.bf16 %v2703, %v2702
  %v2707 = vpack.c.bf16 %v2705, %v2704
  %2710 = vrot.lane.b32.xlu0 %v2706, 16
  %v2711 = vpop.permute.xlu0 %2710
  %2712 = vrot.lane.b32.xlu0 %v2707, 16
  %v2713 = vpop.permute.xlu0 %2712
  %v2715 = vsel %vm349, %v2711, 0
  %v2718 = vsel %vm349, %v2713, 0
  %2720 = vmatprep.subr.bf16.mxu0 0
  %2721 = vmatpush1.bf16.msra.mxu0 0
  %2722 = vmatprep.subr.bf16.mxu0 0
  %2723 = vmatpush1.bf16.msra.mxu0 0
  %2724 = vmatprep.subr.bf16.mxu0 0
  %2725 = vmatpush1.bf16.msra.mxu0 0
  %2726 = vmatprep.subr.bf16.mxu0 0
  %2727 = vmatpush1.bf16.msra.mxu0 0
  %2728 = vmatprep.subr.bf16.mxu0 0
  %2729 = vmatpush1.bf16.msra.mxu0 0
  %2730 = vmatprep.subr.bf16.mxu0 0
  %2731 = vmatpush1.bf16.msra.mxu0 0
  %2732 = vmatprep.subr.bf16.mxu0 0
  %2733 = vmatpush1.bf16.msra.mxu0 0
  %2734 = vmatprep.subr.bf16.mxu0 0
  %2735 = vmatpush1.bf16.msra.mxu0 %v347
  %2736 = vmatprep.subr.bf16.mxu0 0
  %2737 = vmatpush2.bf16.msra.mxu0 0
  %2738 = vmatprep.subr.bf16.mxu0 0
  %2739 = vmatpush2.bf16.msra.mxu0 0
  %2740 = vmatprep.subr.bf16.mxu0 0
  %2741 = vmatpush2.bf16.msra.mxu0 0
  %2742 = vmatprep.subr.bf16.mxu0 0
  %2743 = vmatpush2.bf16.msra.mxu0 0
  %2744 = vmatprep.subr.bf16.mxu0 0
  %2745 = vmatpush2.bf16.msra.mxu0 0
  %2746 = vmatprep.subr.bf16.mxu0 0
  %2747 = vmatpush2.bf16.msra.mxu0 0
  %2748 = vmatprep.subr.bf16.mxu0 0
  %2749 = vmatpush2.bf16.msra.mxu0 0
  %2750 = vmatprep.subr.bf16.mxu0 0
  %2751 = vmatpush2.bf16.msra.mxu0 0
  %2752 = vmatprep.mubr.bf16.mxu0 0
  %2753 = vmatmul.mubr.bf16.gmra.mxu0 %v2715
  %v2754 = vpop.f32.mrf.mxu0
  %v2755 = vadd.f32 0.0, %v2754
  %v2756 = vpop.f32.mrf.mxu0
  %v2757 = vpop.f32.mrf.mxu0
  %v2758 = vadd.f32 0.0, %v2757
  %v2759 = vpop.f32.mrf.mxu0
  %2760 = vmatprep.mubr.bf16.mxu0 0
  %2761 = vmatmul.mubr.bf16.gmra.mxu0 %v2718
  %v2762 = vpop.f32.mrf.mxu0
  %v2763 = vadd.f32 0.0, %v2762
  %v2764 = vpop.f32.mrf.mxu0
  %v2765 = vpop.f32.mrf.mxu0
  %v2766 = vadd.f32 0.0, %v2765
  %v2767 = vpop.f32.mrf.mxu0
  %2768 = vdwg.mxu0
  %2773 = vrot.lane.b32.xlu0 %v2755, 112
  %v2774 = vpop.permute.xlu0 %2773
  %2775 = vrot.lane.b32.xlu0 %v2758, 112
  %v2776 = vpop.permute.xlu0 %2775
  %2777 = vrot.lane.b32.xlu0 %v2763, 112
  %v2778 = vpop.permute.xlu0 %2777
  %2779 = vrot.lane.b32.xlu0 %v2766, 112
  %v2780 = vpop.permute.xlu0 %2779
  %2785 = vst.msk [vmem:[#allocation2] sm:$0xff] %vm1020, %v2774
  %2786 = vst.msk [vmem:[#allocation2 + $0x8] sm:$0xff] %vm1020, %v2776
  %2787 = vst.msk [vmem:[#allocation2 + $0x10] sm:$0xff] %vm1020, %v2778
  %2788 = vst.msk [vmem:[#allocation2 + $0x18] sm:$0xff] %vm1020, %v2780
  %s2789 = scalar_lea.vmem %s9, 32
  %v2790 = vld [vmem:[%s2789] sm:$0xf]
  %v2791 = vld [vmem:[%s2789 + $0x4] sm:$0xf]
  %v2792 = vld [vmem:[%s2789 + $0x8] sm:$0xf]
  %v2793 = vld [vmem:[%s2789 + $0xc] sm:$0xf]
  %v2794 = vld [vmem:[#allocation2] sm:$0xff]
  %v2795 = vld [vmem:[#allocation2 + $0x8] sm:$0xff]
  %v2796 = vld [vmem:[#allocation2 + $0x10] sm:$0xff]
  %v2797 = vld [vmem:[#allocation2 + $0x18] sm:$0xff]
  %v2798 = vld [vmem:[#allocation2 + $0x20] sm:$0xff]
  %v2799 = vld [vmem:[#allocation2 + $0x28] sm:$0xff]
  %v2800 = vld [vmem:[#allocation2 + $0x30] sm:$0xff]
  %v2801 = vld [vmem:[#allocation2 + $0x38] sm:$0xff]
  %v2802 = vpack.c.bf16 %v2795, %v2794
  %v2803 = vpack.c.bf16 %v2797, %v2796
  %v2804 = vpack.c.bf16 %v2799, %v2798
  %v2805 = vpack.c.bf16 %v2801, %v2800
  %s2806 = scalar_lea.vmem %s10, 64
  %v2807 = vld [vmem:[%s2806] sm:$0xff]
  %v2808 = vld [vmem:[%s2806 + $0x8] sm:$0xff]
  %v2809 = vld [vmem:[%s2806 + $0x10] sm:$0xff]
  %v2810 = vld [vmem:[%s2806 + $0x18] sm:$0xff]
  %2812 = vset.pattern.permute.xlu0 0
  %2813 = vperm.xlu0 %2812, %v2807
  %v2814 = vpop.permute.xlu0 %2813
  %2817 = vset.pattern.permute.xlu0 0
  %2818 = vperm.xlu0 %2817, %v2808
  %v2819 = vpop.permute.xlu0 %2818
  %2822 = vset.pattern.permute.xlu0 0
  %2823 = vperm.xlu0 %2822, %v2809
  %v2824 = vpop.permute.xlu0 %2823
  %2827 = vset.pattern.permute.xlu0 0
  %2828 = vperm.xlu0 %2827, %v2810
  %v2829 = vpop.permute.xlu0 %2828
  %v2835 = vunpack.c.l.b16 %v2790
  %v2836 = vunpack.c.l.b16 %v2791
  %v2837 = vunpack.c.l.b16 %v2792
  %v2838 = vunpack.c.l.b16 %v2793
  %v2839 = vpack.c.b16 %v2836, %v2835
  %v2840 = vpack.c.b16 %v2838, %v2837
  %v2842 = vsel %vm1075, %v2839, 0
  %v2845 = vsel %vm1075, %v2840, 0
  %2847 = vmatprep.subr.bf16.mxu0 0
  %2848 = vmatpush1.bf16.msra.mxu0 0
  %2849 = vmatprep.subr.bf16.mxu0 0
  %2850 = vmatpush1.bf16.msra.mxu0 0
  %2851 = vmatprep.subr.bf16.mxu0 0
  %2852 = vmatpush1.bf16.msra.mxu0 0
  %2853 = vmatprep.subr.bf16.mxu0 0
  %2854 = vmatpush1.bf16.msra.mxu0 0
  %2855 = vmatprep.subr.bf16.mxu0 0
  %2856 = vmatpush1.bf16.msra.mxu0 %v2805
  %2857 = vmatprep.subr.bf16.mxu0 0
  %2858 = vmatpush1.bf16.msra.mxu0 %v2804
  %2859 = vmatprep.subr.bf16.mxu0 0
  %2860 = vmatpush1.bf16.msra.mxu0 %v2803
  %2861 = vmatprep.subr.bf16.mxu0 0
  %2862 = vmatpush1.bf16.msra.mxu0 %v2802
  %2863 = vmatprep.subr.bf16.mxu0 0
  %2864 = vmatpush2.bf16.msra.mxu0 0
  %2865 = vmatprep.subr.bf16.mxu0 0
  %2866 = vmatpush2.bf16.msra.mxu0 0
  %2867 = vmatprep.subr.bf16.mxu0 0
  %2868 = vmatpush2.bf16.msra.mxu0 0
  %2869 = vmatprep.subr.bf16.mxu0 0
  %2870 = vmatpush2.bf16.msra.mxu0 0
  %2871 = vmatprep.subr.bf16.mxu0 0
  %2872 = vmatpush2.bf16.msra.mxu0 0
  %2873 = vmatprep.subr.bf16.mxu0 0
  %2874 = vmatpush2.bf16.msra.mxu0 0
  %2875 = vmatprep.subr.bf16.mxu0 0
  %2876 = vmatpush2.bf16.msra.mxu0 0
  %2877 = vmatprep.subr.bf16.mxu0 0
  %2878 = vmatpush2.bf16.msra.mxu0 0
  %2879 = vmatprep.mubr.bf16.mxu0 0
  %2880 = vmatmul.mubr.bf16.gmra.mxu0 %v2842
  %v2881 = vpop.f32.mrf.mxu0
  %v2882 = vadd.f32 %v2814, %v2881
  %v2883 = vpop.f32.mrf.mxu0
  %v2884 = vpop.f32.mrf.mxu0
  %v2885 = vadd.f32 %v2819, %v2884
  %v2886 = vpop.f32.mrf.mxu0
  %2887 = vmatprep.mubr.bf16.mxu0 0
  %2888 = vmatmul.mubr.bf16.gmra.mxu0 %v2845
  %v2889 = vpop.f32.mrf.mxu0
  %v2890 = vadd.f32 %v2824, %v2889
  %v2891 = vpop.f32.mrf.mxu0
  %v2892 = vpop.f32.mrf.mxu0
  %v2893 = vadd.f32 %v2829, %v2892
  %v2894 = vpop.f32.mrf.mxu0
  %2895 = vdwg.mxu0
  %v2896 = vadd.f32 %v2882, %v2885
  %v2897 = vadd.f32 %v2896, %v2890
  %v2898 = vadd.f32 %v2897, %v2893
  %v2899 = vrot.slane %v2898, 4
  %v2900 = vadd.f32 %v2898, %v2899
  %v2901 = vrot.slane %v2900, 2
  %v2902 = vadd.f32 %v2900, %v2901
  %v2903 = vrot.slane %v2902, 1
  %v2904 = vadd.f32 %v2902, %v2903
  %v2905 = vmul.f32 %v2904, %v1140
  %v2906 = vsub.f32 %v2882, %v2905
  %v2907 = vsub.f32 %v2885, %v2905
  %v2908 = vsub.f32 %v2890, %v2905
  %v2909 = vsub.f32 %v2893, %v2905
  %v2910 = vmul.f32 %v2906, %v2906
  %v2911 = vmul.f32 %v2907, %v2907
  %v2912 = vmul.f32 %v2908, %v2908
  %v2913 = vmul.f32 %v2909, %v2909
  %v2914 = vadd.f32 %v2910, %v2911
  %v2915 = vadd.f32 %v2914, %v2912
  %v2916 = vadd.f32 %v2915, %v2913
  %v2917 = vrot.slane %v2916, 4
  %v2918 = vadd.f32 %v2916, %v2917
  %v2919 = vrot.slane %v2918, 2
  %v2920 = vadd.f32 %v2918, %v2919
  %v2921 = vrot.slane %v2920, 1
  %v2922 = vadd.f32 %v2920, %v2921
  %v2923 = vmul.f32 %v2922, %v1140
  %v2924 = vadd.f32 %v2923, 1e-05
  %v2925 = vrsqrt.pop %v2924
  %v2926 = vmul.f32 %v2906, %v2925
  %v2927 = vmul.f32 %v2907, %v2925
  %v2928 = vmul.f32 %v2908, %v2925
  %v2929 = vmul.f32 %v2909, %v2925
  %s2930 = scalar_lea.vmem %s11, 64
  %v2931 = vld [vmem:[%s2930] sm:$0xff]
  %v2932 = vld [vmem:[%s2930 + $0x8] sm:$0xff]
  %v2933 = vld [vmem:[%s2930 + $0x10] sm:$0xff]
  %v2934 = vld [vmem:[%s2930 + $0x18] sm:$0xff]
  %2936 = vset.pattern.permute.xlu0 0
  %2937 = vperm.xlu0 %2936, %v2931
  %v2938 = vpop.permute.xlu0 %2937
  %2941 = vset.pattern.permute.xlu0 0
  %2942 = vperm.xlu0 %2941, %v2932
  %v2943 = vpop.permute.xlu0 %2942
  %2946 = vset.pattern.permute.xlu0 0
  %2947 = vperm.xlu0 %2946, %v2933
  %v2948 = vpop.permute.xlu0 %2947
  %2951 = vset.pattern.permute.xlu0 0
  %2952 = vperm.xlu0 %2951, %v2934
  %v2953 = vpop.permute.xlu0 %2952
  %v2955 = vmul.f32 %v2926, %v2938
  %v2956 = vmul.f32 %v2927, %v2943
  %v2957 = vmul.f32 %v2928, %v2948
  %v2958 = vmul.f32 %v2929, %v2953
  %s2959 = scalar_lea.vmem %s12, 64
  %v2960 = vld [vmem:[%s2959] sm:$0xff]
  %v2961 = vld [vmem:[%s2959 + $0x8] sm:$0xff]
  %v2962 = vld [vmem:[%s2959 + $0x10] sm:$0xff]
  %v2963 = vld [vmem:[%s2959 + $0x18] sm:$0xff]
  %2965 = vset.pattern.permute.xlu0 0
  %2966 = vperm.xlu0 %2965, %v2960
  %v2967 = vpop.permute.xlu0 %2966
  %2970 = vset.pattern.permute.xlu0 0
  %2971 = vperm.xlu0 %2970, %v2961
  %v2972 = vpop.permute.xlu0 %2971
  %2975 = vset.pattern.permute.xlu0 0
  %2976 = vperm.xlu0 %2975, %v2962
  %v2977 = vpop.permute.xlu0 %2976
  %2980 = vset.pattern.permute.xlu0 0
  %2981 = vperm.xlu0 %2980, %v2963
  %v2982 = vpop.permute.xlu0 %2981
  %v2984 = vadd.f32 %v2955, %v2967
  %v2985 = vadd.f32 %v2956, %v2972
  %v2986 = vadd.f32 %v2957, %v2977
  %v2987 = vadd.f32 %v2958, %v2982
  %v2988 = vmax.f32 %v2984, 0.0
  %v2989 = vmax.f32 %v2985, 0.0
  %v2990 = vmax.f32 %v2986, 0.0
  %v2991 = vmax.f32 %v2987, 0.0
  %2992 = vst [vmem:[#allocation2 + $0x20] sm:$0xff] %v2988
  %2993 = vst [vmem:[#allocation2 + $0x28] sm:$0xff] %v2989
  %2994 = vst [vmem:[#allocation2 + $0x30] sm:$0xff] %v2990
  %2995 = vst [vmem:[#allocation2 + $0x38] sm:$0xff] %v2991
  %v2996 = vld [vmem:[#allocation2 + $0x20] sm:$0xff]
  %v2997 = vld [vmem:[#allocation2 + $0x28] sm:$0xff]
  %v2998 = vld [vmem:[#allocation2 + $0x30] sm:$0xff]
  %v2999 = vld [vmem:[#allocation2 + $0x38] sm:$0xff]
  %v3000 = vld [vmem:[%s13] sm:$0xf]
  %v3001 = vld [vmem:[%s13 + $0x4] sm:$0xf]
  %v3002 = vld [vmem:[%s13 + $0x8] sm:$0xf]
  %v3003 = vld [vmem:[%s13 + $0xc] sm:$0xf]
  %v3004 = vpack.c.bf16 %v2997, %v2996
  %v3005 = vpack.c.bf16 %v2999, %v2998
  %v3006 = vld [vmem:[%s14] sm:$0xff]
  %v3007 = vld [vmem:[%s14 + $0x8] sm:$0xff]
  %v3008 = vld [vmem:[%s14 + $0x10] sm:$0xff]
  %v3009 = vld [vmem:[%s14 + $0x18] sm:$0xff]
  %3011 = vset.pattern.permute.xlu0 0
  %3012 = vperm.xlu0 %3011, %v3006
  %v3013 = vpop.permute.xlu0 %3012
  %3016 = vset.pattern.permute.xlu0 0
  %3017 = vperm.xlu0 %3016, %v3007
  %v3018 = vpop.permute.xlu0 %3017
  %3021 = vset.pattern.permute.xlu0 0
  %3022 = vperm.xlu0 %3021, %v3008
  %v3023 = vpop.permute.xlu0 %3022
  %3026 = vset.pattern.permute.xlu0 0
  %3027 = vperm.xlu0 %3026, %v3009
  %v3028 = vpop.permute.xlu0 %3027
  %v3034 = vunpack.c.l.b16 %v3000
  %v3035 = vunpack.c.l.b16 %v3001
  %v3036 = vunpack.c.l.b16 %v3002
  %v3037 = vunpack.c.l.b16 %v3003
  %v3038 = vpack.c.b16 %v3035, %v3034
  %v3039 = vpack.c.b16 %v3037, %v3036
  %v3041 = vsel %vm172, %v3038, 0
  %v3044 = vsel %vm172, %v3039, 0
  %3046 = vmatprep.subr.bf16.mxu0 0
  %3047 = vmatpush1.bf16.msra.mxu0 0
  %3048 = vmatprep.subr.bf16.mxu0 0
  %3049 = vmatpush1.bf16.msra.mxu0 0
  %3050 = vmatprep.subr.bf16.mxu0 0
  %3051 = vmatpush1.bf16.msra.mxu0 0
  %3052 = vmatprep.subr.bf16.mxu0 0
  %3053 = vmatpush1.bf16.msra.mxu0 0
  %3054 = vmatprep.subr.bf16.mxu0 0
  %3055 = vmatpush1.bf16.msra.mxu0 0
  %3056 = vmatprep.subr.bf16.mxu0 0
  %3057 = vmatpush1.bf16.msra.mxu0 0
  %3058 = vmatprep.subr.bf16.mxu0 0
  %3059 = vmatpush1.bf16.msra.mxu0 %v3005
  %3060 = vmatprep.subr.bf16.mxu0 0
  %3061 = vmatpush1.bf16.msra.mxu0 %v3004
  %3062 = vmatprep.subr.bf16.mxu0 0
  %3063 = vmatpush2.bf16.msra.mxu0 0
  %3064 = vmatprep.subr.bf16.mxu0 0
  %3065 = vmatpush2.bf16.msra.mxu0 0
  %3066 = vmatprep.subr.bf16.mxu0 0
  %3067 = vmatpush2.bf16.msra.mxu0 0
  %3068 = vmatprep.subr.bf16.mxu0 0
  %3069 = vmatpush2.bf16.msra.mxu0 0
  %3070 = vmatprep.subr.bf16.mxu0 0
  %3071 = vmatpush2.bf16.msra.mxu0 0
  %3072 = vmatprep.subr.bf16.mxu0 0
  %3073 = vmatpush2.bf16.msra.mxu0 0
  %3074 = vmatprep.subr.bf16.mxu0 0
  %3075 = vmatpush2.bf16.msra.mxu0 0
  %3076 = vmatprep.subr.bf16.mxu0 0
  %3077 = vmatpush2.bf16.msra.mxu0 0
  %3078 = vmatprep.mubr.bf16.mxu0 0
  %3079 = vmatmul.mubr.bf16.gmra.mxu0 %v3041
  %v3080 = vpop.f32.mrf.mxu0
  %v3081 = vadd.f32 %v3013, %v3080
  %v3082 = vpop.f32.mrf.mxu0
  %v3083 = vpop.f32.mrf.mxu0
  %v3084 = vadd.f32 %v3018, %v3083
  %v3085 = vpop.f32.mrf.mxu0
  %3086 = vmatprep.mubr.bf16.mxu0 0
  %3087 = vmatmul.mubr.bf16.gmra.mxu0 %v3044
  %v3088 = vpop.f32.mrf.mxu0
  %v3089 = vadd.f32 %v3023, %v3088
  %v3090 = vpop.f32.mrf.mxu0
  %v3091 = vpop.f32.mrf.mxu0
  %v3092 = vadd.f32 %v3028, %v3091
  %v3093 = vpop.f32.mrf.mxu0
  %3094 = vdwg.mxu0
  %v3095 = vmax.f32 %v3081, 0.0
  %v3096 = vmax.f32 %v3084, 0.0
  %v3097 = vmax.f32 %v3089, 0.0
  %v3098 = vmax.f32 %v3092, 0.0
  %v3099 = vld [vmem:[%s15] sm:$0xf]
  %v3100 = vld [vmem:[%s15 + $0x4] sm:$0xf]
  %v3101 = vld [vmem:[%s15 + $0x8] sm:$0xf]
  %v3102 = vld [vmem:[%s15 + $0xc] sm:$0xf]
  %v3103 = vpack.c.bf16 %v3096, %v3095
  %v3104 = vpack.c.bf16 %v3098, %v3097
  %v3105 = vld [vmem:[%s16] sm:$0xff]
  %v3106 = vld [vmem:[%s16 + $0x8] sm:$0xff]
  %v3107 = vld [vmem:[%s16 + $0x10] sm:$0xff]
  %v3108 = vld [vmem:[%s16 + $0x18] sm:$0xff]
  %3110 = vset.pattern.permute.xlu0 0
  %3111 = vperm.xlu0 %3110, %v3105
  %v3112 = vpop.permute.xlu0 %3111
  %3115 = vset.pattern.permute.xlu0 0
  %3116 = vperm.xlu0 %3115, %v3106
  %v3117 = vpop.permute.xlu0 %3116
  %3120 = vset.pattern.permute.xlu0 0
  %3121 = vperm.xlu0 %3120, %v3107
  %v3122 = vpop.permute.xlu0 %3121
  %3125 = vset.pattern.permute.xlu0 0
  %3126 = vperm.xlu0 %3125, %v3108
  %v3127 = vpop.permute.xlu0 %3126
  %v3133 = vunpack.c.l.b16 %v3099
  %v3134 = vunpack.c.l.b16 %v3100
  %v3135 = vunpack.c.l.b16 %v3101
  %v3136 = vunpack.c.l.b16 %v3102
  %v3137 = vpack.c.b16 %v3134, %v3133
  %v3138 = vpack.c.b16 %v3136, %v3135
  %v3140 = vsel %vm172, %v3137, 0
  %v3143 = vsel %vm172, %v3138, 0
  %3145 = vmatprep.subr.bf16.mxu0 0
  %3146 = vmatpush1.bf16.msra.mxu0 0
  %3147 = vmatprep.subr.bf16.mxu0 0
  %3148 = vmatpush1.bf16.msra.mxu0 0
  %3149 = vmatprep.subr.bf16.mxu0 0
  %3150 = vmatpush1.bf16.msra.mxu0 0
  %3151 = vmatprep.subr.bf16.mxu0 0
  %3152 = vmatpush1.bf16.msra.mxu0 0
  %3153 = vmatprep.subr.bf16.mxu0 0
  %3154 = vmatpush1.bf16.msra.mxu0 0
  %3155 = vmatprep.subr.bf16.mxu0 0
  %3156 = vmatpush1.bf16.msra.mxu0 0
  %3157 = vmatprep.subr.bf16.mxu0 0
  %3158 = vmatpush1.bf16.msra.mxu0 %v3104
  %3159 = vmatprep.subr.bf16.mxu0 0
  %3160 = vmatpush1.bf16.msra.mxu0 %v3103
  %3161 = vmatprep.subr.bf16.mxu0 0
  %3162 = vmatpush2.bf16.msra.mxu0 0
  %3163 = vmatprep.subr.bf16.mxu0 0
  %3164 = vmatpush2.bf16.msra.mxu0 0
  %3165 = vmatprep.subr.bf16.mxu0 0
  %3166 = vmatpush2.bf16.msra.mxu0 0
  %3167 = vmatprep.subr.bf16.mxu0 0
  %3168 = vmatpush2.bf16.msra.mxu0 0
  %3169 = vmatprep.subr.bf16.mxu0 0
  %3170 = vmatpush2.bf16.msra.mxu0 0
  %3171 = vmatprep.subr.bf16.mxu0 0
  %3172 = vmatpush2.bf16.msra.mxu0 0
  %3173 = vmatprep.subr.bf16.mxu0 0
  %3174 = vmatpush2.bf16.msra.mxu0 0
  %3175 = vmatprep.subr.bf16.mxu0 0
  %3176 = vmatpush2.bf16.msra.mxu0 0
  %3177 = vmatprep.mubr.bf16.mxu0 0
  %3178 = vmatmul.mubr.bf16.gmra.mxu0 %v3140
  %v3179 = vpop.f32.mrf.mxu0
  %v3180 = vadd.f32 %v3112, %v3179
  %v3181 = vpop.f32.mrf.mxu0
  %v3182 = vpop.f32.mrf.mxu0
  %v3183 = vadd.f32 %v3117, %v3182
  %v3184 = vpop.f32.mrf.mxu0
  %3185 = vmatprep.mubr.bf16.mxu0 0
  %3186 = vmatmul.mubr.bf16.gmra.mxu0 %v3143
  %v3187 = vpop.f32.mrf.mxu0
  %v3188 = vadd.f32 %v3122, %v3187
  %v3189 = vpop.f32.mrf.mxu0
  %v3190 = vpop.f32.mrf.mxu0
  %v3191 = vadd.f32 %v3127, %v3190
  %v3192 = vpop.f32.mrf.mxu0
  %3193 = vdwg.mxu0
  %v3194 = vmax.f32 %v3180, 0.0
  %v3195 = vmax.f32 %v3183, 0.0
  %v3196 = vmax.f32 %v3188, 0.0
  %v3197 = vmax.f32 %v3191, 0.0
  %v3198 = vld [vmem:[%s17] sm:$0x1]
  %v3199 = vpack.c.bf16 %v3195, %v3194
  %v3200 = vpack.c.bf16 %v3197, %v3196
  %v3201 = vld [vmem:[#allocation3] sm:$0x1]
  %3203 = vset.pattern.permute.xlu0 0
  %3204 = vperm.xlu0 %3203, %v3201
  %v3205 = vpop.permute.xlu0 %3204
  %v3207 = vlaneseq
  %v3208 = vshrl.u32 %v3207, 7
  %v3209 = vsub.s32 0, %v3208
  %v3210 = vrot.slane %v3205, %v3209
  %v3212 = vsel %vm172, %v3198, 0
  %3214 = vmatprep.subr.bf16.mxu0 0
  %3215 = vmatpush1.bf16.msra.mxu0 0
  %3216 = vmatprep.subr.bf16.mxu0 0
  %3217 = vmatpush1.bf16.msra.mxu0 0
  %3218 = vmatprep.subr.bf16.mxu0 0
  %3219 = vmatpush1.bf16.msra.mxu0 0
  %3220 = vmatprep.subr.bf16.mxu0 0
  %3221 = vmatpush1.bf16.msra.mxu0 0
  %3222 = vmatprep.subr.bf16.mxu0 0
  %3223 = vmatpush1.bf16.msra.mxu0 0
  %3224 = vmatprep.subr.bf16.mxu0 0
  %3225 = vmatpush1.bf16.msra.mxu0 0
  %3226 = vmatprep.subr.bf16.mxu0 0
  %3227 = vmatpush1.bf16.msra.mxu0 %v3200
  %3228 = vmatprep.subr.bf16.mxu0 0
  %3229 = vmatpush1.bf16.msra.mxu0 %v3199
  %3230 = vmatprep.subr.bf16.mxu0 0
  %3231 = vmatpush2.bf16.msra.mxu0 0
  %3232 = vmatprep.subr.bf16.mxu0 0
  %3233 = vmatpush2.bf16.msra.mxu0 0
  %3234 = vmatprep.subr.bf16.mxu0 0
  %3235 = vmatpush2.bf16.msra.mxu0 0
  %3236 = vmatprep.subr.bf16.mxu0 0
  %3237 = vmatpush2.bf16.msra.mxu0 0
  %3238 = vmatprep.subr.bf16.mxu0 0
  %3239 = vmatpush2.bf16.msra.mxu0 0
  %3240 = vmatprep.subr.bf16.mxu0 0
  %3241 = vmatpush2.bf16.msra.mxu0 0
  %3242 = vmatprep.subr.bf16.mxu0 0
  %3243 = vmatpush2.bf16.msra.mxu0 0
  %3244 = vmatprep.subr.bf16.mxu0 0
  %3245 = vmatpush2.bf16.msra.mxu0 0
  %3246 = vmatprep.mubr.bf16.mxu0 0
  %3247 = vmatmul.mubr.bf16.gmra.mxu0 %v3212
  %v3248 = vpop.f32.mrf.mxu0
  %v3249 = vadd.f32 %v3210, %v3248
  %v3250 = vpop.f32.mrf.mxu0
  %v3251 = vpop.f32.mrf.mxu0
  %v3252 = vpop.f32.mrf.mxu0
  %3253 = vdwg.mxu0
  %v3254 = vld [vmem:[%s1] sm:$0x1]
  %v3255 = vmul.f32 %v3249, %v3254
  %3256 = vst [vmem:[%s19] sm:$0x1] %v3255
  // Predicated region
  $region78: #{resgcn_forward_pallas.1} parent=0 // pred_check
    _
  $region79: #{resgcn_forward_pallas.1} parent=0 // pred_check_branch
    %3258 = sbr.rel (0) target = $region81
  $region80: #{resgcn_forward_pallas.1} parent=0 // pred_region
    _
  $region81: #{resgcn_forward_pallas.1} parent=0 // pred_fallthru
    _
  // Predicated region
  $region82: #{resgcn_forward_pallas.1} parent=0 // pred_check
    _
  $region83: #{resgcn_forward_pallas.1} parent=0 // pred_check_branch
    %3260 = sbr.rel (0) target = $region85
  $region84: #{resgcn_forward_pallas.1} parent=0 // pred_region
    _
  $region85: #{resgcn_forward_pallas.1} parent=0 // pred_fallthru
    _

</llo_original>
